<compile_context>
chip_gen: v5e
topology: v5e:2x2
jax: 0.10.0
libtpu: 0.0.40
codegen_flags: <defaults>
</compile_context>

<pallas_src>
import functools

import jax
import jax.numpy as jnp
from jax.experimental import pallas as pl
from jax.experimental.pallas import tpu as pltpu


def _plstm_kernel(x_ref, wx1_ref, wh1_ref, b1_ref,
                  wx2_ref, wh2_ref, b2_ref, m_ref,
                  h_out_ref,
                  xp1_ref, xp2_ref,
                  *, seq_len, batch_p, parts, hidden, hidden_pad):
    ph = parts * hidden

    # ---- Prologue: batched input projections for BOTH layers, off the serial
    # recurrence (both cells consume the same x_t). One matmul per layer. ----
    x2d = x_ref[...]                                           # (seq*batch_p, input_size)
    xp1_ref[...] = (jnp.dot(x2d, wx1_ref[...], preferred_element_type=jnp.float32)
                    + b1_ref[...])                             # (seq*batch_p, gate_dim_pad)
    xp2_ref[...] = (jnp.dot(x2d, wx2_ref[...], preferred_element_type=jnp.float32)
                    + b2_ref[...])

    m_sum = m_ref[...]                                         # (ph, hidden_pad) 0/1 matrix

    def cell(xp_t, wh_ref, h, c):
        gates = xp_t + jnp.dot(h, wh_ref[...], preferred_element_type=jnp.float32)
        i = jax.nn.sigmoid(gates[:, 0 * ph:1 * ph])
        f = jax.nn.sigmoid(gates[:, 1 * ph:2 * ph])
        g = jnp.tanh(gates[:, 2 * ph:3 * ph])
        o = jax.nn.sigmoid(gates[:, 3 * ph:])                  # (batch_p, hidden_pad)
        c_new = f * c + i * g                                  # (batch_p, parts*hidden)
        # Part-sum on the MXU via the constant 0/1 summing matrix; padded
        # columns of s are exactly 0, so the o-gate's sigmoid(0)=0.5 padding is
        # zeroed out and h stays zero in its pad columns.
        s = jnp.dot(c_new, m_sum, preferred_element_type=jnp.float32)
        h_new = o * jnp.tanh(s)                                # (batch_p, hidden_pad)
        return h_new, c_new

    def step(t, carry):
        h, c = carry
        row = pl.multiple_of(t * batch_p, 8)                   # sublane-tile aligned start
        xp1_t = xp1_ref[pl.ds(row, batch_p), :]
        xp2_t = xp2_ref[pl.ds(row, batch_p), :]
        h, c = cell(xp1_t, wh1_ref, h, c)
        # dropout(0.5) between the two cells -> identity (eval mode)
        h, c = cell(xp2_t, wh2_ref, h, c)
        return h, c

    h0 = jnp.zeros((batch_p, hidden_pad), jnp.float32)
    c0 = jnp.zeros((batch_p, ph), jnp.float32)
    h_fin, _ = jax.lax.fori_loop(0, seq_len, step, (h0, c0), unroll=True)
    h_out_ref[...] = h_fin                                     # lane-dense unmasked store


def _pad_params(params, *, parts, hidden, hidden_pad):
    """Zero-pad the o-gate segment (hidden -> hidden_pad) and Wh input rows."""
    wx1, wh1, b1, wx2, wh2, b2, _, _ = params
    ph = parts * hidden
    pad_o = hidden_pad - hidden

    def pad_gate_cols(w):        # (rows, 3*ph + hidden) -> (rows, 3*ph + hidden_pad)
        return jnp.concatenate(
            [w[:, :3 * ph], jnp.pad(w[:, 3 * ph:], ((0, 0), (0, pad_o)))], axis=1)

    def pad_wh(w):               # (hidden, gd) -> (hidden_pad, gdp), extra rows zero
        return jnp.pad(pad_gate_cols(w), ((0, pad_o), (0, 0)))

    # constant 0/1 part-summing matrix: M[p*hidden + j, j] = 1
    rows = jnp.arange(ph)
    m_sum = jnp.zeros((ph, hidden_pad), jnp.float32).at[rows, rows % hidden].set(1.0)

    return (pad_gate_cols(wx1), pad_wh(wh1), pad_gate_cols(b1),
            pad_gate_cols(wx2), pad_wh(wh2), pad_gate_cols(b2), m_sum)


def plstm_forward(inputs, params, *, parts, hidden, classes):
    """inputs: (parts, batch, seq, feat_per_part) f32 -> (batch, classes) log-probs."""
    p0, batch, seq_len, feat = inputs.shape
    input_size = p0 * feat
    ph = parts * hidden
    hidden_pad = ((hidden + 127) // 128) * 128       # h / o-gate padded to full lanes
    gate_dim_pad = 3 * ph + hidden_pad
    batch_p = ((batch + 7) // 8) * 8                 # batch padded to a sublane tile

    # glue: replicate torch.cat([i for i in inputs[:, :, t, :]], dim=1)
    x_seq = jnp.transpose(inputs, (2, 1, 0, 3)).reshape(seq_len, batch, input_size)
    x_seq = jnp.pad(x_seq, ((0, 0), (0, batch_p - batch), (0, 0)))
    x2d = x_seq.reshape(seq_len * batch_p, input_size)

    wx1p, wh1p, b1p, wx2p, wh2p, b2p, m_sum = _pad_params(
        params, parts=parts, hidden=hidden, hidden_pad=hidden_pad)
    wfc, bfc = params[6], params[7]

    kernel = functools.partial(
        _plstm_kernel, seq_len=seq_len, batch_p=batch_p,
        parts=parts, hidden=hidden, hidden_pad=hidden_pad)

    vmem = lambda: pl.BlockSpec(memory_space=pltpu.MemorySpace.VMEM)

    h_fin = pl.pallas_call(
        kernel,
        out_shape=jax.ShapeDtypeStruct((batch_p, hidden_pad), jnp.float32),
        in_specs=[vmem() for _ in range(8)],
        out_specs=vmem(),
        scratch_shapes=[
            pltpu.VMEM((seq_len * batch_p, gate_dim_pad), jnp.float32),
            pltpu.VMEM((seq_len * batch_p, gate_dim_pad), jnp.float32),
        ],
    )(x2d, wx1p, wh1p, b1p, wx2p, wh2p, b2p, m_sum)

    # Classifier hoisted out of the kernel (kernel output is the lane-dense h);
    # XLA fuses this tiny (batch, hidden) @ (hidden, classes) + log_softmax.
    h_last = h_fin[:batch, :hidden]
    logits = h_last @ wfc + bfc
    return jax.nn.log_softmax(logits, axis=-1)


def reference_forward(inputs, params, *, parts, hidden):
    """Pure-JAX reference of the same math (correctness check)."""
    wx1, wh1, b1, wx2, wh2, b2, wfc, bfc = params
    p0, batch, seq_len, feat = inputs.shape
    x_seq = jnp.transpose(inputs, (2, 1, 0, 3)).reshape(seq_len, batch, p0 * feat)
    ph = parts * hidden

    def cell(x, h, c, wx, wh, b):
        gates = x @ wx + h @ wh + b
        i = jax.nn.sigmoid(gates[:, 0 * ph:1 * ph])
        f = jax.nn.sigmoid(gates[:, 1 * ph:2 * ph])
        g = jnp.tanh(gates[:, 2 * ph:3 * ph])
        o = jax.nn.sigmoid(gates[:, 3 * ph:])
        c_new = f * c + i * g
        s = c_new.reshape(batch, parts, hidden).sum(axis=1)
        return o * jnp.tanh(s), c_new

    h = jnp.zeros((batch, hidden), jnp.float32)
    c = jnp.zeros((batch, ph), jnp.float32)
    for t in range(seq_len):
        h, c = cell(x_seq[t], h, c, wx1, wh1, b1)
        h, c = cell(x_seq[t], h, c, wx2, wh2, b2)
    logits = h @ wfc + bfc
    return jax.nn.log_softmax(logits, axis=-1)


def make_params(key, input_size, hidden, classes, parts):
    gate_dim = (3 * parts + 1) * hidden
    ks = jax.random.split(key, 8)

    def lin(k, fan_in, shape):
        bound = 1.0 / jnp.sqrt(jnp.float32(fan_in))
        return jax.random.uniform(k, shape, jnp.float32, -bound, bound)

    wx1 = lin(ks[0], input_size, (input_size, gate_dim))
    wh1 = lin(ks[1], hidden, (hidden, gate_dim))
    b1 = lin(ks[2], input_size, (1, gate_dim))
    wx2 = lin(ks[3], input_size, (input_size, gate_dim))
    wh2 = lin(ks[4], hidden, (hidden, gate_dim))
    b2 = lin(ks[5], input_size, (1, gate_dim))
    wfc = lin(ks[6], hidden, (hidden, classes))
    bfc = lin(ks[7], hidden, (1, classes))
    return (wx1, wh1, b1, wx2, wh2, b2, wfc, bfc)


if __name__ == "__main__":
    PARTS = 4
    FEAT_PER_PART = 9
    INPUT_SIZE = PARTS * FEAT_PER_PART     # 36
    HIDDEN = 32
    CLASSES = 6
    BATCH = 2
    SEQ = 8

    key = jax.random.PRNGKey(0)
    k_in, k_par = jax.random.split(key)
    inputs = jax.random.normal(
        k_in, (PARTS, BATCH, SEQ, FEAT_PER_PART), dtype=jnp.float32)
    params = make_params(k_par, INPUT_SIZE, HIDDEN, CLASSES, PARTS)

    out = plstm_forward(inputs, params, parts=PARTS, hidden=HIDDEN,
                        classes=CLASSES)
    out = jax.block_until_ready(out)

    ref = reference_forward(inputs, params, parts=PARTS, hidden=HIDDEN)
    ref = jax.block_until_ready(ref)

    assert out.shape == (BATCH, CLASSES)
    assert jnp.allclose(out, ref, rtol=2e-2, atol=2e-2), (out, ref)
    print("KERNEL_OK")
</pallas_src>

<mosaic_0001>
module attributes {stable_mosaic.version = 11 : i64} {
  func.func @_plstm_kernel(%arg0: memref<64x36xf32, #tpu.memory_space<vmem>>, %arg1: memref<36x512xf32, #tpu.memory_space<vmem>>, %arg2: memref<128x512xf32, #tpu.memory_space<vmem>>, %arg3: memref<1x512xf32, #tpu.memory_space<vmem>>, %arg4: memref<36x512xf32, #tpu.memory_space<vmem>>, %arg5: memref<128x512xf32, #tpu.memory_space<vmem>>, %arg6: memref<1x512xf32, #tpu.memory_space<vmem>>, %arg7: memref<128x128xf32, #tpu.memory_space<vmem>>, %arg8: memref<8x128xf32, #tpu.memory_space<vmem>>, %arg9: memref<64x512xf32, #tpu.memory_space<vmem>>, %arg10: memref<64x512xf32, #tpu.memory_space<vmem>>) attributes {dimension_semantics = [], scalar_prefetch = 0 : i64, scratch_operands = 2 : i64, tpu.core_type = #tpu.core_type<tc>} {
    %c0 = arith.constant 0 : index
    %c0_0 = arith.constant 0 : index
    %0 = vector.load %arg0[%c0, %c0_0] : memref<64x36xf32, #tpu.memory_space<vmem>>, vector<64x36xf32>
    %c0_1 = arith.constant 0 : index
    %c0_2 = arith.constant 0 : index
    %1 = vector.load %arg1[%c0_1, %c0_2] : memref<36x512xf32, #tpu.memory_space<vmem>>, vector<36x512xf32>
    %cst = arith.constant dense<0.000000e+00> : vector<64x512xf32>
    %2 = tpu.matmul %0, %1, %cst {dimension_numbers = #tpu.dot_dimension_numbers<[1], [0], [0], [1], [0, 0, 1, 1], [], []>} : vector<64x36xf32>, vector<36x512xf32>, vector<64x512xf32> -> vector<64x512xf32>
    %c0_3 = arith.constant 0 : index
    %c0_4 = arith.constant 0 : index
    %3 = vector.load %arg3[%c0_3, %c0_4] : memref<1x512xf32, #tpu.memory_space<vmem>>, vector<1x512xf32>
    %4 = vector.broadcast %3 : vector<1x512xf32> to vector<64x512xf32>
    %5 = arith.addf %2, %4 : vector<64x512xf32>
    %c0_5 = arith.constant 0 : index
    %c0_6 = arith.constant 0 : index
    %6 = vector.load %arg9[%c0_5, %c0_6] : memref<64x512xf32, #tpu.memory_space<vmem>>, vector<64x512xf32>
    tpu.vector_store %arg9[%c0_5, %c0_6], %5 {strides = array<i32>} : memref<64x512xf32, #tpu.memory_space<vmem>>, vector<64x512xf32>,
    %c0_7 = arith.constant 0 : index
    %c0_8 = arith.constant 0 : index
    %7 = vector.load %arg4[%c0_7, %c0_8] : memref<36x512xf32, #tpu.memory_space<vmem>>, vector<36x512xf32>
    %cst_9 = arith.constant dense<0.000000e+00> : vector<64x512xf32>
    %8 = tpu.matmul %0, %7, %cst_9 {dimension_numbers = #tpu.dot_dimension_numbers<[1], [0], [0], [1], [0, 0, 1, 1], [], []>} : vector<64x36xf32>, vector<36x512xf32>, vector<64x512xf32> -> vector<64x512xf32>
    %c0_10 = arith.constant 0 : index
    %c0_11 = arith.constant 0 : index
    %9 = vector.load %arg6[%c0_10, %c0_11] : memref<1x512xf32, #tpu.memory_space<vmem>>, vector<1x512xf32>
    %10 = vector.broadcast %9 : vector<1x512xf32> to vector<64x512xf32>
    %11 = arith.addf %8, %10 : vector<64x512xf32>
    %c0_12 = arith.constant 0 : index
    %c0_13 = arith.constant 0 : index
    %12 = vector.load %arg10[%c0_12, %c0_13] : memref<64x512xf32, #tpu.memory_space<vmem>>, vector<64x512xf32>
    tpu.vector_store %arg10[%c0_12, %c0_13], %11 {strides = array<i32>} : memref<64x512xf32, #tpu.memory_space<vmem>>, vector<64x512xf32>,
    %c0_14 = arith.constant 0 : index
    %c0_15 = arith.constant 0 : index
    %13 = vector.load %arg7[%c0_14, %c0_15] : memref<128x128xf32, #tpu.memory_space<vmem>>, vector<128x128xf32>
    %cst_16 = arith.constant 0.000000e+00 : f32
    %14 = vector.broadcast %cst_16 : f32 to vector<8x128xf32>
    %cst_17 = arith.constant 0.000000e+00 : f32
    %15 = vector.broadcast %cst_17 : f32 to vector<8x128xf32>
    %c0_i32 = arith.constant 0 : i32
    %c8_i32 = arith.constant 8 : i32
    %16 = arith.muli %c0_i32, %c8_i32 : i32
    %17 = tpu.assume_multiple %16, 8 : i32
    %18 = arith.index_cast %17 : i32 to index
    %c0_18 = arith.constant 0 : index
    %19 = vector.load %arg9[%18, %c0_18] : memref<64x512xf32, #tpu.memory_space<vmem>>, vector<8x512xf32>
    %20 = arith.index_cast %17 : i32 to index
    %c0_19 = arith.constant 0 : index
    %21 = vector.load %arg10[%20, %c0_19] : memref<64x512xf32, #tpu.memory_space<vmem>>, vector<8x512xf32>
    %c0_20 = arith.constant 0 : index
    %c0_21 = arith.constant 0 : index
    %22 = vector.load %arg2[%c0_20, %c0_21] : memref<128x512xf32, #tpu.memory_space<vmem>>, vector<128x512xf32>
    %cst_22 = arith.constant dense<0.000000e+00> : vector<8x512xf32>
    %23 = tpu.matmul %14, %22, %cst_22 {dimension_numbers = #tpu.dot_dimension_numbers<[1], [0], [0], [1], [0, 0, 1, 1], [], []>} : vector<8x128xf32>, vector<128x512xf32>, vector<8x512xf32> -> vector<8x512xf32>
    %24 = arith.addf %19, %23 : vector<8x512xf32>
    %25 = vector.extract_strided_slice %24 {offsets = [0, 0], sizes = [8, 128], strides = [1, 1]} : vector<8x512xf32> to vector<8x128xf32>
    %26 = arith.negf %25 : vector<8x128xf32>
    %27 = math.exp %26 : vector<8x128xf32>
    %cst_23 = arith.constant 1.000000e+00 : f32
    %28 = vector.broadcast %cst_23 : f32 to vector<8x128xf32>
    %29 = arith.addf %28, %27 : vector<8x128xf32>
    %30 = arith.divf %28, %29 : vector<8x128xf32>
    %31 = vector.extract_strided_slice %24 {offsets = [0, 128], sizes = [8, 128], strides = [1, 1]} : vector<8x512xf32> to vector<8x128xf32>
    %32 = arith.negf %31 : vector<8x128xf32>
    %33 = math.exp %32 : vector<8x128xf32>
    %cst_24 = arith.constant 1.000000e+00 : f32
    %34 = vector.broadcast %cst_24 : f32 to vector<8x128xf32>
    %35 = arith.addf %34, %33 : vector<8x128xf32>
    %36 = arith.divf %34, %35 : vector<8x128xf32>
    %37 = vector.extract_strided_slice %24 {offsets = [0, 256], sizes = [8, 128], strides = [1, 1]} : vector<8x512xf32> to vector<8x128xf32>
    %38 = math.tanh %37 : vector<8x128xf32>
    %39 = vector.extract_strided_slice %24 {offsets = [0, 384], sizes = [8, 128], strides = [1, 1]} : vector<8x512xf32> to vector<8x128xf32>
    %40 = arith.negf %39 : vector<8x128xf32>
    %41 = math.exp %40 : vector<8x128xf32>
    %cst_25 = arith.constant 1.000000e+00 : f32
    %42 = vector.broadcast %cst_25 : f32 to vector<8x128xf32>
    %43 = arith.addf %42, %41 : vector<8x128xf32>
    %44 = arith.divf %42, %43 : vector<8x128xf32>
    %45 = arith.mulf %36, %15 : vector<8x128xf32>
    %46 = arith.mulf %30, %38 : vector<8x128xf32>
    %47 = arith.addf %45, %46 : vector<8x128xf32>
    %cst_26 = arith.constant dense<0.000000e+00> : vector<8x128xf32>
    %48 = tpu.matmul %47, %13, %cst_26 {dimension_numbers = #tpu.dot_dimension_numbers<[1], [0], [0], [1], [0, 0, 1, 1], [], []>} : vector<8x128xf32>, vector<128x128xf32>, vector<8x128xf32> -> vector<8x128xf32>
    %49 = math.tanh %48 : vector<8x128xf32>
    %50 = arith.mulf %44, %49 : vector<8x128xf32>
    %c0_27 = arith.constant 0 : index
    %c0_28 = arith.constant 0 : index
    %51 = vector.load %arg5[%c0_27, %c0_28] : memref<128x512xf32, #tpu.memory_space<vmem>>, vector<128x512xf32>
    %cst_29 = arith.constant dense<0.000000e+00> : vector<8x512xf32>
    %52 = tpu.matmul %50, %51, %cst_29 {dimension_numbers = #tpu.dot_dimension_numbers<[1], [0], [0], [1], [0, 0, 1, 1], [], []>} : vector<8x128xf32>, vector<128x512xf32>, vector<8x512xf32> -> vector<8x512xf32>
    %53 = arith.addf %21, %52 : vector<8x512xf32>
    %54 = vector.extract_strided_slice %53 {offsets = [0, 0], sizes = [8, 128], strides = [1, 1]} : vector<8x512xf32> to vector<8x128xf32>
    %55 = arith.negf %54 : vector<8x128xf32>
    %56 = math.exp %55 : vector<8x128xf32>
    %cst_30 = arith.constant 1.000000e+00 : f32
    %57 = vector.broadcast %cst_30 : f32 to vector<8x128xf32>
    %58 = arith.addf %57, %56 : vector<8x128xf32>
    %59 = arith.divf %57, %58 : vector<8x128xf32>
    %60 = vector.extract_strided_slice %53 {offsets = [0, 128], sizes = [8, 128], strides = [1, 1]} : vector<8x512xf32> to vector<8x128xf32>
    %61 = arith.negf %60 : vector<8x128xf32>
    %62 = math.exp %61 : vector<8x128xf32>
    %cst_31 = arith.constant 1.000000e+00 : f32
    %63 = vector.broadcast %cst_31 : f32 to vector<8x128xf32>
    %64 = arith.addf %63, %62 : vector<8x128xf32>
    %65 = arith.divf %63, %64 : vector<8x128xf32>
    %66 = vector.extract_strided_slice %53 {offsets = [0, 256], sizes = [8, 128], strides = [1, 1]} : vector<8x512xf32> to vector<8x128xf32>
    %67 = math.tanh %66 : vector<8x128xf32>
    %68 = vector.extract_strided_slice %53 {offsets = [0, 384], sizes = [8, 128], strides = [1, 1]} : vector<8x512xf32> to vector<8x128xf32>
    %69 = arith.negf %68 : vector<8x128xf32>
    %70 = math.exp %69 : vector<8x128xf32>
    %cst_32 = arith.constant 1.000000e+00 : f32
    %71 = vector.broadcast %cst_32 : f32 to vector<8x128xf32>
    %72 = arith.addf %71, %70 : vector<8x128xf32>
    %73 = arith.divf %71, %72 : vector<8x128xf32>
    %74 = arith.mulf %65, %47 : vector<8x128xf32>
    %75 = arith.mulf %59, %67 : vector<8x128xf32>
    %76 = arith.addf %74, %75 : vector<8x128xf32>
    %cst_33 = arith.constant dense<0.000000e+00> : vector<8x128xf32>
    %77 = tpu.matmul %76, %13, %cst_33 {dimension_numbers = #tpu.dot_dimension_numbers<[1], [0], [0], [1], [0, 0, 1, 1], [], []>} : vector<8x128xf32>, vector<128x128xf32>, vector<8x128xf32> -> vector<8x128xf32>
    %78 = math.tanh %77 : vector<8x128xf32>
    %79 = arith.mulf %73, %78 : vector<8x128xf32>
    %c1_i32 = arith.constant 1 : i32
    %c8_i32_34 = arith.constant 8 : i32
    %80 = arith.muli %c1_i32, %c8_i32_34 : i32
    %81 = tpu.assume_multiple %80, 8 : i32
    %82 = arith.index_cast %81 : i32 to index
    %c0_35 = arith.constant 0 : index
    %83 = vector.load %arg9[%82, %c0_35] : memref<64x512xf32, #tpu.memory_space<vmem>>, vector<8x512xf32>
    %84 = arith.index_cast %81 : i32 to index
    %c0_36 = arith.constant 0 : index
    %85 = vector.load %arg10[%84, %c0_36] : memref<64x512xf32, #tpu.memory_space<vmem>>, vector<8x512xf32>
    %c0_37 = arith.constant 0 : index
    %c0_38 = arith.constant 0 : index
    %86 = vector.load %arg2[%c0_37, %c0_38] : memref<128x512xf32, #tpu.memory_space<vmem>>, vector<128x512xf32>
    %cst_39 = arith.constant dense<0.000000e+00> : vector<8x512xf32>
    %87 = tpu.matmul %79, %86, %cst_39 {dimension_numbers = #tpu.dot_dimension_numbers<[1], [0], [0], [1], [0, 0, 1, 1], [], []>} : vector<8x128xf32>, vector<128x512xf32>, vector<8x512xf32> -> vector<8x512xf32>
    %88 = arith.addf %83, %87 : vector<8x512xf32>
    %89 = vector.extract_strided_slice %88 {offsets = [0, 0], sizes = [8, 128], strides = [1, 1]} : vector<8x512xf32> to vector<8x128xf32>
    %90 = arith.negf %89 : vector<8x128xf32>
    %91 = math.exp %90 : vector<8x128xf32>
    %cst_40 = arith.constant 1.000000e+00 : f32
    %92 = vector.broadcast %cst_40 : f32 to vector<8x128xf32>
    %93 = arith.addf %92, %91 : vector<8x128xf32>
    %94 = arith.divf %92, %93 : vector<8x128xf32>
    %95 = vector.extract_strided_slice %88 {offsets = [0, 128], sizes = [8, 128], strides = [1, 1]} : vector<8x512xf32> to vector<8x128xf32>
    %96 = arith.negf %95 : vector<8x128xf32>
    %97 = math.exp %96 : vector<8x128xf32>
    %cst_41 = arith.constant 1.000000e+00 : f32
    %98 = vector.broadcast %cst_41 : f32 to vector<8x128xf32>
    %99 = arith.addf %98, %97 : vector<8x128xf32>
    %100 = arith.divf %98, %99 : vector<8x128xf32>
    %101 = vector.extract_strided_slice %88 {offsets = [0, 256], sizes = [8, 128], strides = [1, 1]} : vector<8x512xf32> to vector<8x128xf32>
    %102 = math.tanh %101 : vector<8x128xf32>
    %103 = vector.extract_strided_slice %88 {offsets = [0, 384], sizes = [8, 128], strides = [1, 1]} : vector<8x512xf32> to vector<8x128xf32>
    %104 = arith.negf %103 : vector<8x128xf32>
    %105 = math.exp %104 : vector<8x128xf32>
    %cst_42 = arith.constant 1.000000e+00 : f32
    %106 = vector.broadcast %cst_42 : f32 to vector<8x128xf32>
    %107 = arith.addf %106, %105 : vector<8x128xf32>
    %108 = arith.divf %106, %107 : vector<8x128xf32>
    %109 = arith.mulf %100, %76 : vector<8x128xf32>
    %110 = arith.mulf %94, %102 : vector<8x128xf32>
    %111 = arith.addf %109, %110 : vector<8x128xf32>
    %cst_43 = arith.constant dense<0.000000e+00> : vector<8x128xf32>
    %112 = tpu.matmul %111, %13, %cst_43 {dimension_numbers = #tpu.dot_dimension_numbers<[1], [0], [0], [1], [0, 0, 1, 1], [], []>} : vector<8x128xf32>, vector<128x128xf32>, vector<8x128xf32> -> vector<8x128xf32>
    %113 = math.tanh %112 : vector<8x128xf32>
    %114 = arith.mulf %108, %113 : vector<8x128xf32>
    %c0_44 = arith.constant 0 : index
    %c0_45 = arith.constant 0 : index
    %115 = vector.load %arg5[%c0_44, %c0_45] : memref<128x512xf32, #tpu.memory_space<vmem>>, vector<128x512xf32>
    %cst_46 = arith.constant dense<0.000000e+00> : vector<8x512xf32>
    %116 = tpu.matmul %114, %115, %cst_46 {dimension_numbers = #tpu.dot_dimension_numbers<[1], [0], [0], [1], [0, 0, 1, 1], [], []>} : vector<8x128xf32>, vector<128x512xf32>, vector<8x512xf32> -> vector<8x512xf32>
    %117 = arith.addf %85, %116 : vector<8x512xf32>
    %118 = vector.extract_strided_slice %117 {offsets = [0, 0], sizes = [8, 128], strides = [1, 1]} : vector<8x512xf32> to vector<8x128xf32>
    %119 = arith.negf %118 : vector<8x128xf32>
    %120 = math.exp %119 : vector<8x128xf32>
    %cst_47 = arith.constant 1.000000e+00 : f32
    %121 = vector.broadcast %cst_47 : f32 to vector<8x128xf32>
    %122 = arith.addf %121, %120 : vector<8x128xf32>
    %123 = arith.divf %121, %122 : vector<8x128xf32>
    %124 = vector.extract_strided_slice %117 {offsets = [0, 128], sizes = [8, 128], strides = [1, 1]} : vector<8x512xf32> to vector<8x128xf32>
    %125 = arith.negf %124 : vector<8x128xf32>
    %126 = math.exp %125 : vector<8x128xf32>
    %cst_48 = arith.constant 1.000000e+00 : f32
    %127 = vector.broadcast %cst_48 : f32 to vector<8x128xf32>
    %128 = arith.addf %127, %126 : vector<8x128xf32>
    %129 = arith.divf %127, %128 : vector<8x128xf32>
    %130 = vector.extract_strided_slice %117 {offsets = [0, 256], sizes = [8, 128], strides = [1, 1]} : vector<8x512xf32> to vector<8x128xf32>
    %131 = math.tanh %130 : vector<8x128xf32>
    %132 = vector.extract_strided_slice %117 {offsets = [0, 384], sizes = [8, 128], strides = [1, 1]} : vector<8x512xf32> to vector<8x128xf32>
    %133 = arith.negf %132 : vector<8x128xf32>
    %134 = math.exp %133 : vector<8x128xf32>
    %cst_49 = arith.constant 1.000000e+00 : f32
    %135 = vector.broadcast %cst_49 : f32 to vector<8x128xf32>
    %136 = arith.addf %135, %134 : vector<8x128xf32>
    %137 = arith.divf %135, %136 : vector<8x128xf32>
    %138 = arith.mulf %129, %111 : vector<8x128xf32>
    %139 = arith.mulf %123, %131 : vector<8x128xf32>
    %140 = arith.addf %138, %139 : vector<8x128xf32>
    %cst_50 = arith.constant dense<0.000000e+00> : vector<8x128xf32>
    %141 = tpu.matmul %140, %13, %cst_50 {dimension_numbers = #tpu.dot_dimension_numbers<[1], [0], [0], [1], [0, 0, 1, 1], [], []>} : vector<8x128xf32>, vector<128x128xf32>, vector<8x128xf32> -> vector<8x128xf32>
    %142 = math.tanh %141 : vector<8x128xf32>
    %143 = arith.mulf %137, %142 : vector<8x128xf32>
    %c2_i32 = arith.constant 2 : i32
    %c8_i32_51 = arith.constant 8 : i32
    %144 = arith.muli %c2_i32, %c8_i32_51 : i32
    %145 = tpu.assume_multiple %144, 8 : i32
    %146 = arith.index_cast %145 : i32 to index
    %c0_52 = arith.constant 0 : index
    %147 = vector.load %arg9[%146, %c0_52] : memref<64x512xf32, #tpu.memory_space<vmem>>, vector<8x512xf32>
    %148 = arith.index_cast %145 : i32 to index
    %c0_53 = arith.constant 0 : index
    %149 = vector.load %arg10[%148, %c0_53] : memref<64x512xf32, #tpu.memory_space<vmem>>, vector<8x512xf32>
    %c0_54 = arith.constant 0 : index
    %c0_55 = arith.constant 0 : index
    %150 = vector.load %arg2[%c0_54, %c0_55] : memref<128x512xf32, #tpu.memory_space<vmem>>, vector<128x512xf32>
    %cst_56 = arith.constant dense<0.000000e+00> : vector<8x512xf32>
    %151 = tpu.matmul %143, %150, %cst_56 {dimension_numbers = #tpu.dot_dimension_numbers<[1], [0], [0], [1], [0, 0, 1, 1], [], []>} : vector<8x128xf32>, vector<128x512xf32>, vector<8x512xf32> -> vector<8x512xf32>
    %152 = arith.addf %147, %151 : vector<8x512xf32>
    %153 = vector.extract_strided_slice %152 {offsets = [0, 0], sizes = [8, 128], strides = [1, 1]} : vector<8x512xf32> to vector<8x128xf32>
    %154 = arith.negf %153 : vector<8x128xf32>
    %155 = math.exp %154 : vector<8x128xf32>
    %cst_57 = arith.constant 1.000000e+00 : f32
    %156 = vector.broadcast %cst_57 : f32 to vector<8x128xf32>
    %157 = arith.addf %156, %155 : vector<8x128xf32>
    %158 = arith.divf %156, %157 : vector<8x128xf32>
    %159 = vector.extract_strided_slice %152 {offsets = [0, 128], sizes = [8, 128], strides = [1, 1]} : vector<8x512xf32> to vector<8x128xf32>
    %160 = arith.negf %159 : vector<8x128xf32>
    %161 = math.exp %160 : vector<8x128xf32>
    %cst_58 = arith.constant 1.000000e+00 : f32
    %162 = vector.broadcast %cst_58 : f32 to vector<8x128xf32>
    %163 = arith.addf %162, %161 : vector<8x128xf32>
    %164 = arith.divf %162, %163 : vector<8x128xf32>
    %165 = vector.extract_strided_slice %152 {offsets = [0, 256], sizes = [8, 128], strides = [1, 1]} : vector<8x512xf32> to vector<8x128xf32>
    %166 = math.tanh %165 : vector<8x128xf32>
    %167 = vector.extract_strided_slice %152 {offsets = [0, 384], sizes = [8, 128], strides = [1, 1]} : vector<8x512xf32> to vector<8x128xf32>
    %168 = arith.negf %167 : vector<8x128xf32>
    %169 = math.exp %168 : vector<8x128xf32>
    %cst_59 = arith.constant 1.000000e+00 : f32
    %170 = vector.broadcast %cst_59 : f32 to vector<8x128xf32>
    %171 = arith.addf %170, %169 : vector<8x128xf32>
    %172 = arith.divf %170, %171 : vector<8x128xf32>
    %173 = arith.mulf %164, %140 : vector<8x128xf32>
    %174 = arith.mulf %158, %166 : vector<8x128xf32>
    %175 = arith.addf %173, %174 : vector<8x128xf32>
    %cst_60 = arith.constant dense<0.000000e+00> : vector<8x128xf32>
    %176 = tpu.matmul %175, %13, %cst_60 {dimension_numbers = #tpu.dot_dimension_numbers<[1], [0], [0], [1], [0, 0, 1, 1], [], []>} : vector<8x128xf32>, vector<128x128xf32>, vector<8x128xf32> -> vector<8x128xf32>
    %177 = math.tanh %176 : vector<8x128xf32>
    %178 = arith.mulf %172, %177 : vector<8x128xf32>
    %c0_61 = arith.constant 0 : index
    %c0_62 = arith.constant 0 : index
    %179 = vector.load %arg5[%c0_61, %c0_62] : memref<128x512xf32, #tpu.memory_space<vmem>>, vector<128x512xf32>
    %cst_63 = arith.constant dense<0.000000e+00> : vector<8x512xf32>
    %180 = tpu.matmul %178, %179, %cst_63 {dimension_numbers = #tpu.dot_dimension_numbers<[1], [0], [0], [1], [0, 0, 1, 1], [], []>} : vector<8x128xf32>, vector<128x512xf32>, vector<8x512xf32> -> vector<8x512xf32>
    %181 = arith.addf %149, %180 : vector<8x512xf32>
    %182 = vector.extract_strided_slice %181 {offsets = [0, 0], sizes = [8, 128], strides = [1, 1]} : vector<8x512xf32> to vector<8x128xf32>
    %183 = arith.negf %182 : vector<8x128xf32>
    %184 = math.exp %183 : vector<8x128xf32>
    %cst_64 = arith.constant 1.000000e+00 : f32
    %185 = vector.broadcast %cst_64 : f32 to vector<8x128xf32>
    %186 = arith.addf %185, %184 : vector<8x128xf32>
    %187 = arith.divf %185, %186 : vector<8x128xf32>
    %188 = vector.extract_strided_slice %181 {offsets = [0, 128], sizes = [8, 128], strides = [1, 1]} : vector<8x512xf32> to vector<8x128xf32>
    %189 = arith.negf %188 : vector<8x128xf32>
    %190 = math.exp %189 : vector<8x128xf32>
    %cst_65 = arith.constant 1.000000e+00 : f32
    %191 = vector.broadcast %cst_65 : f32 to vector<8x128xf32>
    %192 = arith.addf %191, %190 : vector<8x128xf32>
    %193 = arith.divf %191, %192 : vector<8x128xf32>
    %194 = vector.extract_strided_slice %181 {offsets = [0, 256], sizes = [8, 128], strides = [1, 1]} : vector<8x512xf32> to vector<8x128xf32>
    %195 = math.tanh %194 : vector<8x128xf32>
    %196 = vector.extract_strided_slice %181 {offsets = [0, 384], sizes = [8, 128], strides = [1, 1]} : vector<8x512xf32> to vector<8x128xf32>
    %197 = arith.negf %196 : vector<8x128xf32>
    %198 = math.exp %197 : vector<8x128xf32>
    %cst_66 = arith.constant 1.000000e+00 : f32
    %199 = vector.broadcast %cst_66 : f32 to vector<8x128xf32>
    %200 = arith.addf %199, %198 : vector<8x128xf32>
    %201 = arith.divf %199, %200 : vector<8x128xf32>
    %202 = arith.mulf %193, %175 : vector<8x128xf32>
    %203 = arith.mulf %187, %195 : vector<8x128xf32>
    %204 = arith.addf %202, %203 : vector<8x128xf32>
    %cst_67 = arith.constant dense<0.000000e+00> : vector<8x128xf32>
    %205 = tpu.matmul %204, %13, %cst_67 {dimension_numbers = #tpu.dot_dimension_numbers<[1], [0], [0], [1], [0, 0, 1, 1], [], []>} : vector<8x128xf32>, vector<128x128xf32>, vector<8x128xf32> -> vector<8x128xf32>
    %206 = math.tanh %205 : vector<8x128xf32>
    %207 = arith.mulf %201, %206 : vector<8x128xf32>
    %c3_i32 = arith.constant 3 : i32
    %c8_i32_68 = arith.constant 8 : i32
    %208 = arith.muli %c3_i32, %c8_i32_68 : i32
    %209 = tpu.assume_multiple %208, 8 : i32
    %210 = arith.index_cast %209 : i32 to index
    %c0_69 = arith.constant 0 : index
    %211 = vector.load %arg9[%210, %c0_69] : memref<64x512xf32, #tpu.memory_space<vmem>>, vector<8x512xf32>
    %212 = arith.index_cast %209 : i32 to index
    %c0_70 = arith.constant 0 : index
    %213 = vector.load %arg10[%212, %c0_70] : memref<64x512xf32, #tpu.memory_space<vmem>>, vector<8x512xf32>
    %c0_71 = arith.constant 0 : index
    %c0_72 = arith.constant 0 : index
    %214 = vector.load %arg2[%c0_71, %c0_72] : memref<128x512xf32, #tpu.memory_space<vmem>>, vector<128x512xf32>
    %cst_73 = arith.constant dense<0.000000e+00> : vector<8x512xf32>
    %215 = tpu.matmul %207, %214, %cst_73 {dimension_numbers = #tpu.dot_dimension_numbers<[1], [0], [0], [1], [0, 0, 1, 1], [], []>} : vector<8x128xf32>, vector<128x512xf32>, vector<8x512xf32> -> vector<8x512xf32>
    %216 = arith.addf %211, %215 : vector<8x512xf32>
    %217 = vector.extract_strided_slice %216 {offsets = [0, 0], sizes = [8, 128], strides = [1, 1]} : vector<8x512xf32> to vector<8x128xf32>
    %218 = arith.negf %217 : vector<8x128xf32>
    %219 = math.exp %218 : vector<8x128xf32>
    %cst_74 = arith.constant 1.000000e+00 : f32
    %220 = vector.broadcast %cst_74 : f32 to vector<8x128xf32>
    %221 = arith.addf %220, %219 : vector<8x128xf32>
    %222 = arith.divf %220, %221 : vector<8x128xf32>
    %223 = vector.extract_strided_slice %216 {offsets = [0, 128], sizes = [8, 128], strides = [1, 1]} : vector<8x512xf32> to vector<8x128xf32>
    %224 = arith.negf %223 : vector<8x128xf32>
    %225 = math.exp %224 : vector<8x128xf32>
    %cst_75 = arith.constant 1.000000e+00 : f32
    %226 = vector.broadcast %cst_75 : f32 to vector<8x128xf32>
    %227 = arith.addf %226, %225 : vector<8x128xf32>
    %228 = arith.divf %226, %227 : vector<8x128xf32>
    %229 = vector.extract_strided_slice %216 {offsets = [0, 256], sizes = [8, 128], strides = [1, 1]} : vector<8x512xf32> to vector<8x128xf32>
    %230 = math.tanh %229 : vector<8x128xf32>
    %231 = vector.extract_strided_slice %216 {offsets = [0, 384], sizes = [8, 128], strides = [1, 1]} : vector<8x512xf32> to vector<8x128xf32>
    %232 = arith.negf %231 : vector<8x128xf32>
    %233 = math.exp %232 : vector<8x128xf32>
    %cst_76 = arith.constant 1.000000e+00 : f32
    %234 = vector.broadcast %cst_76 : f32 to vector<8x128xf32>
    %235 = arith.addf %234, %233 : vector<8x128xf32>
    %236 = arith.divf %234, %235 : vector<8x128xf32>
    %237 = arith.mulf %228, %204 : vector<8x128xf32>
    %238 = arith.mulf %222, %230 : vector<8x128xf32>
    %239 = arith.addf %237, %238 : vector<8x128xf32>
    %cst_77 = arith.constant dense<0.000000e+00> : vector<8x128xf32>
    %240 = tpu.matmul %239, %13, %cst_77 {dimension_numbers = #tpu.dot_dimension_numbers<[1], [0], [0], [1], [0, 0, 1, 1], [], []>} : vector<8x128xf32>, vector<128x128xf32>, vector<8x128xf32> -> vector<8x128xf32>
    %241 = math.tanh %240 : vector<8x128xf32>
    %242 = arith.mulf %236, %241 : vector<8x128xf32>
    %c0_78 = arith.constant 0 : index
    %c0_79 = arith.constant 0 : index
    %243 = vector.load %arg5[%c0_78, %c0_79] : memref<128x512xf32, #tpu.memory_space<vmem>>, vector<128x512xf32>
    %cst_80 = arith.constant dense<0.000000e+00> : vector<8x512xf32>
    %244 = tpu.matmul %242, %243, %cst_80 {dimension_numbers = #tpu.dot_dimension_numbers<[1], [0], [0], [1], [0, 0, 1, 1], [], []>} : vector<8x128xf32>, vector<128x512xf32>, vector<8x512xf32> -> vector<8x512xf32>
    %245 = arith.addf %213, %244 : vector<8x512xf32>
    %246 = vector.extract_strided_slice %245 {offsets = [0, 0], sizes = [8, 128], strides = [1, 1]} : vector<8x512xf32> to vector<8x128xf32>
    %247 = arith.negf %246 : vector<8x128xf32>
    %248 = math.exp %247 : vector<8x128xf32>
    %cst_81 = arith.constant 1.000000e+00 : f32
    %249 = vector.broadcast %cst_81 : f32 to vector<8x128xf32>
    %250 = arith.addf %249, %248 : vector<8x128xf32>
    %251 = arith.divf %249, %250 : vector<8x128xf32>
    %252 = vector.extract_strided_slice %245 {offsets = [0, 128], sizes = [8, 128], strides = [1, 1]} : vector<8x512xf32> to vector<8x128xf32>
    %253 = arith.negf %252 : vector<8x128xf32>
    %254 = math.exp %253 : vector<8x128xf32>
    %cst_82 = arith.constant 1.000000e+00 : f32
    %255 = vector.broadcast %cst_82 : f32 to vector<8x128xf32>
    %256 = arith.addf %255, %254 : vector<8x128xf32>
    %257 = arith.divf %255, %256 : vector<8x128xf32>
    %258 = vector.extract_strided_slice %245 {offsets = [0, 256], sizes = [8, 128], strides = [1, 1]} : vector<8x512xf32> to vector<8x128xf32>
    %259 = math.tanh %258 : vector<8x128xf32>
    %260 = vector.extract_strided_slice %245 {offsets = [0, 384], sizes = [8, 128], strides = [1, 1]} : vector<8x512xf32> to vector<8x128xf32>
    %261 = arith.negf %260 : vector<8x128xf32>
    %262 = math.exp %261 : vector<8x128xf32>
    %cst_83 = arith.constant 1.000000e+00 : f32
    %263 = vector.broadcast %cst_83 : f32 to vector<8x128xf32>
    %264 = arith.addf %263, %262 : vector<8x128xf32>
    %265 = arith.divf %263, %264 : vector<8x128xf32>
    %266 = arith.mulf %257, %239 : vector<8x128xf32>
    %267 = arith.mulf %251, %259 : vector<8x128xf32>
    %268 = arith.addf %266, %267 : vector<8x128xf32>
    %cst_84 = arith.constant dense<0.000000e+00> : vector<8x128xf32>
    %269 = tpu.matmul %268, %13, %cst_84 {dimension_numbers = #tpu.dot_dimension_numbers<[1], [0], [0], [1], [0, 0, 1, 1], [], []>} : vector<8x128xf32>, vector<128x128xf32>, vector<8x128xf32> -> vector<8x128xf32>
    %270 = math.tanh %269 : vector<8x128xf32>
    %271 = arith.mulf %265, %270 : vector<8x128xf32>
    %c4_i32 = arith.constant 4 : i32
    %c8_i32_85 = arith.constant 8 : i32
    %272 = arith.muli %c4_i32, %c8_i32_85 : i32
    %273 = tpu.assume_multiple %272, 8 : i32
    %274 = arith.index_cast %273 : i32 to index
    %c0_86 = arith.constant 0 : index
    %275 = vector.load %arg9[%274, %c0_86] : memref<64x512xf32, #tpu.memory_space<vmem>>, vector<8x512xf32>
    %276 = arith.index_cast %273 : i32 to index
    %c0_87 = arith.constant 0 : index
    %277 = vector.load %arg10[%276, %c0_87] : memref<64x512xf32, #tpu.memory_space<vmem>>, vector<8x512xf32>
    %c0_88 = arith.constant 0 : index
    %c0_89 = arith.constant 0 : index
    %278 = vector.load %arg2[%c0_88, %c0_89] : memref<128x512xf32, #tpu.memory_space<vmem>>, vector<128x512xf32>
    %cst_90 = arith.constant dense<0.000000e+00> : vector<8x512xf32>
    %279 = tpu.matmul %271, %278, %cst_90 {dimension_numbers = #tpu.dot_dimension_numbers<[1], [0], [0], [1], [0, 0, 1, 1], [], []>} : vector<8x128xf32>, vector<128x512xf32>, vector<8x512xf32> -> vector<8x512xf32>
    %280 = arith.addf %275, %279 : vector<8x512xf32>
    %281 = vector.extract_strided_slice %280 {offsets = [0, 0], sizes = [8, 128], strides = [1, 1]} : vector<8x512xf32> to vector<8x128xf32>
    %282 = arith.negf %281 : vector<8x128xf32>
    %283 = math.exp %282 : vector<8x128xf32>
    %cst_91 = arith.constant 1.000000e+00 : f32
    %284 = vector.broadcast %cst_91 : f32 to vector<8x128xf32>
    %285 = arith.addf %284, %283 : vector<8x128xf32>
    %286 = arith.divf %284, %285 : vector<8x128xf32>
    %287 = vector.extract_strided_slice %280 {offsets = [0, 128], sizes = [8, 128], strides = [1, 1]} : vector<8x512xf32> to vector<8x128xf32>
    %288 = arith.negf %287 : vector<8x128xf32>
    %289 = math.exp %288 : vector<8x128xf32>
    %cst_92 = arith.constant 1.000000e+00 : f32
    %290 = vector.broadcast %cst_92 : f32 to vector<8x128xf32>
    %291 = arith.addf %290, %289 : vector<8x128xf32>
    %292 = arith.divf %290, %291 : vector<8x128xf32>
    %293 = vector.extract_strided_slice %280 {offsets = [0, 256], sizes = [8, 128], strides = [1, 1]} : vector<8x512xf32> to vector<8x128xf32>
    %294 = math.tanh %293 : vector<8x128xf32>
    %295 = vector.extract_strided_slice %280 {offsets = [0, 384], sizes = [8, 128], strides = [1, 1]} : vector<8x512xf32> to vector<8x128xf32>
    %296 = arith.negf %295 : vector<8x128xf32>
    %297 = math.exp %296 : vector<8x128xf32>
    %cst_93 = arith.constant 1.000000e+00 : f32
    %298 = vector.broadcast %cst_93 : f32 to vector<8x128xf32>
    %299 = arith.addf %298, %297 : vector<8x128xf32>
    %300 = arith.divf %298, %299 : vector<8x128xf32>
    %301 = arith.mulf %292, %268 : vector<8x128xf32>
    %302 = arith.mulf %286, %294 : vector<8x128xf32>
    %303 = arith.addf %301, %302 : vector<8x128xf32>
    %cst_94 = arith.constant dense<0.000000e+00> : vector<8x128xf32>
    %304 = tpu.matmul %303, %13, %cst_94 {dimension_numbers = #tpu.dot_dimension_numbers<[1], [0], [0], [1], [0, 0, 1, 1], [], []>} : vector<8x128xf32>, vector<128x128xf32>, vector<8x128xf32> -> vector<8x128xf32>
    %305 = math.tanh %304 : vector<8x128xf32>
    %306 = arith.mulf %300, %305 : vector<8x128xf32>
    %c0_95 = arith.constant 0 : index
    %c0_96 = arith.constant 0 : index
    %307 = vector.load %arg5[%c0_95, %c0_96] : memref<128x512xf32, #tpu.memory_space<vmem>>, vector<128x512xf32>
    %cst_97 = arith.constant dense<0.000000e+00> : vector<8x512xf32>
    %308 = tpu.matmul %306, %307, %cst_97 {dimension_numbers = #tpu.dot_dimension_numbers<[1], [0], [0], [1], [0, 0, 1, 1], [], []>} : vector<8x128xf32>, vector<128x512xf32>, vector<8x512xf32> -> vector<8x512xf32>
    %309 = arith.addf %277, %308 : vector<8x512xf32>
    %310 = vector.extract_strided_slice %309 {offsets = [0, 0], sizes = [8, 128], strides = [1, 1]} : vector<8x512xf32> to vector<8x128xf32>
    %311 = arith.negf %310 : vector<8x128xf32>
    %312 = math.exp %311 : vector<8x128xf32>
    %cst_98 = arith.constant 1.000000e+00 : f32
    %313 = vector.broadcast %cst_98 : f32 to vector<8x128xf32>
    %314 = arith.addf %313, %312 : vector<8x128xf32>
    %315 = arith.divf %313, %314 : vector<8x128xf32>
    %316 = vector.extract_strided_slice %309 {offsets = [0, 128], sizes = [8, 128], strides = [1, 1]} : vector<8x512xf32> to vector<8x128xf32>
    %317 = arith.negf %316 : vector<8x128xf32>
    %318 = math.exp %317 : vector<8x128xf32>
    %cst_99 = arith.constant 1.000000e+00 : f32
    %319 = vector.broadcast %cst_99 : f32 to vector<8x128xf32>
    %320 = arith.addf %319, %318 : vector<8x128xf32>
    %321 = arith.divf %319, %320 : vector<8x128xf32>
    %322 = vector.extract_strided_slice %309 {offsets = [0, 256], sizes = [8, 128], strides = [1, 1]} : vector<8x512xf32> to vector<8x128xf32>
    %323 = math.tanh %322 : vector<8x128xf32>
    %324 = vector.extract_strided_slice %309 {offsets = [0, 384], sizes = [8, 128], strides = [1, 1]} : vector<8x512xf32> to vector<8x128xf32>
    %325 = arith.negf %324 : vector<8x128xf32>
    %326 = math.exp %325 : vector<8x128xf32>
    %cst_100 = arith.constant 1.000000e+00 : f32
    %327 = vector.broadcast %cst_100 : f32 to vector<8x128xf32>
    %328 = arith.addf %327, %326 : vector<8x128xf32>
    %329 = arith.divf %327, %328 : vector<8x128xf32>
    %330 = arith.mulf %321, %303 : vector<8x128xf32>
    %331 = arith.mulf %315, %323 : vector<8x128xf32>
    %332 = arith.addf %330, %331 : vector<8x128xf32>
    %cst_101 = arith.constant dense<0.000000e+00> : vector<8x128xf32>
    %333 = tpu.matmul %332, %13, %cst_101 {dimension_numbers = #tpu.dot_dimension_numbers<[1], [0], [0], [1], [0, 0, 1, 1], [], []>} : vector<8x128xf32>, vector<128x128xf32>, vector<8x128xf32> -> vector<8x128xf32>
    %334 = math.tanh %333 : vector<8x128xf32>
    %335 = arith.mulf %329, %334 : vector<8x128xf32>
    %c5_i32 = arith.constant 5 : i32
    %c8_i32_102 = arith.constant 8 : i32
    %336 = arith.muli %c5_i32, %c8_i32_102 : i32
    %337 = tpu.assume_multiple %336, 8 : i32
    %338 = arith.index_cast %337 : i32 to index
    %c0_103 = arith.constant 0 : index
    %339 = vector.load %arg9[%338, %c0_103] : memref<64x512xf32, #tpu.memory_space<vmem>>, vector<8x512xf32>
    %340 = arith.index_cast %337 : i32 to index
    %c0_104 = arith.constant 0 : index
    %341 = vector.load %arg10[%340, %c0_104] : memref<64x512xf32, #tpu.memory_space<vmem>>, vector<8x512xf32>
    %c0_105 = arith.constant 0 : index
    %c0_106 = arith.constant 0 : index
    %342 = vector.load %arg2[%c0_105, %c0_106] : memref<128x512xf32, #tpu.memory_space<vmem>>, vector<128x512xf32>
    %cst_107 = arith.constant dense<0.000000e+00> : vector<8x512xf32>
    %343 = tpu.matmul %335, %342, %cst_107 {dimension_numbers = #tpu.dot_dimension_numbers<[1], [0], [0], [1], [0, 0, 1, 1], [], []>} : vector<8x128xf32>, vector<128x512xf32>, vector<8x512xf32> -> vector<8x512xf32>
    %344 = arith.addf %339, %343 : vector<8x512xf32>
    %345 = vector.extract_strided_slice %344 {offsets = [0, 0], sizes = [8, 128], strides = [1, 1]} : vector<8x512xf32> to vector<8x128xf32>
    %346 = arith.negf %345 : vector<8x128xf32>
    %347 = math.exp %346 : vector<8x128xf32>
    %cst_108 = arith.constant 1.000000e+00 : f32
    %348 = vector.broadcast %cst_108 : f32 to vector<8x128xf32>
    %349 = arith.addf %348, %347 : vector<8x128xf32>
    %350 = arith.divf %348, %349 : vector<8x128xf32>
    %351 = vector.extract_strided_slice %344 {offsets = [0, 128], sizes = [8, 128], strides = [1, 1]} : vector<8x512xf32> to vector<8x128xf32>
    %352 = arith.negf %351 : vector<8x128xf32>
    %353 = math.exp %352 : vector<8x128xf32>
    %cst_109 = arith.constant 1.000000e+00 : f32
    %354 = vector.broadcast %cst_109 : f32 to vector<8x128xf32>
    %355 = arith.addf %354, %353 : vector<8x128xf32>
    %356 = arith.divf %354, %355 : vector<8x128xf32>
    %357 = vector.extract_strided_slice %344 {offsets = [0, 256], sizes = [8, 128], strides = [1, 1]} : vector<8x512xf32> to vector<8x128xf32>
    %358 = math.tanh %357 : vector<8x128xf32>
    %359 = vector.extract_strided_slice %344 {offsets = [0, 384], sizes = [8, 128], strides = [1, 1]} : vector<8x512xf32> to vector<8x128xf32>
    %360 = arith.negf %359 : vector<8x128xf32>
    %361 = math.exp %360 : vector<8x128xf32>
    %cst_110 = arith.constant 1.000000e+00 : f32
    %362 = vector.broadcast %cst_110 : f32 to vector<8x128xf32>
    %363 = arith.addf %362, %361 : vector<8x128xf32>
    %364 = arith.divf %362, %363 : vector<8x128xf32>
    %365 = arith.mulf %356, %332 : vector<8x128xf32>
    %366 = arith.mulf %350, %358 : vector<8x128xf32>
    %367 = arith.addf %365, %366 : vector<8x128xf32>
    %cst_111 = arith.constant dense<0.000000e+00> : vector<8x128xf32>
    %368 = tpu.matmul %367, %13, %cst_111 {dimension_numbers = #tpu.dot_dimension_numbers<[1], [0], [0], [1], [0, 0, 1, 1], [], []>} : vector<8x128xf32>, vector<128x128xf32>, vector<8x128xf32> -> vector<8x128xf32>
    %369 = math.tanh %368 : vector<8x128xf32>
    %370 = arith.mulf %364, %369 : vector<8x128xf32>
    %c0_112 = arith.constant 0 : index
    %c0_113 = arith.constant 0 : index
    %371 = vector.load %arg5[%c0_112, %c0_113] : memref<128x512xf32, #tpu.memory_space<vmem>>, vector<128x512xf32>
    %cst_114 = arith.constant dense<0.000000e+00> : vector<8x512xf32>
    %372 = tpu.matmul %370, %371, %cst_114 {dimension_numbers = #tpu.dot_dimension_numbers<[1], [0], [0], [1], [0, 0, 1, 1], [], []>} : vector<8x128xf32>, vector<128x512xf32>, vector<8x512xf32> -> vector<8x512xf32>
    %373 = arith.addf %341, %372 : vector<8x512xf32>
    %374 = vector.extract_strided_slice %373 {offsets = [0, 0], sizes = [8, 128], strides = [1, 1]} : vector<8x512xf32> to vector<8x128xf32>
    %375 = arith.negf %374 : vector<8x128xf32>
    %376 = math.exp %375 : vector<8x128xf32>
    %cst_115 = arith.constant 1.000000e+00 : f32
    %377 = vector.broadcast %cst_115 : f32 to vector<8x128xf32>
    %378 = arith.addf %377, %376 : vector<8x128xf32>
    %379 = arith.divf %377, %378 : vector<8x128xf32>
    %380 = vector.extract_strided_slice %373 {offsets = [0, 128], sizes = [8, 128], strides = [1, 1]} : vector<8x512xf32> to vector<8x128xf32>
    %381 = arith.negf %380 : vector<8x128xf32>
    %382 = math.exp %381 : vector<8x128xf32>
    %cst_116 = arith.constant 1.000000e+00 : f32
    %383 = vector.broadcast %cst_116 : f32 to vector<8x128xf32>
    %384 = arith.addf %383, %382 : vector<8x128xf32>
    %385 = arith.divf %383, %384 : vector<8x128xf32>
    %386 = vector.extract_strided_slice %373 {offsets = [0, 256], sizes = [8, 128], strides = [1, 1]} : vector<8x512xf32> to vector<8x128xf32>
    %387 = math.tanh %386 : vector<8x128xf32>
    %388 = vector.extract_strided_slice %373 {offsets = [0, 384], sizes = [8, 128], strides = [1, 1]} : vector<8x512xf32> to vector<8x128xf32>
    %389 = arith.negf %388 : vector<8x128xf32>
    %390 = math.exp %389 : vector<8x128xf32>
    %cst_117 = arith.constant 1.000000e+00 : f32
    %391 = vector.broadcast %cst_117 : f32 to vector<8x128xf32>
    %392 = arith.addf %391, %390 : vector<8x128xf32>
    %393 = arith.divf %391, %392 : vector<8x128xf32>
    %394 = arith.mulf %385, %367 : vector<8x128xf32>
    %395 = arith.mulf %379, %387 : vector<8x128xf32>
    %396 = arith.addf %394, %395 : vector<8x128xf32>
    %cst_118 = arith.constant dense<0.000000e+00> : vector<8x128xf32>
    %397 = tpu.matmul %396, %13, %cst_118 {dimension_numbers = #tpu.dot_dimension_numbers<[1], [0], [0], [1], [0, 0, 1, 1], [], []>} : vector<8x128xf32>, vector<128x128xf32>, vector<8x128xf32> -> vector<8x128xf32>
    %398 = math.tanh %397 : vector<8x128xf32>
    %399 = arith.mulf %393, %398 : vector<8x128xf32>
    %c6_i32 = arith.constant 6 : i32
    %c8_i32_119 = arith.constant 8 : i32
    %400 = arith.muli %c6_i32, %c8_i32_119 : i32
    %401 = tpu.assume_multiple %400, 8 : i32
    %402 = arith.index_cast %401 : i32 to index
    %c0_120 = arith.constant 0 : index
    %403 = vector.load %arg9[%402, %c0_120] : memref<64x512xf32, #tpu.memory_space<vmem>>, vector<8x512xf32>
    %404 = arith.index_cast %401 : i32 to index
    %c0_121 = arith.constant 0 : index
    %405 = vector.load %arg10[%404, %c0_121] : memref<64x512xf32, #tpu.memory_space<vmem>>, vector<8x512xf32>
    %c0_122 = arith.constant 0 : index
    %c0_123 = arith.constant 0 : index
    %406 = vector.load %arg2[%c0_122, %c0_123] : memref<128x512xf32, #tpu.memory_space<vmem>>, vector<128x512xf32>
    %cst_124 = arith.constant dense<0.000000e+00> : vector<8x512xf32>
    %407 = tpu.matmul %399, %406, %cst_124 {dimension_numbers = #tpu.dot_dimension_numbers<[1], [0], [0], [1], [0, 0, 1, 1], [], []>} : vector<8x128xf32>, vector<128x512xf32>, vector<8x512xf32> -> vector<8x512xf32>
    %408 = arith.addf %403, %407 : vector<8x512xf32>
    %409 = vector.extract_strided_slice %408 {offsets = [0, 0], sizes = [8, 128], strides = [1, 1]} : vector<8x512xf32> to vector<8x128xf32>
    %410 = arith.negf %409 : vector<8x128xf32>
    %411 = math.exp %410 : vector<8x128xf32>
    %cst_125 = arith.constant 1.000000e+00 : f32
    %412 = vector.broadcast %cst_125 : f32 to vector<8x128xf32>
    %413 = arith.addf %412, %411 : vector<8x128xf32>
    %414 = arith.divf %412, %413 : vector<8x128xf32>
    %415 = vector.extract_strided_slice %408 {offsets = [0, 128], sizes = [8, 128], strides = [1, 1]} : vector<8x512xf32> to vector<8x128xf32>
    %416 = arith.negf %415 : vector<8x128xf32>
    %417 = math.exp %416 : vector<8x128xf32>
    %cst_126 = arith.constant 1.000000e+00 : f32
    %418 = vector.broadcast %cst_126 : f32 to vector<8x128xf32>
    %419 = arith.addf %418, %417 : vector<8x128xf32>
    %420 = arith.divf %418, %419 : vector<8x128xf32>
    %421 = vector.extract_strided_slice %408 {offsets = [0, 256], sizes = [8, 128], strides = [1, 1]} : vector<8x512xf32> to vector<8x128xf32>
    %422 = math.tanh %421 : vector<8x128xf32>
    %423 = vector.extract_strided_slice %408 {offsets = [0, 384], sizes = [8, 128], strides = [1, 1]} : vector<8x512xf32> to vector<8x128xf32>
    %424 = arith.negf %423 : vector<8x128xf32>
    %425 = math.exp %424 : vector<8x128xf32>
    %cst_127 = arith.constant 1.000000e+00 : f32
    %426 = vector.broadcast %cst_127 : f32 to vector<8x128xf32>
    %427 = arith.addf %426, %425 : vector<8x128xf32>
    %428 = arith.divf %426, %427 : vector<8x128xf32>
    %429 = arith.mulf %420, %396 : vector<8x128xf32>
    %430 = arith.mulf %414, %422 : vector<8x128xf32>
    %431 = arith.addf %429, %430 : vector<8x128xf32>
    %cst_128 = arith.constant dense<0.000000e+00> : vector<8x128xf32>
    %432 = tpu.matmul %431, %13, %cst_128 {dimension_numbers = #tpu.dot_dimension_numbers<[1], [0], [0], [1], [0, 0, 1, 1], [], []>} : vector<8x128xf32>, vector<128x128xf32>, vector<8x128xf32> -> vector<8x128xf32>
    %433 = math.tanh %432 : vector<8x128xf32>
    %434 = arith.mulf %428, %433 : vector<8x128xf32>
    %c0_129 = arith.constant 0 : index
    %c0_130 = arith.constant 0 : index
    %435 = vector.load %arg5[%c0_129, %c0_130] : memref<128x512xf32, #tpu.memory_space<vmem>>, vector<128x512xf32>
    %cst_131 = arith.constant dense<0.000000e+00> : vector<8x512xf32>
    %436 = tpu.matmul %434, %435, %cst_131 {dimension_numbers = #tpu.dot_dimension_numbers<[1], [0], [0], [1], [0, 0, 1, 1], [], []>} : vector<8x128xf32>, vector<128x512xf32>, vector<8x512xf32> -> vector<8x512xf32>
    %437 = arith.addf %405, %436 : vector<8x512xf32>
    %438 = vector.extract_strided_slice %437 {offsets = [0, 0], sizes = [8, 128], strides = [1, 1]} : vector<8x512xf32> to vector<8x128xf32>
    %439 = arith.negf %438 : vector<8x128xf32>
    %440 = math.exp %439 : vector<8x128xf32>
    %cst_132 = arith.constant 1.000000e+00 : f32
    %441 = vector.broadcast %cst_132 : f32 to vector<8x128xf32>
    %442 = arith.addf %441, %440 : vector<8x128xf32>
    %443 = arith.divf %441, %442 : vector<8x128xf32>
    %444 = vector.extract_strided_slice %437 {offsets = [0, 128], sizes = [8, 128], strides = [1, 1]} : vector<8x512xf32> to vector<8x128xf32>
    %445 = arith.negf %444 : vector<8x128xf32>
    %446 = math.exp %445 : vector<8x128xf32>
    %cst_133 = arith.constant 1.000000e+00 : f32
    %447 = vector.broadcast %cst_133 : f32 to vector<8x128xf32>
    %448 = arith.addf %447, %446 : vector<8x128xf32>
    %449 = arith.divf %447, %448 : vector<8x128xf32>
    %450 = vector.extract_strided_slice %437 {offsets = [0, 256], sizes = [8, 128], strides = [1, 1]} : vector<8x512xf32> to vector<8x128xf32>
    %451 = math.tanh %450 : vector<8x128xf32>
    %452 = vector.extract_strided_slice %437 {offsets = [0, 384], sizes = [8, 128], strides = [1, 1]} : vector<8x512xf32> to vector<8x128xf32>
    %453 = arith.negf %452 : vector<8x128xf32>
    %454 = math.exp %453 : vector<8x128xf32>
    %cst_134 = arith.constant 1.000000e+00 : f32
    %455 = vector.broadcast %cst_134 : f32 to vector<8x128xf32>
    %456 = arith.addf %455, %454 : vector<8x128xf32>
    %457 = arith.divf %455, %456 : vector<8x128xf32>
    %458 = arith.mulf %449, %431 : vector<8x128xf32>
    %459 = arith.mulf %443, %451 : vector<8x128xf32>
    %460 = arith.addf %458, %459 : vector<8x128xf32>
    %cst_135 = arith.constant dense<0.000000e+00> : vector<8x128xf32>
    %461 = tpu.matmul %460, %13, %cst_135 {dimension_numbers = #tpu.dot_dimension_numbers<[1], [0], [0], [1], [0, 0, 1, 1], [], []>} : vector<8x128xf32>, vector<128x128xf32>, vector<8x128xf32> -> vector<8x128xf32>
    %462 = math.tanh %461 : vector<8x128xf32>
    %463 = arith.mulf %457, %462 : vector<8x128xf32>
    %c7_i32 = arith.constant 7 : i32
    %c8_i32_136 = arith.constant 8 : i32
    %464 = arith.muli %c7_i32, %c8_i32_136 : i32
    %465 = tpu.assume_multiple %464, 8 : i32
    %466 = arith.index_cast %465 : i32 to index
    %c0_137 = arith.constant 0 : index
    %467 = vector.load %arg9[%466, %c0_137] : memref<64x512xf32, #tpu.memory_space<vmem>>, vector<8x512xf32>
    %468 = arith.index_cast %465 : i32 to index
    %c0_138 = arith.constant 0 : index
    %469 = vector.load %arg10[%468, %c0_138] : memref<64x512xf32, #tpu.memory_space<vmem>>, vector<8x512xf32>
    %c0_139 = arith.constant 0 : index
    %c0_140 = arith.constant 0 : index
    %470 = vector.load %arg2[%c0_139, %c0_140] : memref<128x512xf32, #tpu.memory_space<vmem>>, vector<128x512xf32>
    %cst_141 = arith.constant dense<0.000000e+00> : vector<8x512xf32>
    %471 = tpu.matmul %463, %470, %cst_141 {dimension_numbers = #tpu.dot_dimension_numbers<[1], [0], [0], [1], [0, 0, 1, 1], [], []>} : vector<8x128xf32>, vector<128x512xf32>, vector<8x512xf32> -> vector<8x512xf32>
    %472 = arith.addf %467, %471 : vector<8x512xf32>
    %473 = vector.extract_strided_slice %472 {offsets = [0, 0], sizes = [8, 128], strides = [1, 1]} : vector<8x512xf32> to vector<8x128xf32>
    %474 = arith.negf %473 : vector<8x128xf32>
    %475 = math.exp %474 : vector<8x128xf32>
    %cst_142 = arith.constant 1.000000e+00 : f32
    %476 = vector.broadcast %cst_142 : f32 to vector<8x128xf32>
    %477 = arith.addf %476, %475 : vector<8x128xf32>
    %478 = arith.divf %476, %477 : vector<8x128xf32>
    %479 = vector.extract_strided_slice %472 {offsets = [0, 128], sizes = [8, 128], strides = [1, 1]} : vector<8x512xf32> to vector<8x128xf32>
    %480 = arith.negf %479 : vector<8x128xf32>
    %481 = math.exp %480 : vector<8x128xf32>
    %cst_143 = arith.constant 1.000000e+00 : f32
    %482 = vector.broadcast %cst_143 : f32 to vector<8x128xf32>
    %483 = arith.addf %482, %481 : vector<8x128xf32>
    %484 = arith.divf %482, %483 : vector<8x128xf32>
    %485 = vector.extract_strided_slice %472 {offsets = [0, 256], sizes = [8, 128], strides = [1, 1]} : vector<8x512xf32> to vector<8x128xf32>
    %486 = math.tanh %485 : vector<8x128xf32>
    %487 = vector.extract_strided_slice %472 {offsets = [0, 384], sizes = [8, 128], strides = [1, 1]} : vector<8x512xf32> to vector<8x128xf32>
    %488 = arith.negf %487 : vector<8x128xf32>
    %489 = math.exp %488 : vector<8x128xf32>
    %cst_144 = arith.constant 1.000000e+00 : f32
    %490 = vector.broadcast %cst_144 : f32 to vector<8x128xf32>
    %491 = arith.addf %490, %489 : vector<8x128xf32>
    %492 = arith.divf %490, %491 : vector<8x128xf32>
    %493 = arith.mulf %484, %460 : vector<8x128xf32>
    %494 = arith.mulf %478, %486 : vector<8x128xf32>
    %495 = arith.addf %493, %494 : vector<8x128xf32>
    %cst_145 = arith.constant dense<0.000000e+00> : vector<8x128xf32>
    %496 = tpu.matmul %495, %13, %cst_145 {dimension_numbers = #tpu.dot_dimension_numbers<[1], [0], [0], [1], [0, 0, 1, 1], [], []>} : vector<8x128xf32>, vector<128x128xf32>, vector<8x128xf32> -> vector<8x128xf32>
    %497 = math.tanh %496 : vector<8x128xf32>
    %498 = arith.mulf %492, %497 : vector<8x128xf32>
    %c0_146 = arith.constant 0 : index
    %c0_147 = arith.constant 0 : index
    %499 = vector.load %arg5[%c0_146, %c0_147] : memref<128x512xf32, #tpu.memory_space<vmem>>, vector<128x512xf32>
    %cst_148 = arith.constant dense<0.000000e+00> : vector<8x512xf32>
    %500 = tpu.matmul %498, %499, %cst_148 {dimension_numbers = #tpu.dot_dimension_numbers<[1], [0], [0], [1], [0, 0, 1, 1], [], []>} : vector<8x128xf32>, vector<128x512xf32>, vector<8x512xf32> -> vector<8x512xf32>
    %501 = arith.addf %469, %500 : vector<8x512xf32>
    %502 = vector.extract_strided_slice %501 {offsets = [0, 0], sizes = [8, 128], strides = [1, 1]} : vector<8x512xf32> to vector<8x128xf32>
    %503 = arith.negf %502 : vector<8x128xf32>
    %504 = math.exp %503 : vector<8x128xf32>
    %cst_149 = arith.constant 1.000000e+00 : f32
    %505 = vector.broadcast %cst_149 : f32 to vector<8x128xf32>
    %506 = arith.addf %505, %504 : vector<8x128xf32>
    %507 = arith.divf %505, %506 : vector<8x128xf32>
    %508 = vector.extract_strided_slice %501 {offsets = [0, 128], sizes = [8, 128], strides = [1, 1]} : vector<8x512xf32> to vector<8x128xf32>
    %509 = arith.negf %508 : vector<8x128xf32>
    %510 = math.exp %509 : vector<8x128xf32>
    %cst_150 = arith.constant 1.000000e+00 : f32
    %511 = vector.broadcast %cst_150 : f32 to vector<8x128xf32>
    %512 = arith.addf %511, %510 : vector<8x128xf32>
    %513 = arith.divf %511, %512 : vector<8x128xf32>
    %514 = vector.extract_strided_slice %501 {offsets = [0, 256], sizes = [8, 128], strides = [1, 1]} : vector<8x512xf32> to vector<8x128xf32>
    %515 = math.tanh %514 : vector<8x128xf32>
    %516 = vector.extract_strided_slice %501 {offsets = [0, 384], sizes = [8, 128], strides = [1, 1]} : vector<8x512xf32> to vector<8x128xf32>
    %517 = arith.negf %516 : vector<8x128xf32>
    %518 = math.exp %517 : vector<8x128xf32>
    %cst_151 = arith.constant 1.000000e+00 : f32
    %519 = vector.broadcast %cst_151 : f32 to vector<8x128xf32>
    %520 = arith.addf %519, %518 : vector<8x128xf32>
    %521 = arith.divf %519, %520 : vector<8x128xf32>
    %522 = arith.mulf %513, %495 : vector<8x128xf32>
    %523 = arith.mulf %507, %515 : vector<8x128xf32>
    %524 = arith.addf %522, %523 : vector<8x128xf32>
    %cst_152 = arith.constant dense<0.000000e+00> : vector<8x128xf32>
    %525 = tpu.matmul %524, %13, %cst_152 {dimension_numbers = #tpu.dot_dimension_numbers<[1], [0], [0], [1], [0, 0, 1, 1], [], []>} : vector<8x128xf32>, vector<128x128xf32>, vector<8x128xf32> -> vector<8x128xf32>
    %526 = math.tanh %525 : vector<8x128xf32>
    %527 = arith.mulf %521, %526 : vector<8x128xf32>
    %c8_i32_153 = arith.constant 8 : i32
    %c0_154 = arith.constant 0 : index
    %c0_155 = arith.constant 0 : index
    %528 = vector.load %arg8[%c0_154, %c0_155] : memref<8x128xf32, #tpu.memory_space<vmem>>, vector<8x128xf32>
    tpu.vector_store %arg8[%c0_154, %c0_155], %527 {strides = array<i32>} : memref<8x128xf32, #tpu.memory_space<vmem>>, vector<8x128xf32>,
    return
  }
}

</mosaic_0001>

<llo_original>
// kernel: tpu_custom_call.1
$region0: #{tpu_custom_call.1}
  #allocation0 [shape = 'u32[]', space=smem, size = 0x4, offset = 0x4, fixed_abs, tag = 'smem constant byte address 0x4 - core index']
  #allocation1 [shape = 'u32[72,128]{1,0:T(1,128)}', space=vmem, size = 0x9000, scoped, tag = 'internal scratch']
  #allocation2 [shape = 'f32[64,512]{1,0:T(8,128)}', space=vmem, size = 0x20000, scoped, tag = 'scratch operand']
  #allocation3 [shape = 'f32[64,512]{1,0:T(8,128)}', space=vmem, size = 0x20000, scoped, tag = 'scratch operand']
  %s0 = inlined_call_operand.vmem [shape: f32[64,36], index: 0, kind: input, shape index: {}]
  %s1 = inlined_call_operand.hbm [shape: f32[36,512], index: 1, kind: input, shape index: {}]
  %s2 = inlined_call_operand.hbm [shape: f32[128,512], index: 2, kind: input, shape index: {}]
  %s3 = inlined_call_operand.vmem [shape: f32[1,512], index: 3, kind: input, shape index: {}]
  %s4 = inlined_call_operand.hbm [shape: f32[36,512], index: 4, kind: input, shape index: {}]
  %s5 = inlined_call_operand.hbm [shape: f32[128,512], index: 5, kind: input, shape index: {}]
  %s6 = inlined_call_operand.vmem [shape: f32[1,512], index: 6, kind: input, shape index: {}]
  %s7 = inlined_call_operand.hbm [shape: f32[128,128], index: 7, kind: input, shape index: {}]
  %s8 = inlined_call_operand.hbm [shape: f32[8,128], index: 8, kind: output, shape index: {}]
  %s9 = sld [smem:[#allocation0]]
  $region62: #{tpu_custom_call.1} parent=0
    _
  %s11 = ssub.s32 1, %s9
  %s12 = scalar_select 0, %s11, %s9
  $region1: #{tpu_custom_call.1} parent=0
    #allocation4 [shape = 'u8[81920]{0}', space=vmem, size = 0x14000, scoped, tag = 'input window, operand 1, single buffered']
    #allocation5 [shape = 's32[1]{0}', space=sflag, size = 0x4, scoped, tag = 'scoped memory for tpu_custom_call.1']
    #allocation6 [shape = 's32[1]{0}', space=sflag, size = 0x4, scoped, tag = 'scoped memory for tpu_custom_call.1']
    #allocation7 [shape = 'u8[262144]{0}', space=vmem, size = 0x40000, scoped, tag = 'input window, operand 2, single buffered']
    #allocation8 [shape = 's32[1]{0}', space=sflag, size = 0x4, scoped, tag = 'scoped memory for tpu_custom_call.1']
    #allocation9 [shape = 'u8[81920]{0}', space=vmem, size = 0x14000, scoped, tag = 'input window, operand 4, single buffered']
    #allocation10 [shape = 'u8[262144]{0}', space=vmem, size = 0x40000, scoped, tag = 'input window, operand 5, single buffered']
    #allocation11 [shape = 's32[1]{0}', space=sflag, size = 0x4, scoped, tag = 'scoped memory for tpu_custom_call.1']
    #allocation12 [shape = 'u8[65536]{0}', space=vmem, size = 0x10000, scoped, tag = 'input window, operand 7, single buffered']
    #allocation13 [shape = 'u8[4096]{0}', space=vmem, size = 0x1000, scoped, tag = 'output window, operand 0, single buffered']
    %13 = vsyncpa [#allocation5], 0
    %14 = vsyncpa [#allocation8], 0
    %15 = vsyncpa [#allocation11], 0
    %16 = vsyncpa [#allocation6], 0
    // Predicated region
    $region2: #{tpu_custom_call.1} parent=1 // pred_check
      _
    $region3: #{tpu_custom_call.1} parent=1 // pred_check_branch
      %18 = sbr.rel (0) target = $region5
    $region4: #{tpu_custom_call.1} parent=1 // pred_region
      _
    $region5: #{tpu_custom_call.1} parent=1 // pred_fallthru
      _
    // Predicated region
    $region6: #{tpu_custom_call.1} parent=1 // pred_check
      _
    $region7: #{tpu_custom_call.1} parent=1 // pred_check_branch
      %20 = sbr.rel (0) target = $region9
    $region8: #{tpu_custom_call.1} parent=1 // pred_region
      %22 = vsyncadd [#allocation5], 0
      %s23 = sshll.u32 %s1, 4
      %s24 = int_to_ptr.hbm [resolvable:$true] %s23
      %s25 = sshll.u32 [#allocation4], 4
      %s26 = int_to_ptr.vmem [resolvable:$true] %s25
      %31 = dma.hbm_to_vmem [thread:$0]  %s24, 2560, %s26, [#allocation5], 512, 512, 32
    $region9: #{tpu_custom_call.1} parent=1 // pred_fallthru
      _
    // Predicated region
    $region10: #{tpu_custom_call.1} parent=1 // pred_check
      _
    $region11: #{tpu_custom_call.1} parent=1 // pred_check_branch
      %33 = sbr.rel (0) target = $region13
    $region12: #{tpu_custom_call.1} parent=1 // pred_region
      %35 = vsyncadd [#allocation8], 0
      %s36 = sshll.u32 %s2, 4
      %s37 = int_to_ptr.hbm [resolvable:$true] %s36
      %s38 = sshll.u32 [#allocation7], 4
      %s39 = int_to_ptr.vmem [resolvable:$true] %s38
      %44 = dma.hbm_to_vmem [thread:$0]  %s37, 8192, %s39, [#allocation8], 512, 512, 32
    $region13: #{tpu_custom_call.1} parent=1 // pred_fallthru
      _
    // Predicated region
    $region14: #{tpu_custom_call.1} parent=1 // pred_check
      _
    $region15: #{tpu_custom_call.1} parent=1 // pred_check_branch
      %46 = sbr.rel (0) target = $region17
    $region16: #{tpu_custom_call.1} parent=1 // pred_region
      _
    $region17: #{tpu_custom_call.1} parent=1 // pred_fallthru
      _
    // Predicated region
    $region18: #{tpu_custom_call.1} parent=1 // pred_check
      _
    $region19: #{tpu_custom_call.1} parent=1 // pred_check_branch
      %48 = sbr.rel (0) target = $region21
    $region20: #{tpu_custom_call.1} parent=1 // pred_region
      %50 = vsyncadd [#allocation8], 0
      %s51 = sshll.u32 %s4, 4
      %s52 = int_to_ptr.hbm [resolvable:$true] %s51
      %s53 = sshll.u32 [#allocation9], 4
      %s54 = int_to_ptr.vmem [resolvable:$true] %s53
      %59 = dma.hbm_to_vmem [thread:$0]  %s52, 2560, %s54, [#allocation8], 512, 512, 32
    $region21: #{tpu_custom_call.1} parent=1 // pred_fallthru
      _
    // Predicated region
    $region22: #{tpu_custom_call.1} parent=1 // pred_check
      _
    $region23: #{tpu_custom_call.1} parent=1 // pred_check_branch
      %61 = sbr.rel (0) target = $region25
    $region24: #{tpu_custom_call.1} parent=1 // pred_region
      %63 = vsyncadd [#allocation11], 0
      %s64 = sshll.u32 %s5, 4
      %s65 = int_to_ptr.hbm [resolvable:$true] %s64
      %s66 = sshll.u32 [#allocation10], 4
      %s67 = int_to_ptr.vmem [resolvable:$true] %s66
      %72 = dma.hbm_to_vmem [thread:$0]  %s65, 8192, %s67, [#allocation11], 512, 512, 32
    $region25: #{tpu_custom_call.1} parent=1 // pred_fallthru
      _
    // Predicated region
    $region26: #{tpu_custom_call.1} parent=1 // pred_check
      _
    $region27: #{tpu_custom_call.1} parent=1 // pred_check_branch
      %74 = sbr.rel (0) target = $region29
    $region28: #{tpu_custom_call.1} parent=1 // pred_region
      _
    $region29: #{tpu_custom_call.1} parent=1 // pred_fallthru
      _
    // Predicated region
    $region30: #{tpu_custom_call.1} parent=1 // pred_check
      _
    $region31: #{tpu_custom_call.1} parent=1 // pred_check_branch
      %76 = sbr.rel (0) target = $region33
    $region32: #{tpu_custom_call.1} parent=1 // pred_region
      %78 = vsyncadd [#allocation11], 0
      %s79 = sshll.u32 %s7, 4
      %s80 = int_to_ptr.hbm [resolvable:$true] %s79
      %s81 = sshll.u32 [#allocation12], 4
      %s82 = int_to_ptr.vmem [resolvable:$true] %s81
      %87 = dma.hbm_to_vmem [thread:$0]  %s80, 2048, %s82, [#allocation11], 128, 128, 8
    $region33: #{tpu_custom_call.1} parent=1 // pred_fallthru
      _
    // Predicated region
    $region34: #{tpu_custom_call.1} parent=1 // pred_check
      _
    $region35: #{tpu_custom_call.1} parent=1 // pred_check_branch
      %89 = sbr.rel (0) target = $region37
    $region36: #{tpu_custom_call.1} parent=1 // pred_region
      %91 = dma.done [#allocation5], 2560
    $region37: #{tpu_custom_call.1} parent=1 // pred_fallthru
      _
    // Predicated region
    $region38: #{tpu_custom_call.1} parent=1 // pred_check
      _
    $region39: #{tpu_custom_call.1} parent=1 // pred_check_branch
      %93 = sbr.rel (0) target = $region41
    $region40: #{tpu_custom_call.1} parent=1 // pred_region
      %95 = dma.done [#allocation8], 8192
    $region41: #{tpu_custom_call.1} parent=1 // pred_fallthru
      _
    // Predicated region
    $region42: #{tpu_custom_call.1} parent=1 // pred_check
      _
    $region43: #{tpu_custom_call.1} parent=1 // pred_check_branch
      %97 = sbr.rel (0) target = $region45
    $region44: #{tpu_custom_call.1} parent=1 // pred_region
      %99 = dma.done [#allocation8], 2560
    $region45: #{tpu_custom_call.1} parent=1 // pred_fallthru
      _
    // Predicated region
    $region46: #{tpu_custom_call.1} parent=1 // pred_check
      _
    $region47: #{tpu_custom_call.1} parent=1 // pred_check_branch
      %101 = sbr.rel (0) target = $region49
    $region48: #{tpu_custom_call.1} parent=1 // pred_region
      %103 = dma.done [#allocation11], 8192
    $region49: #{tpu_custom_call.1} parent=1 // pred_fallthru
      _
    // Predicated region
    $region50: #{tpu_custom_call.1} parent=1 // pred_check
      _
    $region51: #{tpu_custom_call.1} parent=1 // pred_check_branch
      %105 = sbr.rel (0) target = $region53
    $region52: #{tpu_custom_call.1} parent=1 // pred_region
      %107 = dma.done [#allocation11], 2048
    $region53: #{tpu_custom_call.1} parent=1 // pred_fallthru
      _
    %v108 = vld [vmem:[%s0] sm:$0xff]
    %v109 = vld [vmem:[%s0 + $0x8] sm:$0xff]
    %v110 = vld [vmem:[%s0 + $0x10] sm:$0xff]
    %v111 = vld [vmem:[%s0 + $0x18] sm:$0xff]
    %v112 = vld [vmem:[%s0 + $0x20] sm:$0xff]
    %v113 = vld [vmem:[%s0 + $0x28] sm:$0xff]
    %v114 = vld [vmem:[%s0 + $0x30] sm:$0xff]
    %v115 = vld [vmem:[%s0 + $0x38] sm:$0xff]
    %v116 = vld [vmem:[#allocation4] sm:$0xff]
    %v117 = vld [vmem:[#allocation4 + $0x8] sm:$0xff]
    %v118 = vld [vmem:[#allocation4 + $0x10] sm:$0xff]
    %v119 = vld [vmem:[#allocation4 + $0x18] sm:$0xff]
    %v120 = vld [vmem:[#allocation4 + $0x20] sm:$0xff]
    %v121 = vld [vmem:[#allocation4 + $0x28] sm:$0xff]
    %v122 = vld [vmem:[#allocation4 + $0x30] sm:$0xff]
    %v123 = vld [vmem:[#allocation4 + $0x38] sm:$0xff]
    %v124 = vld [vmem:[#allocation4 + $0x40] sm:$0xff]
    %v125 = vld [vmem:[#allocation4 + $0x48] sm:$0xff]
    %v126 = vld [vmem:[#allocation4 + $0x50] sm:$0xff]
    %v127 = vld [vmem:[#allocation4 + $0x58] sm:$0xff]
    %v128 = vld [vmem:[#allocation4 + $0x60] sm:$0xff]
    %v129 = vld [vmem:[#allocation4 + $0x68] sm:$0xff]
    %v130 = vld [vmem:[#allocation4 + $0x70] sm:$0xff]
    %v131 = vld [vmem:[#allocation4 + $0x78] sm:$0xff]
    %v132 = vld [vmem:[#allocation4 + $0x80] sm:$0xf]
    %v133 = vld [vmem:[#allocation4 + $0x88] sm:$0xf]
    %v134 = vld [vmem:[#allocation4 + $0x90] sm:$0xf]
    %v135 = vld [vmem:[#allocation4 + $0x98] sm:$0xf]
    %v136 = vld [vmem:[%s3] sm:$0xf]
    %v138 = vperm.slane %v136, 0
    %v139 = vperm.slane %v136, 1
    %v140 = vperm.slane %v136, 2
    %v141 = vperm.slane %v136, 3
    %vm146 = vcmask 293888
    %v148 = vsel %vm146, %v108, 0
    %v151 = vsel %vm146, %v109, 0
    %v154 = vsel %vm146, %v110, 0
    %v157 = vsel %vm146, %v111, 0
    %v160 = vsel %vm146, %v112, 0
    %v163 = vsel %vm146, %v113, 0
    %v166 = vsel %vm146, %v114, 0
    %v169 = vsel %vm146, %v115, 0
    %vm171 = vcmask 1043456
    %v173 = vsel %vm171, %v132, 0
    %v176 = vsel %vm171, %v133, 0
    %v179 = vsel %vm171, %v134, 0
    %v182 = vsel %vm171, %v135, 0
    %184 = vmatpush.msra.mxu0 0.0
    %185 = vmatpush.msra.mxu0 0.0
    %186 = vmatpush.msra.mxu0 0.0
    %187 = vmatpush.msra.mxu0 0.0
    %188 = vmatpush.msra.mxu0 0.0
    %189 = vmatpush.msra.mxu0 0.0
    %190 = vmatpush.msra.mxu0 0.0
    %191 = vmatpush.msra.mxu0 0.0
    %192 = vmatpush.msra.mxu0 0.0
    %193 = vmatpush.msra.mxu0 0.0
    %194 = vmatpush.msra.mxu0 0.0
    %195 = vmatpush.msra.mxu0 %v173
    %196 = vmatpush.msra.mxu0 %v128
    %197 = vmatpush.msra.mxu0 %v124
    %198 = vmatpush.msra.mxu0 %v120
    %199 = vmatpush.msra.mxu0 %v116
    %200 = vmatmul.f32.gmra.mxu0 %v148
    %v201 = vpop.f32.mrf.mxu0
    %v202 = vadd.f32 %v138, %v201
    %203 = vmatmul.f32.gmra.mxu0 %v151
    %v204 = vpop.f32.mrf.mxu0
    %v205 = vadd.f32 %v138, %v204
    %206 = vmatmul.f32.gmra.mxu0 %v154
    %v207 = vpop.f32.mrf.mxu0
    %v208 = vadd.f32 %v138, %v207
    %209 = vmatmul.f32.gmra.mxu0 %v157
    %v210 = vpop.f32.mrf.mxu0
    %v211 = vadd.f32 %v138, %v210
    %212 = vmatmul.f32.gmra.mxu0 %v160
    %v213 = vpop.f32.mrf.mxu0
    %v214 = vadd.f32 %v138, %v213
    %215 = vmatmul.f32.gmra.mxu0 %v163
    %v216 = vpop.f32.mrf.mxu0
    %v217 = vadd.f32 %v138, %v216
    %218 = vmatmul.f32.gmra.mxu0 %v166
    %v219 = vpop.f32.mrf.mxu0
    %v220 = vadd.f32 %v138, %v219
    %221 = vmatmul.f32.gmra.mxu0 %v169
    %v222 = vpop.f32.mrf.mxu0
    %v223 = vadd.f32 %v138, %v222
    %224 = vdwg.mxu0
    %225 = vmatpush.msra.mxu0 0.0
    %226 = vmatpush.msra.mxu0 0.0
    %227 = vmatpush.msra.mxu0 0.0
    %228 = vmatpush.msra.mxu0 0.0
    %229 = vmatpush.msra.mxu0 0.0
    %230 = vmatpush.msra.mxu0 0.0
    %231 = vmatpush.msra.mxu0 0.0
    %232 = vmatpush.msra.mxu0 0.0
    %233 = vmatpush.msra.mxu0 0.0
    %234 = vmatpush.msra.mxu0 0.0
    %235 = vmatpush.msra.mxu0 0.0
    %236 = vmatpush.msra.mxu0 %v176
    %237 = vmatpush.msra.mxu0 %v129
    %238 = vmatpush.msra.mxu0 %v125
    %239 = vmatpush.msra.mxu0 %v121
    %240 = vmatpush.msra.mxu0 %v117
    %241 = vmatmul.f32.gmra.mxu0 %v148
    %v242 = vpop.f32.mrf.mxu0
    %v243 = vadd.f32 %v139, %v242
    %244 = vmatmul.f32.gmra.mxu0 %v151
    %v245 = vpop.f32.mrf.mxu0
    %v246 = vadd.f32 %v139, %v245
    %247 = vmatmul.f32.gmra.mxu0 %v154
    %v248 = vpop.f32.mrf.mxu0
    %v249 = vadd.f32 %v139, %v248
    %250 = vmatmul.f32.gmra.mxu0 %v157
    %v251 = vpop.f32.mrf.mxu0
    %v252 = vadd.f32 %v139, %v251
    %253 = vmatmul.f32.gmra.mxu0 %v160
    %v254 = vpop.f32.mrf.mxu0
    %v255 = vadd.f32 %v139, %v254
    %256 = vmatmul.f32.gmra.mxu0 %v163
    %v257 = vpop.f32.mrf.mxu0
    %v258 = vadd.f32 %v139, %v257
    %259 = vmatmul.f32.gmra.mxu0 %v166
    %v260 = vpop.f32.mrf.mxu0
    %v261 = vadd.f32 %v139, %v260
    %262 = vmatmul.f32.gmra.mxu0 %v169
    %v263 = vpop.f32.mrf.mxu0
    %v264 = vadd.f32 %v139, %v263
    %265 = vdwg.mxu0
    %266 = vmatpush.msra.mxu0 0.0
    %267 = vmatpush.msra.mxu0 0.0
    %268 = vmatpush.msra.mxu0 0.0
    %269 = vmatpush.msra.mxu0 0.0
    %270 = vmatpush.msra.mxu0 0.0
    %271 = vmatpush.msra.mxu0 0.0
    %272 = vmatpush.msra.mxu0 0.0
    %273 = vmatpush.msra.mxu0 0.0
    %274 = vmatpush.msra.mxu0 0.0
    %275 = vmatpush.msra.mxu0 0.0
    %276 = vmatpush.msra.mxu0 0.0
    %277 = vmatpush.msra.mxu0 %v179
    %278 = vmatpush.msra.mxu0 %v130
    %279 = vmatpush.msra.mxu0 %v126
    %280 = vmatpush.msra.mxu0 %v122
    %281 = vmatpush.msra.mxu0 %v118
    %282 = vmatmul.f32.gmra.mxu0 %v148
    %v283 = vpop.f32.mrf.mxu0
    %v284 = vadd.f32 %v140, %v283
    %285 = vmatmul.f32.gmra.mxu0 %v151
    %v286 = vpop.f32.mrf.mxu0
    %v287 = vadd.f32 %v140, %v286
    %288 = vmatmul.f32.gmra.mxu0 %v154
    %v289 = vpop.f32.mrf.mxu0
    %v290 = vadd.f32 %v140, %v289
    %291 = vmatmul.f32.gmra.mxu0 %v157
    %v292 = vpop.f32.mrf.mxu0
    %v293 = vadd.f32 %v140, %v292
    %294 = vmatmul.f32.gmra.mxu0 %v160
    %v295 = vpop.f32.mrf.mxu0
    %v296 = vadd.f32 %v140, %v295
    %297 = vmatmul.f32.gmra.mxu0 %v163
    %v298 = vpop.f32.mrf.mxu0
    %v299 = vadd.f32 %v140, %v298
    %300 = vmatmul.f32.gmra.mxu0 %v166
    %v301 = vpop.f32.mrf.mxu0
    %v302 = vadd.f32 %v140, %v301
    %303 = vmatmul.f32.gmra.mxu0 %v169
    %v304 = vpop.f32.mrf.mxu0
    %v305 = vadd.f32 %v140, %v304
    %306 = vdwg.mxu0
    %307 = vmatpush.msra.mxu0 0.0
    %308 = vmatpush.msra.mxu0 0.0
    %309 = vmatpush.msra.mxu0 0.0
    %310 = vmatpush.msra.mxu0 0.0
    %311 = vmatpush.msra.mxu0 0.0
    %312 = vmatpush.msra.mxu0 0.0
    %313 = vmatpush.msra.mxu0 0.0
    %314 = vmatpush.msra.mxu0 0.0
    %315 = vmatpush.msra.mxu0 0.0
    %316 = vmatpush.msra.mxu0 0.0
    %317 = vmatpush.msra.mxu0 0.0
    %318 = vmatpush.msra.mxu0 %v182
    %319 = vmatpush.msra.mxu0 %v131
    %320 = vmatpush.msra.mxu0 %v127
    %321 = vmatpush.msra.mxu0 %v123
    %322 = vmatpush.msra.mxu0 %v119
    %323 = vmatmul.f32.gmra.mxu0 %v148
    %v324 = vpop.f32.mrf.mxu0
    %v325 = vadd.f32 %v141, %v324
    %326 = vmatmul.f32.gmra.mxu0 %v151
    %v327 = vpop.f32.mrf.mxu0
    %v328 = vadd.f32 %v141, %v327
    %329 = vmatmul.f32.gmra.mxu0 %v154
    %v330 = vpop.f32.mrf.mxu0
    %v331 = vadd.f32 %v141, %v330
    %332 = vmatmul.f32.gmra.mxu0 %v157
    %v333 = vpop.f32.mrf.mxu0
    %v334 = vadd.f32 %v141, %v333
    %335 = vmatmul.f32.gmra.mxu0 %v160
    %v336 = vpop.f32.mrf.mxu0
    %v337 = vadd.f32 %v141, %v336
    %338 = vmatmul.f32.gmra.mxu0 %v163
    %v339 = vpop.f32.mrf.mxu0
    %v340 = vadd.f32 %v141, %v339
    %341 = vmatmul.f32.gmra.mxu0 %v166
    %v342 = vpop.f32.mrf.mxu0
    %v343 = vadd.f32 %v141, %v342
    %344 = vmatmul.f32.gmra.mxu0 %v169
    %v345 = vpop.f32.mrf.mxu0
    %v346 = vadd.f32 %v141, %v345
    %347 = vdwg.mxu0
    %348 = vst [vmem:[#allocation2] sm:$0xff] %v202
    %349 = vst [vmem:[#allocation2 + $0x8] sm:$0xff] %v243
    %350 = vst [vmem:[#allocation2 + $0x10] sm:$0xff] %v284
    %351 = vst [vmem:[#allocation2 + $0x18] sm:$0xff] %v325
    %352 = vst [vmem:[#allocation2 + $0x20] sm:$0xff] %v205
    %353 = vst [vmem:[#allocation2 + $0x28] sm:$0xff] %v246
    %354 = vst [vmem:[#allocation2 + $0x30] sm:$0xff] %v287
    %355 = vst [vmem:[#allocation2 + $0x38] sm:$0xff] %v328
    %356 = vst [vmem:[#allocation2 + $0x40] sm:$0xff] %v208
    %357 = vst [vmem:[#allocation2 + $0x48] sm:$0xff] %v249
    %358 = vst [vmem:[#allocation2 + $0x50] sm:$0xff] %v290
    %359 = vst [vmem:[#allocation2 + $0x58] sm:$0xff] %v331
    %360 = vst [vmem:[#allocation2 + $0x60] sm:$0xff] %v211
    %361 = vst [vmem:[#allocation2 + $0x68] sm:$0xff] %v252
    %362 = vst [vmem:[#allocation2 + $0x70] sm:$0xff] %v293
    %363 = vst [vmem:[#allocation2 + $0x78] sm:$0xff] %v334
    %364 = vst [vmem:[#allocation2 + $0x80] sm:$0xff] %v214
    %365 = vst [vmem:[#allocation2 + $0x88] sm:$0xff] %v255
    %366 = vst [vmem:[#allocation2 + $0x90] sm:$0xff] %v296
    %367 = vst [vmem:[#allocation2 + $0x98] sm:$0xff] %v337
    %368 = vst [vmem:[#allocation2 + $0xa0] sm:$0xff] %v217
    %369 = vst [vmem:[#allocation2 + $0xa8] sm:$0xff] %v258
    %370 = vst [vmem:[#allocation2 + $0xb0] sm:$0xff] %v299
    %371 = vst [vmem:[#allocation2 + $0xb8] sm:$0xff] %v340
    %372 = vst [vmem:[#allocation2 + $0xc0] sm:$0xff] %v220
    %373 = vst [vmem:[#allocation2 + $0xc8] sm:$0xff] %v261
    %374 = vst [vmem:[#allocation2 + $0xd0] sm:$0xff] %v302
    %375 = vst [vmem:[#allocation2 + $0xd8] sm:$0xff] %v343
    %376 = vst [vmem:[#allocation2 + $0xe0] sm:$0xff] %v223
    %377 = vst [vmem:[#allocation2 + $0xe8] sm:$0xff] %v264
    %378 = vst [vmem:[#allocation2 + $0xf0] sm:$0xff] %v305
    %379 = vst [vmem:[#allocation2 + $0xf8] sm:$0xff] %v346
    %v380 = vld [vmem:[#allocation9] sm:$0xff]
    %v381 = vld [vmem:[#allocation9 + $0x8] sm:$0xff]
    %v382 = vld [vmem:[#allocation9 + $0x10] sm:$0xff]
    %v383 = vld [vmem:[#allocation9 + $0x18] sm:$0xff]
    %v384 = vld [vmem:[#allocation9 + $0x20] sm:$0xff]
    %v385 = vld [vmem:[#allocation9 + $0x28] sm:$0xff]
    %v386 = vld [vmem:[#allocation9 + $0x30] sm:$0xff]
    %v387 = vld [vmem:[#allocation9 + $0x38] sm:$0xff]
    %v388 = vld [vmem:[#allocation9 + $0x40] sm:$0xff]
    %v389 = vld [vmem:[#allocation9 + $0x48] sm:$0xff]
    %v390 = vld [vmem:[#allocation9 + $0x50] sm:$0xff]
    %v391 = vld [vmem:[#allocation9 + $0x58] sm:$0xff]
    %v392 = vld [vmem:[#allocation9 + $0x60] sm:$0xff]
    %v393 = vld [vmem:[#allocation9 + $0x68] sm:$0xff]
    %v394 = vld [vmem:[#allocation9 + $0x70] sm:$0xff]
    %v395 = vld [vmem:[#allocation9 + $0x78] sm:$0xff]
    %v396 = vld [vmem:[#allocation9 + $0x80] sm:$0xf]
    %v397 = vld [vmem:[#allocation9 + $0x88] sm:$0xf]
    %v398 = vld [vmem:[#allocation9 + $0x90] sm:$0xf]
    %v399 = vld [vmem:[#allocation9 + $0x98] sm:$0xf]
    %v400 = vld [vmem:[%s6] sm:$0xf]
    %v402 = vperm.slane %v400, 0
    %v403 = vperm.slane %v400, 1
    %v404 = vperm.slane %v400, 2
    %v405 = vperm.slane %v400, 3
    %v411 = vsel %vm171, %v396, 0
    %v414 = vsel %vm171, %v397, 0
    %v417 = vsel %vm171, %v398, 0
    %v420 = vsel %vm171, %v399, 0
    %422 = vmatpush.msra.mxu0 0.0
    %423 = vmatpush.msra.mxu0 0.0
    %424 = vmatpush.msra.mxu0 0.0
    %425 = vmatpush.msra.mxu0 0.0
    %426 = vmatpush.msra.mxu0 0.0
    %427 = vmatpush.msra.mxu0 0.0
    %428 = vmatpush.msra.mxu0 0.0
    %429 = vmatpush.msra.mxu0 0.0
    %430 = vmatpush.msra.mxu0 0.0
    %431 = vmatpush.msra.mxu0 0.0
    %432 = vmatpush.msra.mxu0 0.0
    %433 = vmatpush.msra.mxu0 %v411
    %434 = vmatpush.msra.mxu0 %v392
    %435 = vmatpush.msra.mxu0 %v388
    %436 = vmatpush.msra.mxu0 %v384
    %437 = vmatpush.msra.mxu0 %v380
    %438 = vmatmul.f32.gmra.mxu0 %v148
    %v439 = vpop.f32.mrf.mxu0
    %v440 = vadd.f32 %v402, %v439
    %441 = vmatmul.f32.gmra.mxu0 %v151
    %v442 = vpop.f32.mrf.mxu0
    %v443 = vadd.f32 %v402, %v442
    %444 = vmatmul.f32.gmra.mxu0 %v154
    %v445 = vpop.f32.mrf.mxu0
    %v446 = vadd.f32 %v402, %v445
    %447 = vmatmul.f32.gmra.mxu0 %v157
    %v448 = vpop.f32.mrf.mxu0
    %v449 = vadd.f32 %v402, %v448
    %450 = vmatmul.f32.gmra.mxu0 %v160
    %v451 = vpop.f32.mrf.mxu0
    %v452 = vadd.f32 %v402, %v451
    %453 = vmatmul.f32.gmra.mxu0 %v163
    %v454 = vpop.f32.mrf.mxu0
    %v455 = vadd.f32 %v402, %v454
    %456 = vmatmul.f32.gmra.mxu0 %v166
    %v457 = vpop.f32.mrf.mxu0
    %v458 = vadd.f32 %v402, %v457
    %459 = vmatmul.f32.gmra.mxu0 %v169
    %v460 = vpop.f32.mrf.mxu0
    %v461 = vadd.f32 %v402, %v460
    %462 = vdwg.mxu0
    %463 = vmatpush.msra.mxu0 0.0
    %464 = vmatpush.msra.mxu0 0.0
    %465 = vmatpush.msra.mxu0 0.0
    %466 = vmatpush.msra.mxu0 0.0
    %467 = vmatpush.msra.mxu0 0.0
    %468 = vmatpush.msra.mxu0 0.0
    %469 = vmatpush.msra.mxu0 0.0
    %470 = vmatpush.msra.mxu0 0.0
    %471 = vmatpush.msra.mxu0 0.0
    %472 = vmatpush.msra.mxu0 0.0
    %473 = vmatpush.msra.mxu0 0.0
    %474 = vmatpush.msra.mxu0 %v414
    %475 = vmatpush.msra.mxu0 %v393
    %476 = vmatpush.msra.mxu0 %v389
    %477 = vmatpush.msra.mxu0 %v385
    %478 = vmatpush.msra.mxu0 %v381
    %479 = vmatmul.f32.gmra.mxu0 %v148
    %v480 = vpop.f32.mrf.mxu0
    %v481 = vadd.f32 %v403, %v480
    %482 = vmatmul.f32.gmra.mxu0 %v151
    %v483 = vpop.f32.mrf.mxu0
    %v484 = vadd.f32 %v403, %v483
    %485 = vmatmul.f32.gmra.mxu0 %v154
    %v486 = vpop.f32.mrf.mxu0
    %v487 = vadd.f32 %v403, %v486
    %488 = vmatmul.f32.gmra.mxu0 %v157
    %v489 = vpop.f32.mrf.mxu0
    %v490 = vadd.f32 %v403, %v489
    %491 = vmatmul.f32.gmra.mxu0 %v160
    %v492 = vpop.f32.mrf.mxu0
    %v493 = vadd.f32 %v403, %v492
    %494 = vmatmul.f32.gmra.mxu0 %v163
    %v495 = vpop.f32.mrf.mxu0
    %v496 = vadd.f32 %v403, %v495
    %497 = vmatmul.f32.gmra.mxu0 %v166
    %v498 = vpop.f32.mrf.mxu0
    %v499 = vadd.f32 %v403, %v498
    %500 = vmatmul.f32.gmra.mxu0 %v169
    %v501 = vpop.f32.mrf.mxu0
    %v502 = vadd.f32 %v403, %v501
    %503 = vdwg.mxu0
    %504 = vmatpush.msra.mxu0 0.0
    %505 = vmatpush.msra.mxu0 0.0
    %506 = vmatpush.msra.mxu0 0.0
    %507 = vmatpush.msra.mxu0 0.0
    %508 = vmatpush.msra.mxu0 0.0
    %509 = vmatpush.msra.mxu0 0.0
    %510 = vmatpush.msra.mxu0 0.0
    %511 = vmatpush.msra.mxu0 0.0
    %512 = vmatpush.msra.mxu0 0.0
    %513 = vmatpush.msra.mxu0 0.0
    %514 = vmatpush.msra.mxu0 0.0
    %515 = vmatpush.msra.mxu0 %v417
    %516 = vmatpush.msra.mxu0 %v394
    %517 = vmatpush.msra.mxu0 %v390
    %518 = vmatpush.msra.mxu0 %v386
    %519 = vmatpush.msra.mxu0 %v382
    %520 = vmatmul.f32.gmra.mxu0 %v148
    %v521 = vpop.f32.mrf.mxu0
    %v522 = vadd.f32 %v404, %v521
    %523 = vmatmul.f32.gmra.mxu0 %v151
    %v524 = vpop.f32.mrf.mxu0
    %v525 = vadd.f32 %v404, %v524
    %526 = vmatmul.f32.gmra.mxu0 %v154
    %v527 = vpop.f32.mrf.mxu0
    %v528 = vadd.f32 %v404, %v527
    %529 = vmatmul.f32.gmra.mxu0 %v157
    %v530 = vpop.f32.mrf.mxu0
    %v531 = vadd.f32 %v404, %v530
    %532 = vmatmul.f32.gmra.mxu0 %v160
    %v533 = vpop.f32.mrf.mxu0
    %v534 = vadd.f32 %v404, %v533
    %535 = vmatmul.f32.gmra.mxu0 %v163
    %v536 = vpop.f32.mrf.mxu0
    %v537 = vadd.f32 %v404, %v536
    %538 = vmatmul.f32.gmra.mxu0 %v166
    %v539 = vpop.f32.mrf.mxu0
    %v540 = vadd.f32 %v404, %v539
    %541 = vmatmul.f32.gmra.mxu0 %v169
    %v542 = vpop.f32.mrf.mxu0
    %v543 = vadd.f32 %v404, %v542
    %544 = vdwg.mxu0
    %545 = vmatpush.msra.mxu0 0.0
    %546 = vmatpush.msra.mxu0 0.0
    %547 = vmatpush.msra.mxu0 0.0
    %548 = vmatpush.msra.mxu0 0.0
    %549 = vmatpush.msra.mxu0 0.0
    %550 = vmatpush.msra.mxu0 0.0
    %551 = vmatpush.msra.mxu0 0.0
    %552 = vmatpush.msra.mxu0 0.0
    %553 = vmatpush.msra.mxu0 0.0
    %554 = vmatpush.msra.mxu0 0.0
    %555 = vmatpush.msra.mxu0 0.0
    %556 = vmatpush.msra.mxu0 %v420
    %557 = vmatpush.msra.mxu0 %v395
    %558 = vmatpush.msra.mxu0 %v391
    %559 = vmatpush.msra.mxu0 %v387
    %560 = vmatpush.msra.mxu0 %v383
    %561 = vmatmul.f32.gmra.mxu0 %v148
    %v562 = vpop.f32.mrf.mxu0
    %v563 = vadd.f32 %v405, %v562
    %564 = vmatmul.f32.gmra.mxu0 %v151
    %v565 = vpop.f32.mrf.mxu0
    %v566 = vadd.f32 %v405, %v565
    %567 = vmatmul.f32.gmra.mxu0 %v154
    %v568 = vpop.f32.mrf.mxu0
    %v569 = vadd.f32 %v405, %v568
    %570 = vmatmul.f32.gmra.mxu0 %v157
    %v571 = vpop.f32.mrf.mxu0
    %v572 = vadd.f32 %v405, %v571
    %573 = vmatmul.f32.gmra.mxu0 %v160
    %v574 = vpop.f32.mrf.mxu0
    %v575 = vadd.f32 %v405, %v574
    %576 = vmatmul.f32.gmra.mxu0 %v163
    %v577 = vpop.f32.mrf.mxu0
    %v578 = vadd.f32 %v405, %v577
    %579 = vmatmul.f32.gmra.mxu0 %v166
    %v580 = vpop.f32.mrf.mxu0
    %v581 = vadd.f32 %v405, %v580
    %582 = vmatmul.f32.gmra.mxu0 %v169
    %v583 = vpop.f32.mrf.mxu0
    %v584 = vadd.f32 %v405, %v583
    %585 = vdwg.mxu0
    %586 = vst [vmem:[#allocation3] sm:$0xff] %v440
    %587 = vst [vmem:[#allocation3 + $0x8] sm:$0xff] %v481
    %588 = vst [vmem:[#allocation3 + $0x10] sm:$0xff] %v522
    %589 = vst [vmem:[#allocation3 + $0x18] sm:$0xff] %v563
    %590 = vst [vmem:[#allocation3 + $0x20] sm:$0xff] %v443
    %591 = vst [vmem:[#allocation3 + $0x28] sm:$0xff] %v484
    %592 = vst [vmem:[#allocation3 + $0x30] sm:$0xff] %v525
    %593 = vst [vmem:[#allocation3 + $0x38] sm:$0xff] %v566
    %594 = vst [vmem:[#allocation3 + $0x40] sm:$0xff] %v446
    %595 = vst [vmem:[#allocation3 + $0x48] sm:$0xff] %v487
    %596 = vst [vmem:[#allocation3 + $0x50] sm:$0xff] %v528
    %597 = vst [vmem:[#allocation3 + $0x58] sm:$0xff] %v569
    %598 = vst [vmem:[#allocation3 + $0x60] sm:$0xff] %v449
    %599 = vst [vmem:[#allocation3 + $0x68] sm:$0xff] %v490
    %600 = vst [vmem:[#allocation3 + $0x70] sm:$0xff] %v531
    %601 = vst [vmem:[#allocation3 + $0x78] sm:$0xff] %v572
    %602 = vst [vmem:[#allocation3 + $0x80] sm:$0xff] %v452
    %603 = vst [vmem:[#allocation3 + $0x88] sm:$0xff] %v493
    %604 = vst [vmem:[#allocation3 + $0x90] sm:$0xff] %v534
    %605 = vst [vmem:[#allocation3 + $0x98] sm:$0xff] %v575
    %606 = vst [vmem:[#allocation3 + $0xa0] sm:$0xff] %v455
    %607 = vst [vmem:[#allocation3 + $0xa8] sm:$0xff] %v496
    %608 = vst [vmem:[#allocation3 + $0xb0] sm:$0xff] %v537
    %609 = vst [vmem:[#allocation3 + $0xb8] sm:$0xff] %v578
    %610 = vst [vmem:[#allocation3 + $0xc0] sm:$0xff] %v458
    %611 = vst [vmem:[#allocation3 + $0xc8] sm:$0xff] %v499
    %612 = vst [vmem:[#allocation3 + $0xd0] sm:$0xff] %v540
    %613 = vst [vmem:[#allocation3 + $0xd8] sm:$0xff] %v581
    %614 = vst [vmem:[#allocation3 + $0xe0] sm:$0xff] %v461
    %615 = vst [vmem:[#allocation3 + $0xe8] sm:$0xff] %v502
    %616 = vst [vmem:[#allocation3 + $0xf0] sm:$0xff] %v543
    %617 = vst [vmem:[#allocation3 + $0xf8] sm:$0xff] %v584
    %v618 = vld [vmem:[#allocation12] sm:$0xff]
    %v619 = vld [vmem:[#allocation12 + $0x8] sm:$0xff]
    %v620 = vld [vmem:[#allocation12 + $0x10] sm:$0xff]
    %v621 = vld [vmem:[#allocation12 + $0x18] sm:$0xff]
    %v622 = vld [vmem:[#allocation12 + $0x20] sm:$0xff]
    %v623 = vld [vmem:[#allocation12 + $0x28] sm:$0xff]
    %v624 = vld [vmem:[#allocation12 + $0x30] sm:$0xff]
    %v625 = vld [vmem:[#allocation12 + $0x38] sm:$0xff]
    %v626 = vld [vmem:[#allocation12 + $0x40] sm:$0xff]
    %v627 = vld [vmem:[#allocation12 + $0x48] sm:$0xff]
    %v628 = vld [vmem:[#allocation12 + $0x50] sm:$0xff]
    %v629 = vld [vmem:[#allocation12 + $0x58] sm:$0xff]
    %v630 = vld [vmem:[#allocation12 + $0x60] sm:$0xff]
    %v631 = vld [vmem:[#allocation12 + $0x68] sm:$0xff]
    %v632 = vld [vmem:[#allocation12 + $0x70] sm:$0xff]
    %v633 = vld [vmem:[#allocation12 + $0x78] sm:$0xff]
    %s634 = smul.u32 0, 4
    %s635 = smul.addr %s634, 8
    %s636 = scalar_lea.vmem [#allocation2], %s635
    %v637 = vld [vmem:[%s636] sm:$0xff]
    %v638 = vld [vmem:[%s636 + $0x8] sm:$0xff]
    %v639 = vld [vmem:[%s636 + $0x10] sm:$0xff]
    %v640 = vld [vmem:[%s636 + $0x18] sm:$0xff]
    %s641 = smul.addr %s634, 8
    %s642 = scalar_lea.vmem [#allocation3], %s641
    %v643 = vld [vmem:[%s642] sm:$0xff]
    %v644 = vld [vmem:[%s642 + $0x8] sm:$0xff]
    %v645 = vld [vmem:[%s642 + $0x10] sm:$0xff]
    %v646 = vld [vmem:[%s642 + $0x18] sm:$0xff]
    %v647 = vld [vmem:[#allocation7] sm:$0xff]
    %v648 = vld [vmem:[#allocation7 + $0x8] sm:$0xff]
    %v649 = vld [vmem:[#allocation7 + $0x10] sm:$0xff]
    %v650 = vld [vmem:[#allocation7 + $0x18] sm:$0xff]
    %v651 = vld [vmem:[#allocation7 + $0x20] sm:$0xff]
    %v652 = vld [vmem:[#allocation7 + $0x28] sm:$0xff]
    %v653 = vld [vmem:[#allocation7 + $0x30] sm:$0xff]
    %v654 = vld [vmem:[#allocation7 + $0x38] sm:$0xff]
    %v655 = vld [vmem:[#allocation7 + $0x40] sm:$0xff]
    %v656 = vld [vmem:[#allocation7 + $0x48] sm:$0xff]
    %v657 = vld [vmem:[#allocation7 + $0x50] sm:$0xff]
    %v658 = vld [vmem:[#allocation7 + $0x58] sm:$0xff]
    %v659 = vld [vmem:[#allocation7 + $0x60] sm:$0xff]
    %v660 = vld [vmem:[#allocation7 + $0x68] sm:$0xff]
    %v661 = vld [vmem:[#allocation7 + $0x70] sm:$0xff]
    %v662 = vld [vmem:[#allocation7 + $0x78] sm:$0xff]
    %v663 = vld [vmem:[#allocation7 + $0x80] sm:$0xff]
    %v664 = vld [vmem:[#allocation7 + $0x88] sm:$0xff]
    %v665 = vld [vmem:[#allocation7 + $0x90] sm:$0xff]
    %v666 = vld [vmem:[#allocation7 + $0x98] sm:$0xff]
    %v667 = vld [vmem:[#allocation7 + $0xa0] sm:$0xff]
    %v668 = vld [vmem:[#allocation7 + $0xa8] sm:$0xff]
    %v669 = vld [vmem:[#allocation7 + $0xb0] sm:$0xff]
    %v670 = vld [vmem:[#allocation7 + $0xb8] sm:$0xff]
    %v671 = vld [vmem:[#allocation7 + $0xc0] sm:$0xff]
    %v672 = vld [vmem:[#allocation7 + $0xc8] sm:$0xff]
    %v673 = vld [vmem:[#allocation7 + $0xd0] sm:$0xff]
    %v674 = vld [vmem:[#allocation7 + $0xd8] sm:$0xff]
    %v675 = vld [vmem:[#allocation7 + $0xe0] sm:$0xff]
    %v676 = vld [vmem:[#allocation7 + $0xe8] sm:$0xff]
    %v677 = vld [vmem:[#allocation7 + $0xf0] sm:$0xff]
    %v678 = vld [vmem:[#allocation7 + $0xf8] sm:$0xff]
    %v679 = vld [vmem:[#allocation7 + $0x100] sm:$0xff]
    %v680 = vld [vmem:[#allocation7 + $0x108] sm:$0xff]
    %v681 = vld [vmem:[#allocation7 + $0x110] sm:$0xff]
    %v682 = vld [vmem:[#allocation7 + $0x118] sm:$0xff]
    %v683 = vld [vmem:[#allocation7 + $0x120] sm:$0xff]
    %v684 = vld [vmem:[#allocation7 + $0x128] sm:$0xff]
    %v685 = vld [vmem:[#allocation7 + $0x130] sm:$0xff]
    %v686 = vld [vmem:[#allocation7 + $0x138] sm:$0xff]
    %v687 = vld [vmem:[#allocation7 + $0x140] sm:$0xff]
    %v688 = vld [vmem:[#allocation7 + $0x148] sm:$0xff]
    %v689 = vld [vmem:[#allocation7 + $0x150] sm:$0xff]
    %v690 = vld [vmem:[#allocation7 + $0x158] sm:$0xff]
    %v691 = vld [vmem:[#allocation7 + $0x160] sm:$0xff]
    %v692 = vld [vmem:[#allocation7 + $0x168] sm:$0xff]
    %v693 = vld [vmem:[#allocation7 + $0x170] sm:$0xff]
    %v694 = vld [vmem:[#allocation7 + $0x178] sm:$0xff]
    %v695 = vld [vmem:[#allocation7 + $0x180] sm:$0xff]
    %v696 = vld [vmem:[#allocation7 + $0x188] sm:$0xff]
    %v697 = vld [vmem:[#allocation7 + $0x190] sm:$0xff]
    %v698 = vld [vmem:[#allocation7 + $0x198] sm:$0xff]
    %v699 = vld [vmem:[#allocation7 + $0x1a0] sm:$0xff]
    %v700 = vld [vmem:[#allocation7 + $0x1a8] sm:$0xff]
    %v701 = vld [vmem:[#allocation7 + $0x1b0] sm:$0xff]
    %v702 = vld [vmem:[#allocation7 + $0x1b8] sm:$0xff]
    %v703 = vld [vmem:[#allocation7 + $0x1c0] sm:$0xff]
    %v704 = vld [vmem:[#allocation7 + $0x1c8] sm:$0xff]
    %v705 = vld [vmem:[#allocation7 + $0x1d0] sm:$0xff]
    %v706 = vld [vmem:[#allocation7 + $0x1d8] sm:$0xff]
    %v707 = vld [vmem:[#allocation7 + $0x1e0] sm:$0xff]
    %v708 = vld [vmem:[#allocation7 + $0x1e8] sm:$0xff]
    %v709 = vld [vmem:[#allocation7 + $0x1f0] sm:$0xff]
    %v710 = vld [vmem:[#allocation7 + $0x1f8] sm:$0xff]
    %711 = vmatpush.msra.mxu0 %v707
    %712 = vmatpush.msra.mxu0 %v703
    %713 = vmatpush.msra.mxu0 %v699
    %714 = vmatpush.msra.mxu0 %v695
    %715 = vmatpush.msra.mxu0 %v691
    %716 = vmatpush.msra.mxu0 %v687
    %717 = vmatpush.msra.mxu0 %v683
    %718 = vmatpush.msra.mxu0 %v679
    %719 = vmatpush.msra.mxu0 %v675
    %720 = vmatpush.msra.mxu0 %v671
    %721 = vmatpush.msra.mxu0 %v667
    %722 = vmatpush.msra.mxu0 %v663
    %723 = vmatpush.msra.mxu0 %v659
    %724 = vmatpush.msra.mxu0 %v655
    %725 = vmatpush.msra.mxu0 %v651
    %726 = vmatpush.msra.mxu0 %v647
    %727 = vmatmul.f32.gmra.mxu0 0.0
    %v728 = vpop.f32.mrf.mxu0
    %v729 = vadd.f32 0.0, %v728
    %730 = vdwg.mxu0
    %731 = vmatpush.msra.mxu0 %v708
    %732 = vmatpush.msra.mxu0 %v704
    %733 = vmatpush.msra.mxu0 %v700
    %734 = vmatpush.msra.mxu0 %v696
    %735 = vmatpush.msra.mxu0 %v692
    %736 = vmatpush.msra.mxu0 %v688
    %737 = vmatpush.msra.mxu0 %v684
    %738 = vmatpush.msra.mxu0 %v680
    %739 = vmatpush.msra.mxu0 %v676
    %740 = vmatpush.msra.mxu0 %v672
    %741 = vmatpush.msra.mxu0 %v668
    %742 = vmatpush.msra.mxu0 %v664
    %743 = vmatpush.msra.mxu0 %v660
    %744 = vmatpush.msra.mxu0 %v656
    %745 = vmatpush.msra.mxu0 %v652
    %746 = vmatpush.msra.mxu0 %v648
    %747 = vmatmul.f32.gmra.mxu0 0.0
    %v748 = vpop.f32.mrf.mxu0
    %v749 = vadd.f32 0.0, %v748
    %750 = vdwg.mxu0
    %751 = vmatpush.msra.mxu0 %v709
    %752 = vmatpush.msra.mxu0 %v705
    %753 = vmatpush.msra.mxu0 %v701
    %754 = vmatpush.msra.mxu0 %v697
    %755 = vmatpush.msra.mxu0 %v693
    %756 = vmatpush.msra.mxu0 %v689
    %757 = vmatpush.msra.mxu0 %v685
    %758 = vmatpush.msra.mxu0 %v681
    %759 = vmatpush.msra.mxu0 %v677
    %760 = vmatpush.msra.mxu0 %v673
    %761 = vmatpush.msra.mxu0 %v669
    %762 = vmatpush.msra.mxu0 %v665
    %763 = vmatpush.msra.mxu0 %v661
    %764 = vmatpush.msra.mxu0 %v657
    %765 = vmatpush.msra.mxu0 %v653
    %766 = vmatpush.msra.mxu0 %v649
    %767 = vmatmul.f32.gmra.mxu0 0.0
    %v768 = vpop.f32.mrf.mxu0
    %v769 = vadd.f32 0.0, %v768
    %770 = vdwg.mxu0
    %771 = vmatpush.msra.mxu0 %v710
    %772 = vmatpush.msra.mxu0 %v706
    %773 = vmatpush.msra.mxu0 %v702
    %774 = vmatpush.msra.mxu0 %v698
    %775 = vmatpush.msra.mxu0 %v694
    %776 = vmatpush.msra.mxu0 %v690
    %777 = vmatpush.msra.mxu0 %v686
    %778 = vmatpush.msra.mxu0 %v682
    %779 = vmatpush.msra.mxu0 %v678
    %780 = vmatpush.msra.mxu0 %v674
    %781 = vmatpush.msra.mxu0 %v670
    %782 = vmatpush.msra.mxu0 %v666
    %783 = vmatpush.msra.mxu0 %v662
    %784 = vmatpush.msra.mxu0 %v658
    %785 = vmatpush.msra.mxu0 %v654
    %786 = vmatpush.msra.mxu0 %v650
    %787 = vmatmul.f32.gmra.mxu0 0.0
    %v788 = vpop.f32.mrf.mxu0
    %v789 = vadd.f32 0.0, %v788
    %790 = vdwg.mxu0
    %v791 = vadd.f32 %v637, %v729
    %v792 = vadd.f32 %v638, %v749
    %v793 = vadd.f32 %v639, %v769
    %v794 = vadd.f32 %v640, %v789
    %v795 = vxor.u32 %v791, 2147483648
    %v796 = vmul.f32 %v795, 1.442695
    %v797 = vpow.pop %v796
    %v798 = vadd.f32 %v797, 1.0
    %v799 = vrcp.pop %v798
    %v800 = vmul.f32 %v798, %v799
    %v801 = vsub.f32 1.0, %v800
    %v802 = vmul.f32 %v799, %v801
    %v803 = vadd.f32 %v799, %v802
    %vm804 = vweird.f32 %v798
    %vm805 = vweird.f32 %v799
    %vm806 = vmor %vm804, %vm805
    %v807 = vsel %vm806, %v799, %v803
    %v808 = vand.u32 2147483647, %v798
    %vm809 = vcmp.eq.f32.partialorder %v808, 8.507059e+37
    %v810 = vand.u32 %v798, 2147483648
    %v811 = vor.u32 1.1754944e-38, %v810
    %v812 = vsel %vm809, %v811, %v807
    %v813 = vmul.f32 1.0, %v812
    %v814 = vxor.u32 %v792, 2147483648
    %v815 = vmul.f32 %v814, 1.442695
    %v816 = vpow.pop %v815
    %v817 = vadd.f32 %v816, 1.0
    %v818 = vrcp.pop %v817
    %v819 = vmul.f32 %v817, %v818
    %v820 = vsub.f32 1.0, %v819
    %v821 = vmul.f32 %v818, %v820
    %v822 = vadd.f32 %v818, %v821
    %vm823 = vweird.f32 %v817
    %vm824 = vweird.f32 %v818
    %vm825 = vmor %vm823, %vm824
    %v826 = vsel %vm825, %v818, %v822
    %v827 = vand.u32 2147483647, %v817
    %vm828 = vcmp.eq.f32.partialorder %v827, 8.507059e+37
    %v829 = vand.u32 %v817, 2147483648
    %v830 = vor.u32 1.1754944e-38, %v829
    %v831 = vsel %vm828, %v830, %v826
    %v832 = vmul.f32 1.0, %v831
    %v833 = vtanh.pop %v793
    %v834 = vxor.u32 %v794, 2147483648
    %v835 = vmul.f32 %v834, 1.442695
    %v836 = vpow.pop %v835
    %v837 = vadd.f32 %v836, 1.0
    %v838 = vrcp.pop %v837
    %v839 = vmul.f32 %v837, %v838
    %v840 = vsub.f32 1.0, %v839
    %v841 = vmul.f32 %v838, %v840
    %v842 = vadd.f32 %v838, %v841
    %vm843 = vweird.f32 %v837
    %vm844 = vweird.f32 %v838
    %vm845 = vmor %vm843, %vm844
    %v846 = vsel %vm845, %v838, %v842
    %v847 = vand.u32 2147483647, %v837
    %vm848 = vcmp.eq.f32.partialorder %v847, 8.507059e+37
    %v849 = vand.u32 %v837, 2147483648
    %v850 = vor.u32 1.1754944e-38, %v849
    %v851 = vsel %vm848, %v850, %v846
    %v852 = vmul.f32 1.0, %v851
    %v853 = vmul.f32 %v832, 0.0
    %v854 = vmul.f32 %v813, %v833
    %v855 = vadd.f32 %v853, %v854
    %856 = vmatpush.msra.mxu0 %v633
    %857 = vmatpush.msra.mxu0 %v632
    %858 = vmatpush.msra.mxu0 %v631
    %859 = vmatpush.msra.mxu0 %v630
    %860 = vmatpush.msra.mxu0 %v629
    %861 = vmatpush.msra.mxu0 %v628
    %862 = vmatpush.msra.mxu0 %v627
    %863 = vmatpush.msra.mxu0 %v626
    %864 = vmatpush.msra.mxu0 %v625
    %865 = vmatpush.msra.mxu0 %v624
    %866 = vmatpush.msra.mxu0 %v623
    %867 = vmatpush.msra.mxu0 %v622
    %868 = vmatpush.msra.mxu0 %v621
    %869 = vmatpush.msra.mxu0 %v620
    %870 = vmatpush.msra.mxu0 %v619
    %871 = vmatpush.msra.mxu0 %v618
    %872 = vmatmul.f32.gmra.mxu0 %v855
    %v873 = vpop.f32.mrf.mxu0
    %v874 = vadd.f32 0.0, %v873
    %875 = vdwg.mxu0
    %v876 = vtanh.pop %v874
    %v877 = vmul.f32 %v852, %v876
    %v878 = vld [vmem:[#allocation10] sm:$0xff]
    %v879 = vld [vmem:[#allocation10 + $0x8] sm:$0xff]
    %v880 = vld [vmem:[#allocation10 + $0x10] sm:$0xff]
    %v881 = vld [vmem:[#allocation10 + $0x18] sm:$0xff]
    %v882 = vld [vmem:[#allocation10 + $0x20] sm:$0xff]
    %v883 = vld [vmem:[#allocation10 + $0x28] sm:$0xff]
    %v884 = vld [vmem:[#allocation10 + $0x30] sm:$0xff]
    %v885 = vld [vmem:[#allocation10 + $0x38] sm:$0xff]
    %v886 = vld [vmem:[#allocation10 + $0x40] sm:$0xff]
    %v887 = vld [vmem:[#allocation10 + $0x48] sm:$0xff]
    %v888 = vld [vmem:[#allocation10 + $0x50] sm:$0xff]
    %v889 = vld [vmem:[#allocation10 + $0x58] sm:$0xff]
    %v890 = vld [vmem:[#allocation10 + $0x60] sm:$0xff]
    %v891 = vld [vmem:[#allocation10 + $0x68] sm:$0xff]
    %v892 = vld [vmem:[#allocation10 + $0x70] sm:$0xff]
    %v893 = vld [vmem:[#allocation10 + $0x78] sm:$0xff]
    %v894 = vld [vmem:[#allocation10 + $0x80] sm:$0xff]
    %v895 = vld [vmem:[#allocation10 + $0x88] sm:$0xff]
    %v896 = vld [vmem:[#allocation10 + $0x90] sm:$0xff]
    %v897 = vld [vmem:[#allocation10 + $0x98] sm:$0xff]
    %v898 = vld [vmem:[#allocation10 + $0xa0] sm:$0xff]
    %v899 = vld [vmem:[#allocation10 + $0xa8] sm:$0xff]
    %v900 = vld [vmem:[#allocation10 + $0xb0] sm:$0xff]
    %v901 = vld [vmem:[#allocation10 + $0xb8] sm:$0xff]
    %v902 = vld [vmem:[#allocation10 + $0xc0] sm:$0xff]
    %v903 = vld [vmem:[#allocation10 + $0xc8] sm:$0xff]
    %v904 = vld [vmem:[#allocation10 + $0xd0] sm:$0xff]
    %v905 = vld [vmem:[#allocation10 + $0xd8] sm:$0xff]
    %v906 = vld [vmem:[#allocation10 + $0xe0] sm:$0xff]
    %v907 = vld [vmem:[#allocation10 + $0xe8] sm:$0xff]
    %v908 = vld [vmem:[#allocation10 + $0xf0] sm:$0xff]
    %v909 = vld [vmem:[#allocation10 + $0xf8] sm:$0xff]
    %v910 = vld [vmem:[#allocation10 + $0x100] sm:$0xff]
    %v911 = vld [vmem:[#allocation10 + $0x108] sm:$0xff]
    %v912 = vld [vmem:[#allocation10 + $0x110] sm:$0xff]
    %v913 = vld [vmem:[#allocation10 + $0x118] sm:$0xff]
    %v914 = vld [vmem:[#allocation10 + $0x120] sm:$0xff]
    %v915 = vld [vmem:[#allocation10 + $0x128] sm:$0xff]
    %v916 = vld [vmem:[#allocation10 + $0x130] sm:$0xff]
    %v917 = vld [vmem:[#allocation10 + $0x138] sm:$0xff]
    %v918 = vld [vmem:[#allocation10 + $0x140] sm:$0xff]
    %v919 = vld [vmem:[#allocation10 + $0x148] sm:$0xff]
    %v920 = vld [vmem:[#allocation10 + $0x150] sm:$0xff]
    %v921 = vld [vmem:[#allocation10 + $0x158] sm:$0xff]
    %v922 = vld [vmem:[#allocation10 + $0x160] sm:$0xff]
    %v923 = vld [vmem:[#allocation10 + $0x168] sm:$0xff]
    %v924 = vld [vmem:[#allocation10 + $0x170] sm:$0xff]
    %v925 = vld [vmem:[#allocation10 + $0x178] sm:$0xff]
    %v926 = vld [vmem:[#allocation10 + $0x180] sm:$0xff]
    %v927 = vld [vmem:[#allocation10 + $0x188] sm:$0xff]
    %v928 = vld [vmem:[#allocation10 + $0x190] sm:$0xff]
    %v929 = vld [vmem:[#allocation10 + $0x198] sm:$0xff]
    %v930 = vld [vmem:[#allocation10 + $0x1a0] sm:$0xff]
    %v931 = vld [vmem:[#allocation10 + $0x1a8] sm:$0xff]
    %v932 = vld [vmem:[#allocation10 + $0x1b0] sm:$0xff]
    %v933 = vld [vmem:[#allocation10 + $0x1b8] sm:$0xff]
    %v934 = vld [vmem:[#allocation10 + $0x1c0] sm:$0xff]
    %v935 = vld [vmem:[#allocation10 + $0x1c8] sm:$0xff]
    %v936 = vld [vmem:[#allocation10 + $0x1d0] sm:$0xff]
    %v937 = vld [vmem:[#allocation10 + $0x1d8] sm:$0xff]
    %v938 = vld [vmem:[#allocation10 + $0x1e0] sm:$0xff]
    %v939 = vld [vmem:[#allocation10 + $0x1e8] sm:$0xff]
    %v940 = vld [vmem:[#allocation10 + $0x1f0] sm:$0xff]
    %v941 = vld [vmem:[#allocation10 + $0x1f8] sm:$0xff]
    %942 = vmatpush.msra.mxu0 %v938
    %943 = vmatpush.msra.mxu0 %v934
    %944 = vmatpush.msra.mxu0 %v930
    %945 = vmatpush.msra.mxu0 %v926
    %946 = vmatpush.msra.mxu0 %v922
    %947 = vmatpush.msra.mxu0 %v918
    %948 = vmatpush.msra.mxu0 %v914
    %949 = vmatpush.msra.mxu0 %v910
    %950 = vmatpush.msra.mxu0 %v906
    %951 = vmatpush.msra.mxu0 %v902
    %952 = vmatpush.msra.mxu0 %v898
    %953 = vmatpush.msra.mxu0 %v894
    %954 = vmatpush.msra.mxu0 %v890
    %955 = vmatpush.msra.mxu0 %v886
    %956 = vmatpush.msra.mxu0 %v882
    %957 = vmatpush.msra.mxu0 %v878
    %958 = vmatmul.f32.gmra.mxu0 %v877
    %v959 = vpop.f32.mrf.mxu0
    %v960 = vadd.f32 0.0, %v959
    %961 = vdwg.mxu0
    %962 = vmatpush.msra.mxu0 %v939
    %963 = vmatpush.msra.mxu0 %v935
    %964 = vmatpush.msra.mxu0 %v931
    %965 = vmatpush.msra.mxu0 %v927
    %966 = vmatpush.msra.mxu0 %v923
    %967 = vmatpush.msra.mxu0 %v919
    %968 = vmatpush.msra.mxu0 %v915
    %969 = vmatpush.msra.mxu0 %v911
    %970 = vmatpush.msra.mxu0 %v907
    %971 = vmatpush.msra.mxu0 %v903
    %972 = vmatpush.msra.mxu0 %v899
    %973 = vmatpush.msra.mxu0 %v895
    %974 = vmatpush.msra.mxu0 %v891
    %975 = vmatpush.msra.mxu0 %v887
    %976 = vmatpush.msra.mxu0 %v883
    %977 = vmatpush.msra.mxu0 %v879
    %978 = vmatmul.f32.gmra.mxu0 %v877
    %v979 = vpop.f32.mrf.mxu0
    %v980 = vadd.f32 0.0, %v979
    %981 = vdwg.mxu0
    %982 = vmatpush.msra.mxu0 %v940
    %983 = vmatpush.msra.mxu0 %v936
    %984 = vmatpush.msra.mxu0 %v932
    %985 = vmatpush.msra.mxu0 %v928
    %986 = vmatpush.msra.mxu0 %v924
    %987 = vmatpush.msra.mxu0 %v920
    %988 = vmatpush.msra.mxu0 %v916
    %989 = vmatpush.msra.mxu0 %v912
    %990 = vmatpush.msra.mxu0 %v908
    %991 = vmatpush.msra.mxu0 %v904
    %992 = vmatpush.msra.mxu0 %v900
    %993 = vmatpush.msra.mxu0 %v896
    %994 = vmatpush.msra.mxu0 %v892
    %995 = vmatpush.msra.mxu0 %v888
    %996 = vmatpush.msra.mxu0 %v884
    %997 = vmatpush.msra.mxu0 %v880
    %998 = vmatmul.f32.gmra.mxu0 %v877
    %v999 = vpop.f32.mrf.mxu0
    %v1000 = vadd.f32 0.0, %v999
    %1001 = vdwg.mxu0
    %1002 = vmatpush.msra.mxu0 %v941
    %1003 = vmatpush.msra.mxu0 %v937
    %1004 = vmatpush.msra.mxu0 %v933
    %1005 = vmatpush.msra.mxu0 %v929
    %1006 = vmatpush.msra.mxu0 %v925
    %1007 = vmatpush.msra.mxu0 %v921
    %1008 = vmatpush.msra.mxu0 %v917
    %1009 = vmatpush.msra.mxu0 %v913
    %1010 = vmatpush.msra.mxu0 %v909
    %1011 = vmatpush.msra.mxu0 %v905
    %1012 = vmatpush.msra.mxu0 %v901
    %1013 = vmatpush.msra.mxu0 %v897
    %1014 = vmatpush.msra.mxu0 %v893
    %1015 = vmatpush.msra.mxu0 %v889
    %1016 = vmatpush.msra.mxu0 %v885
    %1017 = vmatpush.msra.mxu0 %v881
    %1018 = vmatmul.f32.gmra.mxu0 %v877
    %v1019 = vpop.f32.mrf.mxu0
    %v1020 = vadd.f32 0.0, %v1019
    %1021 = vdwg.mxu0
    %v1022 = vadd.f32 %v643, %v960
    %v1023 = vadd.f32 %v644, %v980
    %v1024 = vadd.f32 %v645, %v1000
    %v1025 = vadd.f32 %v646, %v1020
    %v1026 = vxor.u32 %v1022, 2147483648
    %v1027 = vmul.f32 %v1026, 1.442695
    %v1028 = vpow.pop %v1027
    %v1029 = vadd.f32 %v1028, 1.0
    %v1030 = vrcp.pop %v1029
    %v1031 = vmul.f32 %v1029, %v1030
    %v1032 = vsub.f32 1.0, %v1031
    %v1033 = vmul.f32 %v1030, %v1032
    %v1034 = vadd.f32 %v1030, %v1033
    %vm1035 = vweird.f32 %v1029
    %vm1036 = vweird.f32 %v1030
    %vm1037 = vmor %vm1035, %vm1036
    %v1038 = vsel %vm1037, %v1030, %v1034
    %v1039 = vand.u32 2147483647, %v1029
    %vm1040 = vcmp.eq.f32.partialorder %v1039, 8.507059e+37
    %v1041 = vand.u32 %v1029, 2147483648
    %v1042 = vor.u32 1.1754944e-38, %v1041
    %v1043 = vsel %vm1040, %v1042, %v1038
    %v1044 = vmul.f32 1.0, %v1043
    %v1045 = vxor.u32 %v1023, 2147483648
    %v1046 = vmul.f32 %v1045, 1.442695
    %v1047 = vpow.pop %v1046
    %v1048 = vadd.f32 %v1047, 1.0
    %v1049 = vrcp.pop %v1048
    %v1050 = vmul.f32 %v1048, %v1049
    %v1051 = vsub.f32 1.0, %v1050
    %v1052 = vmul.f32 %v1049, %v1051
    %v1053 = vadd.f32 %v1049, %v1052
    %vm1054 = vweird.f32 %v1048
    %vm1055 = vweird.f32 %v1049
    %vm1056 = vmor %vm1054, %vm1055
    %v1057 = vsel %vm1056, %v1049, %v1053
    %v1058 = vand.u32 2147483647, %v1048
    %vm1059 = vcmp.eq.f32.partialorder %v1058, 8.507059e+37
    %v1060 = vand.u32 %v1048, 2147483648
    %v1061 = vor.u32 1.1754944e-38, %v1060
    %v1062 = vsel %vm1059, %v1061, %v1057
    %v1063 = vmul.f32 1.0, %v1062
    %v1064 = vtanh.pop %v1024
    %v1065 = vxor.u32 %v1025, 2147483648
    %v1066 = vmul.f32 %v1065, 1.442695
    %v1067 = vpow.pop %v1066
    %v1068 = vadd.f32 %v1067, 1.0
    %v1069 = vrcp.pop %v1068
    %v1070 = vmul.f32 %v1068, %v1069
    %v1071 = vsub.f32 1.0, %v1070
    %v1072 = vmul.f32 %v1069, %v1071
    %v1073 = vadd.f32 %v1069, %v1072
    %vm1074 = vweird.f32 %v1068
    %vm1075 = vweird.f32 %v1069
    %vm1076 = vmor %vm1074, %vm1075
    %v1077 = vsel %vm1076, %v1069, %v1073
    %v1078 = vand.u32 2147483647, %v1068
    %vm1079 = vcmp.eq.f32.partialorder %v1078, 8.507059e+37
    %v1080 = vand.u32 %v1068, 2147483648
    %v1081 = vor.u32 1.1754944e-38, %v1080
    %v1082 = vsel %vm1079, %v1081, %v1077
    %v1083 = vmul.f32 1.0, %v1082
    %v1084 = vmul.f32 %v1063, %v855
    %v1085 = vmul.f32 %v1044, %v1064
    %v1086 = vadd.f32 %v1084, %v1085
    %1087 = vmatpush.msra.mxu0 %v633
    %1088 = vmatpush.msra.mxu0 %v632
    %1089 = vmatpush.msra.mxu0 %v631
    %1090 = vmatpush.msra.mxu0 %v630
    %1091 = vmatpush.msra.mxu0 %v629
    %1092 = vmatpush.msra.mxu0 %v628
    %1093 = vmatpush.msra.mxu0 %v627
    %1094 = vmatpush.msra.mxu0 %v626
    %1095 = vmatpush.msra.mxu0 %v625
    %1096 = vmatpush.msra.mxu0 %v624
    %1097 = vmatpush.msra.mxu0 %v623
    %1098 = vmatpush.msra.mxu0 %v622
    %1099 = vmatpush.msra.mxu0 %v621
    %1100 = vmatpush.msra.mxu0 %v620
    %1101 = vmatpush.msra.mxu0 %v619
    %1102 = vmatpush.msra.mxu0 %v618
    %1103 = vmatmul.f32.gmra.mxu0 %v1086
    %v1104 = vpop.f32.mrf.mxu0
    %v1105 = vadd.f32 0.0, %v1104
    %1106 = vdwg.mxu0
    %v1107 = vtanh.pop %v1105
    %v1108 = vmul.f32 %v1083, %v1107
    %s1109 = smul.u32 1, 4
    %s1110 = smul.addr %s1109, 8
    %s1111 = scalar_lea.vmem [#allocation2], %s1110
    %v1112 = vld [vmem:[%s1111] sm:$0xff]
    %v1113 = vld [vmem:[%s1111 + $0x8] sm:$0xff]
    %v1114 = vld [vmem:[%s1111 + $0x10] sm:$0xff]
    %v1115 = vld [vmem:[%s1111 + $0x18] sm:$0xff]
    %s1116 = smul.addr %s1109, 8
    %s1117 = scalar_lea.vmem [#allocation3], %s1116
    %v1118 = vld [vmem:[%s1117] sm:$0xff]
    %v1119 = vld [vmem:[%s1117 + $0x8] sm:$0xff]
    %v1120 = vld [vmem:[%s1117 + $0x10] sm:$0xff]
    %v1121 = vld [vmem:[%s1117 + $0x18] sm:$0xff]
    %1122 = vmatpush.msra.mxu0 %v707
    %1123 = vmatpush.msra.mxu0 %v703
    %1124 = vmatpush.msra.mxu0 %v699
    %1125 = vmatpush.msra.mxu0 %v695
    %1126 = vmatpush.msra.mxu0 %v691
    %1127 = vmatpush.msra.mxu0 %v687
    %1128 = vmatpush.msra.mxu0 %v683
    %1129 = vmatpush.msra.mxu0 %v679
    %1130 = vmatpush.msra.mxu0 %v675
    %1131 = vmatpush.msra.mxu0 %v671
    %1132 = vmatpush.msra.mxu0 %v667
    %1133 = vmatpush.msra.mxu0 %v663
    %1134 = vmatpush.msra.mxu0 %v659
    %1135 = vmatpush.msra.mxu0 %v655
    %1136 = vmatpush.msra.mxu0 %v651
    %1137 = vmatpush.msra.mxu0 %v647
    %1138 = vmatmul.f32.gmra.mxu0 %v1108
    %v1139 = vpop.f32.mrf.mxu0
    %v1140 = vadd.f32 0.0, %v1139
    %1141 = vdwg.mxu0
    %1142 = vmatpush.msra.mxu0 %v708
    %1143 = vmatpush.msra.mxu0 %v704
    %1144 = vmatpush.msra.mxu0 %v700
    %1145 = vmatpush.msra.mxu0 %v696
    %1146 = vmatpush.msra.mxu0 %v692
    %1147 = vmatpush.msra.mxu0 %v688
    %1148 = vmatpush.msra.mxu0 %v684
    %1149 = vmatpush.msra.mxu0 %v680
    %1150 = vmatpush.msra.mxu0 %v676
    %1151 = vmatpush.msra.mxu0 %v672
    %1152 = vmatpush.msra.mxu0 %v668
    %1153 = vmatpush.msra.mxu0 %v664
    %1154 = vmatpush.msra.mxu0 %v660
    %1155 = vmatpush.msra.mxu0 %v656
    %1156 = vmatpush.msra.mxu0 %v652
    %1157 = vmatpush.msra.mxu0 %v648
    %1158 = vmatmul.f32.gmra.mxu0 %v1108
    %v1159 = vpop.f32.mrf.mxu0
    %v1160 = vadd.f32 0.0, %v1159
    %1161 = vdwg.mxu0
    %1162 = vmatpush.msra.mxu0 %v709
    %1163 = vmatpush.msra.mxu0 %v705
    %1164 = vmatpush.msra.mxu0 %v701
    %1165 = vmatpush.msra.mxu0 %v697
    %1166 = vmatpush.msra.mxu0 %v693
    %1167 = vmatpush.msra.mxu0 %v689
    %1168 = vmatpush.msra.mxu0 %v685
    %1169 = vmatpush.msra.mxu0 %v681
    %1170 = vmatpush.msra.mxu0 %v677
    %1171 = vmatpush.msra.mxu0 %v673
    %1172 = vmatpush.msra.mxu0 %v669
    %1173 = vmatpush.msra.mxu0 %v665
    %1174 = vmatpush.msra.mxu0 %v661
    %1175 = vmatpush.msra.mxu0 %v657
    %1176 = vmatpush.msra.mxu0 %v653
    %1177 = vmatpush.msra.mxu0 %v649
    %1178 = vmatmul.f32.gmra.mxu0 %v1108
    %v1179 = vpop.f32.mrf.mxu0
    %v1180 = vadd.f32 0.0, %v1179
    %1181 = vdwg.mxu0
    %1182 = vmatpush.msra.mxu0 %v710
    %1183 = vmatpush.msra.mxu0 %v706
    %1184 = vmatpush.msra.mxu0 %v702
    %1185 = vmatpush.msra.mxu0 %v698
    %1186 = vmatpush.msra.mxu0 %v694
    %1187 = vmatpush.msra.mxu0 %v690
    %1188 = vmatpush.msra.mxu0 %v686
    %1189 = vmatpush.msra.mxu0 %v682
    %1190 = vmatpush.msra.mxu0 %v678
    %1191 = vmatpush.msra.mxu0 %v674
    %1192 = vmatpush.msra.mxu0 %v670
    %1193 = vmatpush.msra.mxu0 %v666
    %1194 = vmatpush.msra.mxu0 %v662
    %1195 = vmatpush.msra.mxu0 %v658
    %1196 = vmatpush.msra.mxu0 %v654
    %1197 = vmatpush.msra.mxu0 %v650
    %1198 = vmatmul.f32.gmra.mxu0 %v1108
    %v1199 = vpop.f32.mrf.mxu0
    %v1200 = vadd.f32 0.0, %v1199
    %1201 = vdwg.mxu0
    %v1202 = vadd.f32 %v1112, %v1140
    %v1203 = vadd.f32 %v1113, %v1160
    %v1204 = vadd.f32 %v1114, %v1180
    %v1205 = vadd.f32 %v1115, %v1200
    %v1206 = vxor.u32 %v1202, 2147483648
    %v1207 = vmul.f32 %v1206, 1.442695
    %v1208 = vpow.pop %v1207
    %v1209 = vadd.f32 %v1208, 1.0
    %v1210 = vrcp.pop %v1209
    %v1211 = vmul.f32 %v1209, %v1210
    %v1212 = vsub.f32 1.0, %v1211
    %v1213 = vmul.f32 %v1210, %v1212
    %v1214 = vadd.f32 %v1210, %v1213
    %vm1215 = vweird.f32 %v1209
    %vm1216 = vweird.f32 %v1210
    %vm1217 = vmor %vm1215, %vm1216
    %v1218 = vsel %vm1217, %v1210, %v1214
    %v1219 = vand.u32 2147483647, %v1209
    %vm1220 = vcmp.eq.f32.partialorder %v1219, 8.507059e+37
    %v1221 = vand.u32 %v1209, 2147483648
    %v1222 = vor.u32 1.1754944e-38, %v1221
    %v1223 = vsel %vm1220, %v1222, %v1218
    %v1224 = vmul.f32 1.0, %v1223
    %v1225 = vxor.u32 %v1203, 2147483648
    %v1226 = vmul.f32 %v1225, 1.442695
    %v1227 = vpow.pop %v1226
    %v1228 = vadd.f32 %v1227, 1.0
    %v1229 = vrcp.pop %v1228
    %v1230 = vmul.f32 %v1228, %v1229
    %v1231 = vsub.f32 1.0, %v1230
    %v1232 = vmul.f32 %v1229, %v1231
    %v1233 = vadd.f32 %v1229, %v1232
    %vm1234 = vweird.f32 %v1228
    %vm1235 = vweird.f32 %v1229
    %vm1236 = vmor %vm1234, %vm1235
    %v1237 = vsel %vm1236, %v1229, %v1233
    %v1238 = vand.u32 2147483647, %v1228
    %vm1239 = vcmp.eq.f32.partialorder %v1238, 8.507059e+37
    %v1240 = vand.u32 %v1228, 2147483648
    %v1241 = vor.u32 1.1754944e-38, %v1240
    %v1242 = vsel %vm1239, %v1241, %v1237
    %v1243 = vmul.f32 1.0, %v1242
    %v1244 = vtanh.pop %v1204
    %v1245 = vxor.u32 %v1205, 2147483648
    %v1246 = vmul.f32 %v1245, 1.442695
    %v1247 = vpow.pop %v1246
    %v1248 = vadd.f32 %v1247, 1.0
    %v1249 = vrcp.pop %v1248
    %v1250 = vmul.f32 %v1248, %v1249
    %v1251 = vsub.f32 1.0, %v1250
    %v1252 = vmul.f32 %v1249, %v1251
    %v1253 = vadd.f32 %v1249, %v1252
    %vm1254 = vweird.f32 %v1248
    %vm1255 = vweird.f32 %v1249
    %vm1256 = vmor %vm1254, %vm1255
    %v1257 = vsel %vm1256, %v1249, %v1253
    %v1258 = vand.u32 2147483647, %v1248
    %vm1259 = vcmp.eq.f32.partialorder %v1258, 8.507059e+37
    %v1260 = vand.u32 %v1248, 2147483648
    %v1261 = vor.u32 1.1754944e-38, %v1260
    %v1262 = vsel %vm1259, %v1261, %v1257
    %v1263 = vmul.f32 1.0, %v1262
    %v1264 = vmul.f32 %v1243, %v1086
    %v1265 = vmul.f32 %v1224, %v1244
    %v1266 = vadd.f32 %v1264, %v1265
    %1267 = vmatpush.msra.mxu0 %v633
    %1268 = vmatpush.msra.mxu0 %v632
    %1269 = vmatpush.msra.mxu0 %v631
    %1270 = vmatpush.msra.mxu0 %v630
    %1271 = vmatpush.msra.mxu0 %v629
    %1272 = vmatpush.msra.mxu0 %v628
    %1273 = vmatpush.msra.mxu0 %v627
    %1274 = vmatpush.msra.mxu0 %v626
    %1275 = vmatpush.msra.mxu0 %v625
    %1276 = vmatpush.msra.mxu0 %v624
    %1277 = vmatpush.msra.mxu0 %v623
    %1278 = vmatpush.msra.mxu0 %v622
    %1279 = vmatpush.msra.mxu0 %v621
    %1280 = vmatpush.msra.mxu0 %v620
    %1281 = vmatpush.msra.mxu0 %v619
    %1282 = vmatpush.msra.mxu0 %v618
    %1283 = vmatmul.f32.gmra.mxu0 %v1266
    %v1284 = vpop.f32.mrf.mxu0
    %v1285 = vadd.f32 0.0, %v1284
    %1286 = vdwg.mxu0
    %v1287 = vtanh.pop %v1285
    %v1288 = vmul.f32 %v1263, %v1287
    %1289 = vmatpush.msra.mxu0 %v938
    %1290 = vmatpush.msra.mxu0 %v934
    %1291 = vmatpush.msra.mxu0 %v930
    %1292 = vmatpush.msra.mxu0 %v926
    %1293 = vmatpush.msra.mxu0 %v922
    %1294 = vmatpush.msra.mxu0 %v918
    %1295 = vmatpush.msra.mxu0 %v914
    %1296 = vmatpush.msra.mxu0 %v910
    %1297 = vmatpush.msra.mxu0 %v906
    %1298 = vmatpush.msra.mxu0 %v902
    %1299 = vmatpush.msra.mxu0 %v898
    %1300 = vmatpush.msra.mxu0 %v894
    %1301 = vmatpush.msra.mxu0 %v890
    %1302 = vmatpush.msra.mxu0 %v886
    %1303 = vmatpush.msra.mxu0 %v882
    %1304 = vmatpush.msra.mxu0 %v878
    %1305 = vmatmul.f32.gmra.mxu0 %v1288
    %v1306 = vpop.f32.mrf.mxu0
    %v1307 = vadd.f32 0.0, %v1306
    %1308 = vdwg.mxu0
    %1309 = vmatpush.msra.mxu0 %v939
    %1310 = vmatpush.msra.mxu0 %v935
    %1311 = vmatpush.msra.mxu0 %v931
    %1312 = vmatpush.msra.mxu0 %v927
    %1313 = vmatpush.msra.mxu0 %v923
    %1314 = vmatpush.msra.mxu0 %v919
    %1315 = vmatpush.msra.mxu0 %v915
    %1316 = vmatpush.msra.mxu0 %v911
    %1317 = vmatpush.msra.mxu0 %v907
    %1318 = vmatpush.msra.mxu0 %v903
    %1319 = vmatpush.msra.mxu0 %v899
    %1320 = vmatpush.msra.mxu0 %v895
    %1321 = vmatpush.msra.mxu0 %v891
    %1322 = vmatpush.msra.mxu0 %v887
    %1323 = vmatpush.msra.mxu0 %v883
    %1324 = vmatpush.msra.mxu0 %v879
    %1325 = vmatmul.f32.gmra.mxu0 %v1288
    %v1326 = vpop.f32.mrf.mxu0
    %v1327 = vadd.f32 0.0, %v1326
    %1328 = vdwg.mxu0
    %1329 = vmatpush.msra.mxu0 %v940
    %1330 = vmatpush.msra.mxu0 %v936
    %1331 = vmatpush.msra.mxu0 %v932
    %1332 = vmatpush.msra.mxu0 %v928
    %1333 = vmatpush.msra.mxu0 %v924
    %1334 = vmatpush.msra.mxu0 %v920
    %1335 = vmatpush.msra.mxu0 %v916
    %1336 = vmatpush.msra.mxu0 %v912
    %1337 = vmatpush.msra.mxu0 %v908
    %1338 = vmatpush.msra.mxu0 %v904
    %1339 = vmatpush.msra.mxu0 %v900
    %1340 = vmatpush.msra.mxu0 %v896
    %1341 = vmatpush.msra.mxu0 %v892
    %1342 = vmatpush.msra.mxu0 %v888
    %1343 = vmatpush.msra.mxu0 %v884
    %1344 = vmatpush.msra.mxu0 %v880
    %1345 = vmatmul.f32.gmra.mxu0 %v1288
    %v1346 = vpop.f32.mrf.mxu0
    %v1347 = vadd.f32 0.0, %v1346
    %1348 = vdwg.mxu0
    %1349 = vmatpush.msra.mxu0 %v941
    %1350 = vmatpush.msra.mxu0 %v937
    %1351 = vmatpush.msra.mxu0 %v933
    %1352 = vmatpush.msra.mxu0 %v929
    %1353 = vmatpush.msra.mxu0 %v925
    %1354 = vmatpush.msra.mxu0 %v921
    %1355 = vmatpush.msra.mxu0 %v917
    %1356 = vmatpush.msra.mxu0 %v913
    %1357 = vmatpush.msra.mxu0 %v909
    %1358 = vmatpush.msra.mxu0 %v905
    %1359 = vmatpush.msra.mxu0 %v901
    %1360 = vmatpush.msra.mxu0 %v897
    %1361 = vmatpush.msra.mxu0 %v893
    %1362 = vmatpush.msra.mxu0 %v889
    %1363 = vmatpush.msra.mxu0 %v885
    %1364 = vmatpush.msra.mxu0 %v881
    %1365 = vmatmul.f32.gmra.mxu0 %v1288
    %v1366 = vpop.f32.mrf.mxu0
    %v1367 = vadd.f32 0.0, %v1366
    %1368 = vdwg.mxu0
    %v1369 = vadd.f32 %v1118, %v1307
    %v1370 = vadd.f32 %v1119, %v1327
    %v1371 = vadd.f32 %v1120, %v1347
    %v1372 = vadd.f32 %v1121, %v1367
    %v1373 = vxor.u32 %v1369, 2147483648
    %v1374 = vmul.f32 %v1373, 1.442695
    %v1375 = vpow.pop %v1374
    %v1376 = vadd.f32 %v1375, 1.0
    %v1377 = vrcp.pop %v1376
    %v1378 = vmul.f32 %v1376, %v1377
    %v1379 = vsub.f32 1.0, %v1378
    %v1380 = vmul.f32 %v1377, %v1379
    %v1381 = vadd.f32 %v1377, %v1380
    %vm1382 = vweird.f32 %v1376
    %vm1383 = vweird.f32 %v1377
    %vm1384 = vmor %vm1382, %vm1383
    %v1385 = vsel %vm1384, %v1377, %v1381
    %v1386 = vand.u32 2147483647, %v1376
    %vm1387 = vcmp.eq.f32.partialorder %v1386, 8.507059e+37
    %v1388 = vand.u32 %v1376, 2147483648
    %v1389 = vor.u32 1.1754944e-38, %v1388
    %v1390 = vsel %vm1387, %v1389, %v1385
    %v1391 = vmul.f32 1.0, %v1390
    %v1392 = vxor.u32 %v1370, 2147483648
    %v1393 = vmul.f32 %v1392, 1.442695
    %v1394 = vpow.pop %v1393
    %v1395 = vadd.f32 %v1394, 1.0
    %v1396 = vrcp.pop %v1395
    %v1397 = vmul.f32 %v1395, %v1396
    %v1398 = vsub.f32 1.0, %v1397
    %v1399 = vmul.f32 %v1396, %v1398
    %v1400 = vadd.f32 %v1396, %v1399
    %vm1401 = vweird.f32 %v1395
    %vm1402 = vweird.f32 %v1396
    %vm1403 = vmor %vm1401, %vm1402
    %v1404 = vsel %vm1403, %v1396, %v1400
    %v1405 = vand.u32 2147483647, %v1395
    %vm1406 = vcmp.eq.f32.partialorder %v1405, 8.507059e+37
    %v1407 = vand.u32 %v1395, 2147483648
    %v1408 = vor.u32 1.1754944e-38, %v1407
    %v1409 = vsel %vm1406, %v1408, %v1404
    %v1410 = vmul.f32 1.0, %v1409
    %v1411 = vtanh.pop %v1371
    %v1412 = vxor.u32 %v1372, 2147483648
    %v1413 = vmul.f32 %v1412, 1.442695
    %v1414 = vpow.pop %v1413
    %v1415 = vadd.f32 %v1414, 1.0
    %v1416 = vrcp.pop %v1415
    %v1417 = vmul.f32 %v1415, %v1416
    %v1418 = vsub.f32 1.0, %v1417
    %v1419 = vmul.f32 %v1416, %v1418
    %v1420 = vadd.f32 %v1416, %v1419
    %vm1421 = vweird.f32 %v1415
    %vm1422 = vweird.f32 %v1416
    %vm1423 = vmor %vm1421, %vm1422
    %v1424 = vsel %vm1423, %v1416, %v1420
    %v1425 = vand.u32 2147483647, %v1415
    %vm1426 = vcmp.eq.f32.partialorder %v1425, 8.507059e+37
    %v1427 = vand.u32 %v1415, 2147483648
    %v1428 = vor.u32 1.1754944e-38, %v1427
    %v1429 = vsel %vm1426, %v1428, %v1424
    %v1430 = vmul.f32 1.0, %v1429
    %v1431 = vmul.f32 %v1410, %v1266
    %v1432 = vmul.f32 %v1391, %v1411
    %v1433 = vadd.f32 %v1431, %v1432
    %1434 = vmatpush.msra.mxu0 %v633
    %1435 = vmatpush.msra.mxu0 %v632
    %1436 = vmatpush.msra.mxu0 %v631
    %1437 = vmatpush.msra.mxu0 %v630
    %1438 = vmatpush.msra.mxu0 %v629
    %1439 = vmatpush.msra.mxu0 %v628
    %1440 = vmatpush.msra.mxu0 %v627
    %1441 = vmatpush.msra.mxu0 %v626
    %1442 = vmatpush.msra.mxu0 %v625
    %1443 = vmatpush.msra.mxu0 %v624
    %1444 = vmatpush.msra.mxu0 %v623
    %1445 = vmatpush.msra.mxu0 %v622
    %1446 = vmatpush.msra.mxu0 %v621
    %1447 = vmatpush.msra.mxu0 %v620
    %1448 = vmatpush.msra.mxu0 %v619
    %1449 = vmatpush.msra.mxu0 %v618
    %1450 = vmatmul.f32.gmra.mxu0 %v1433
    %v1451 = vpop.f32.mrf.mxu0
    %v1452 = vadd.f32 0.0, %v1451
    %1453 = vdwg.mxu0
    %v1454 = vtanh.pop %v1452
    %v1455 = vmul.f32 %v1430, %v1454
    %s1456 = smul.u32 2, 4
    %s1457 = smul.addr %s1456, 8
    %s1458 = scalar_lea.vmem [#allocation2], %s1457
    %v1459 = vld [vmem:[%s1458] sm:$0xff]
    %v1460 = vld [vmem:[%s1458 + $0x8] sm:$0xff]
    %v1461 = vld [vmem:[%s1458 + $0x10] sm:$0xff]
    %v1462 = vld [vmem:[%s1458 + $0x18] sm:$0xff]
    %s1463 = smul.addr %s1456, 8
    %s1464 = scalar_lea.vmem [#allocation3], %s1463
    %v1465 = vld [vmem:[%s1464] sm:$0xff]
    %v1466 = vld [vmem:[%s1464 + $0x8] sm:$0xff]
    %v1467 = vld [vmem:[%s1464 + $0x10] sm:$0xff]
    %v1468 = vld [vmem:[%s1464 + $0x18] sm:$0xff]
    %1469 = vmatpush.msra.mxu0 %v707
    %1470 = vmatpush.msra.mxu0 %v703
    %1471 = vmatpush.msra.mxu0 %v699
    %1472 = vmatpush.msra.mxu0 %v695
    %1473 = vmatpush.msra.mxu0 %v691
    %1474 = vmatpush.msra.mxu0 %v687
    %1475 = vmatpush.msra.mxu0 %v683
    %1476 = vmatpush.msra.mxu0 %v679
    %1477 = vmatpush.msra.mxu0 %v675
    %1478 = vmatpush.msra.mxu0 %v671
    %1479 = vmatpush.msra.mxu0 %v667
    %1480 = vmatpush.msra.mxu0 %v663
    %1481 = vmatpush.msra.mxu0 %v659
    %1482 = vmatpush.msra.mxu0 %v655
    %1483 = vmatpush.msra.mxu0 %v651
    %1484 = vmatpush.msra.mxu0 %v647
    %1485 = vmatmul.f32.gmra.mxu0 %v1455
    %v1486 = vpop.f32.mrf.mxu0
    %v1487 = vadd.f32 0.0, %v1486
    %1488 = vdwg.mxu0
    %1489 = vmatpush.msra.mxu0 %v708
    %1490 = vmatpush.msra.mxu0 %v704
    %1491 = vmatpush.msra.mxu0 %v700
    %1492 = vmatpush.msra.mxu0 %v696
    %1493 = vmatpush.msra.mxu0 %v692
    %1494 = vmatpush.msra.mxu0 %v688
    %1495 = vmatpush.msra.mxu0 %v684
    %1496 = vmatpush.msra.mxu0 %v680
    %1497 = vmatpush.msra.mxu0 %v676
    %1498 = vmatpush.msra.mxu0 %v672
    %1499 = vmatpush.msra.mxu0 %v668
    %1500 = vmatpush.msra.mxu0 %v664
    %1501 = vmatpush.msra.mxu0 %v660
    %1502 = vmatpush.msra.mxu0 %v656
    %1503 = vmatpush.msra.mxu0 %v652
    %1504 = vmatpush.msra.mxu0 %v648
    %1505 = vmatmul.f32.gmra.mxu0 %v1455
    %v1506 = vpop.f32.mrf.mxu0
    %v1507 = vadd.f32 0.0, %v1506
    %1508 = vdwg.mxu0
    %1509 = vmatpush.msra.mxu0 %v709
    %1510 = vmatpush.msra.mxu0 %v705
    %1511 = vmatpush.msra.mxu0 %v701
    %1512 = vmatpush.msra.mxu0 %v697
    %1513 = vmatpush.msra.mxu0 %v693
    %1514 = vmatpush.msra.mxu0 %v689
    %1515 = vmatpush.msra.mxu0 %v685
    %1516 = vmatpush.msra.mxu0 %v681
    %1517 = vmatpush.msra.mxu0 %v677
    %1518 = vmatpush.msra.mxu0 %v673
    %1519 = vmatpush.msra.mxu0 %v669
    %1520 = vmatpush.msra.mxu0 %v665
    %1521 = vmatpush.msra.mxu0 %v661
    %1522 = vmatpush.msra.mxu0 %v657
    %1523 = vmatpush.msra.mxu0 %v653
    %1524 = vmatpush.msra.mxu0 %v649
    %1525 = vmatmul.f32.gmra.mxu0 %v1455
    %v1526 = vpop.f32.mrf.mxu0
    %v1527 = vadd.f32 0.0, %v1526
    %1528 = vdwg.mxu0
    %1529 = vmatpush.msra.mxu0 %v710
    %1530 = vmatpush.msra.mxu0 %v706
    %1531 = vmatpush.msra.mxu0 %v702
    %1532 = vmatpush.msra.mxu0 %v698
    %1533 = vmatpush.msra.mxu0 %v694
    %1534 = vmatpush.msra.mxu0 %v690
    %1535 = vmatpush.msra.mxu0 %v686
    %1536 = vmatpush.msra.mxu0 %v682
    %1537 = vmatpush.msra.mxu0 %v678
    %1538 = vmatpush.msra.mxu0 %v674
    %1539 = vmatpush.msra.mxu0 %v670
    %1540 = vmatpush.msra.mxu0 %v666
    %1541 = vmatpush.msra.mxu0 %v662
    %1542 = vmatpush.msra.mxu0 %v658
    %1543 = vmatpush.msra.mxu0 %v654
    %1544 = vmatpush.msra.mxu0 %v650
    %1545 = vmatmul.f32.gmra.mxu0 %v1455
    %v1546 = vpop.f32.mrf.mxu0
    %v1547 = vadd.f32 0.0, %v1546
    %1548 = vdwg.mxu0
    %v1549 = vadd.f32 %v1459, %v1487
    %v1550 = vadd.f32 %v1460, %v1507
    %v1551 = vadd.f32 %v1461, %v1527
    %v1552 = vadd.f32 %v1462, %v1547
    %v1553 = vxor.u32 %v1549, 2147483648
    %v1554 = vmul.f32 %v1553, 1.442695
    %v1555 = vpow.pop %v1554
    %v1556 = vadd.f32 %v1555, 1.0
    %v1557 = vrcp.pop %v1556
    %v1558 = vmul.f32 %v1556, %v1557
    %v1559 = vsub.f32 1.0, %v1558
    %v1560 = vmul.f32 %v1557, %v1559
    %v1561 = vadd.f32 %v1557, %v1560
    %vm1562 = vweird.f32 %v1556
    %vm1563 = vweird.f32 %v1557
    %vm1564 = vmor %vm1562, %vm1563
    %v1565 = vsel %vm1564, %v1557, %v1561
    %v1566 = vand.u32 2147483647, %v1556
    %vm1567 = vcmp.eq.f32.partialorder %v1566, 8.507059e+37
    %v1568 = vand.u32 %v1556, 2147483648
    %v1569 = vor.u32 1.1754944e-38, %v1568
    %v1570 = vsel %vm1567, %v1569, %v1565
    %v1571 = vmul.f32 1.0, %v1570
    %v1572 = vxor.u32 %v1550, 2147483648
    %v1573 = vmul.f32 %v1572, 1.442695
    %v1574 = vpow.pop %v1573
    %v1575 = vadd.f32 %v1574, 1.0
    %v1576 = vrcp.pop %v1575
    %v1577 = vmul.f32 %v1575, %v1576
    %v1578 = vsub.f32 1.0, %v1577
    %v1579 = vmul.f32 %v1576, %v1578
    %v1580 = vadd.f32 %v1576, %v1579
    %vm1581 = vweird.f32 %v1575
    %vm1582 = vweird.f32 %v1576
    %vm1583 = vmor %vm1581, %vm1582
    %v1584 = vsel %vm1583, %v1576, %v1580
    %v1585 = vand.u32 2147483647, %v1575
    %vm1586 = vcmp.eq.f32.partialorder %v1585, 8.507059e+37
    %v1587 = vand.u32 %v1575, 2147483648
    %v1588 = vor.u32 1.1754944e-38, %v1587
    %v1589 = vsel %vm1586, %v1588, %v1584
    %v1590 = vmul.f32 1.0, %v1589
    %v1591 = vtanh.pop %v1551
    %v1592 = vxor.u32 %v1552, 2147483648
    %v1593 = vmul.f32 %v1592, 1.442695
    %v1594 = vpow.pop %v1593
    %v1595 = vadd.f32 %v1594, 1.0
    %v1596 = vrcp.pop %v1595
    %v1597 = vmul.f32 %v1595, %v1596
    %v1598 = vsub.f32 1.0, %v1597
    %v1599 = vmul.f32 %v1596, %v1598
    %v1600 = vadd.f32 %v1596, %v1599
    %vm1601 = vweird.f32 %v1595
    %vm1602 = vweird.f32 %v1596
    %vm1603 = vmor %vm1601, %vm1602
    %v1604 = vsel %vm1603, %v1596, %v1600
    %v1605 = vand.u32 2147483647, %v1595
    %vm1606 = vcmp.eq.f32.partialorder %v1605, 8.507059e+37
    %v1607 = vand.u32 %v1595, 2147483648
    %v1608 = vor.u32 1.1754944e-38, %v1607
    %v1609 = vsel %vm1606, %v1608, %v1604
    %v1610 = vmul.f32 1.0, %v1609
    %v1611 = vmul.f32 %v1590, %v1433
    %v1612 = vmul.f32 %v1571, %v1591
    %v1613 = vadd.f32 %v1611, %v1612
    %1614 = vmatpush.msra.mxu0 %v633
    %1615 = vmatpush.msra.mxu0 %v632
    %1616 = vmatpush.msra.mxu0 %v631
    %1617 = vmatpush.msra.mxu0 %v630
    %1618 = vmatpush.msra.mxu0 %v629
    %1619 = vmatpush.msra.mxu0 %v628
    %1620 = vmatpush.msra.mxu0 %v627
    %1621 = vmatpush.msra.mxu0 %v626
    %1622 = vmatpush.msra.mxu0 %v625
    %1623 = vmatpush.msra.mxu0 %v624
    %1624 = vmatpush.msra.mxu0 %v623
    %1625 = vmatpush.msra.mxu0 %v622
    %1626 = vmatpush.msra.mxu0 %v621
    %1627 = vmatpush.msra.mxu0 %v620
    %1628 = vmatpush.msra.mxu0 %v619
    %1629 = vmatpush.msra.mxu0 %v618
    %1630 = vmatmul.f32.gmra.mxu0 %v1613
    %v1631 = vpop.f32.mrf.mxu0
    %v1632 = vadd.f32 0.0, %v1631
    %1633 = vdwg.mxu0
    %v1634 = vtanh.pop %v1632
    %v1635 = vmul.f32 %v1610, %v1634
    %1636 = vmatpush.msra.mxu0 %v938
    %1637 = vmatpush.msra.mxu0 %v934
    %1638 = vmatpush.msra.mxu0 %v930
    %1639 = vmatpush.msra.mxu0 %v926
    %1640 = vmatpush.msra.mxu0 %v922
    %1641 = vmatpush.msra.mxu0 %v918
    %1642 = vmatpush.msra.mxu0 %v914
    %1643 = vmatpush.msra.mxu0 %v910
    %1644 = vmatpush.msra.mxu0 %v906
    %1645 = vmatpush.msra.mxu0 %v902
    %1646 = vmatpush.msra.mxu0 %v898
    %1647 = vmatpush.msra.mxu0 %v894
    %1648 = vmatpush.msra.mxu0 %v890
    %1649 = vmatpush.msra.mxu0 %v886
    %1650 = vmatpush.msra.mxu0 %v882
    %1651 = vmatpush.msra.mxu0 %v878
    %1652 = vmatmul.f32.gmra.mxu0 %v1635
    %v1653 = vpop.f32.mrf.mxu0
    %v1654 = vadd.f32 0.0, %v1653
    %1655 = vdwg.mxu0
    %1656 = vmatpush.msra.mxu0 %v939
    %1657 = vmatpush.msra.mxu0 %v935
    %1658 = vmatpush.msra.mxu0 %v931
    %1659 = vmatpush.msra.mxu0 %v927
    %1660 = vmatpush.msra.mxu0 %v923
    %1661 = vmatpush.msra.mxu0 %v919
    %1662 = vmatpush.msra.mxu0 %v915
    %1663 = vmatpush.msra.mxu0 %v911
    %1664 = vmatpush.msra.mxu0 %v907
    %1665 = vmatpush.msra.mxu0 %v903
    %1666 = vmatpush.msra.mxu0 %v899
    %1667 = vmatpush.msra.mxu0 %v895
    %1668 = vmatpush.msra.mxu0 %v891
    %1669 = vmatpush.msra.mxu0 %v887
    %1670 = vmatpush.msra.mxu0 %v883
    %1671 = vmatpush.msra.mxu0 %v879
    %1672 = vmatmul.f32.gmra.mxu0 %v1635
    %v1673 = vpop.f32.mrf.mxu0
    %v1674 = vadd.f32 0.0, %v1673
    %1675 = vdwg.mxu0
    %1676 = vmatpush.msra.mxu0 %v940
    %1677 = vmatpush.msra.mxu0 %v936
    %1678 = vmatpush.msra.mxu0 %v932
    %1679 = vmatpush.msra.mxu0 %v928
    %1680 = vmatpush.msra.mxu0 %v924
    %1681 = vmatpush.msra.mxu0 %v920
    %1682 = vmatpush.msra.mxu0 %v916
    %1683 = vmatpush.msra.mxu0 %v912
    %1684 = vmatpush.msra.mxu0 %v908
    %1685 = vmatpush.msra.mxu0 %v904
    %1686 = vmatpush.msra.mxu0 %v900
    %1687 = vmatpush.msra.mxu0 %v896
    %1688 = vmatpush.msra.mxu0 %v892
    %1689 = vmatpush.msra.mxu0 %v888
    %1690 = vmatpush.msra.mxu0 %v884
    %1691 = vmatpush.msra.mxu0 %v880
    %1692 = vmatmul.f32.gmra.mxu0 %v1635
    %v1693 = vpop.f32.mrf.mxu0
    %v1694 = vadd.f32 0.0, %v1693
    %1695 = vdwg.mxu0
    %1696 = vmatpush.msra.mxu0 %v941
    %1697 = vmatpush.msra.mxu0 %v937
    %1698 = vmatpush.msra.mxu0 %v933
    %1699 = vmatpush.msra.mxu0 %v929
    %1700 = vmatpush.msra.mxu0 %v925
    %1701 = vmatpush.msra.mxu0 %v921
    %1702 = vmatpush.msra.mxu0 %v917
    %1703 = vmatpush.msra.mxu0 %v913
    %1704 = vmatpush.msra.mxu0 %v909
    %1705 = vmatpush.msra.mxu0 %v905
    %1706 = vmatpush.msra.mxu0 %v901
    %1707 = vmatpush.msra.mxu0 %v897
    %1708 = vmatpush.msra.mxu0 %v893
    %1709 = vmatpush.msra.mxu0 %v889
    %1710 = vmatpush.msra.mxu0 %v885
    %1711 = vmatpush.msra.mxu0 %v881
    %1712 = vmatmul.f32.gmra.mxu0 %v1635
    %v1713 = vpop.f32.mrf.mxu0
    %v1714 = vadd.f32 0.0, %v1713
    %1715 = vdwg.mxu0
    %v1716 = vadd.f32 %v1465, %v1654
    %v1717 = vadd.f32 %v1466, %v1674
    %v1718 = vadd.f32 %v1467, %v1694
    %v1719 = vadd.f32 %v1468, %v1714
    %v1720 = vxor.u32 %v1716, 2147483648
    %v1721 = vmul.f32 %v1720, 1.442695
    %v1722 = vpow.pop %v1721
    %v1723 = vadd.f32 %v1722, 1.0
    %v1724 = vrcp.pop %v1723
    %v1725 = vmul.f32 %v1723, %v1724
    %v1726 = vsub.f32 1.0, %v1725
    %v1727 = vmul.f32 %v1724, %v1726
    %v1728 = vadd.f32 %v1724, %v1727
    %vm1729 = vweird.f32 %v1723
    %vm1730 = vweird.f32 %v1724
    %vm1731 = vmor %vm1729, %vm1730
    %v1732 = vsel %vm1731, %v1724, %v1728
    %v1733 = vand.u32 2147483647, %v1723
    %vm1734 = vcmp.eq.f32.partialorder %v1733, 8.507059e+37
    %v1735 = vand.u32 %v1723, 2147483648
    %v1736 = vor.u32 1.1754944e-38, %v1735
    %v1737 = vsel %vm1734, %v1736, %v1732
    %v1738 = vmul.f32 1.0, %v1737
    %v1739 = vxor.u32 %v1717, 2147483648
    %v1740 = vmul.f32 %v1739, 1.442695
    %v1741 = vpow.pop %v1740
    %v1742 = vadd.f32 %v1741, 1.0
    %v1743 = vrcp.pop %v1742
    %v1744 = vmul.f32 %v1742, %v1743
    %v1745 = vsub.f32 1.0, %v1744
    %v1746 = vmul.f32 %v1743, %v1745
    %v1747 = vadd.f32 %v1743, %v1746
    %vm1748 = vweird.f32 %v1742
    %vm1749 = vweird.f32 %v1743
    %vm1750 = vmor %vm1748, %vm1749
    %v1751 = vsel %vm1750, %v1743, %v1747
    %v1752 = vand.u32 2147483647, %v1742
    %vm1753 = vcmp.eq.f32.partialorder %v1752, 8.507059e+37
    %v1754 = vand.u32 %v1742, 2147483648
    %v1755 = vor.u32 1.1754944e-38, %v1754
    %v1756 = vsel %vm1753, %v1755, %v1751
    %v1757 = vmul.f32 1.0, %v1756
    %v1758 = vtanh.pop %v1718
    %v1759 = vxor.u32 %v1719, 2147483648
    %v1760 = vmul.f32 %v1759, 1.442695
    %v1761 = vpow.pop %v1760
    %v1762 = vadd.f32 %v1761, 1.0
    %v1763 = vrcp.pop %v1762
    %v1764 = vmul.f32 %v1762, %v1763
    %v1765 = vsub.f32 1.0, %v1764
    %v1766 = vmul.f32 %v1763, %v1765
    %v1767 = vadd.f32 %v1763, %v1766
    %vm1768 = vweird.f32 %v1762
    %vm1769 = vweird.f32 %v1763
    %vm1770 = vmor %vm1768, %vm1769
    %v1771 = vsel %vm1770, %v1763, %v1767
    %v1772 = vand.u32 2147483647, %v1762
    %vm1773 = vcmp.eq.f32.partialorder %v1772, 8.507059e+37
    %v1774 = vand.u32 %v1762, 2147483648
    %v1775 = vor.u32 1.1754944e-38, %v1774
    %v1776 = vsel %vm1773, %v1775, %v1771
    %v1777 = vmul.f32 1.0, %v1776
    %v1778 = vmul.f32 %v1757, %v1613
    %v1779 = vmul.f32 %v1738, %v1758
    %v1780 = vadd.f32 %v1778, %v1779
    %1781 = vmatpush.msra.mxu0 %v633
    %1782 = vmatpush.msra.mxu0 %v632
    %1783 = vmatpush.msra.mxu0 %v631
    %1784 = vmatpush.msra.mxu0 %v630
    %1785 = vmatpush.msra.mxu0 %v629
    %1786 = vmatpush.msra.mxu0 %v628
    %1787 = vmatpush.msra.mxu0 %v627
    %1788 = vmatpush.msra.mxu0 %v626
    %1789 = vmatpush.msra.mxu0 %v625
    %1790 = vmatpush.msra.mxu0 %v624
    %1791 = vmatpush.msra.mxu0 %v623
    %1792 = vmatpush.msra.mxu0 %v622
    %1793 = vmatpush.msra.mxu0 %v621
    %1794 = vmatpush.msra.mxu0 %v620
    %1795 = vmatpush.msra.mxu0 %v619
    %1796 = vmatpush.msra.mxu0 %v618
    %1797 = vmatmul.f32.gmra.mxu0 %v1780
    %v1798 = vpop.f32.mrf.mxu0
    %v1799 = vadd.f32 0.0, %v1798
    %1800 = vdwg.mxu0
    %v1801 = vtanh.pop %v1799
    %v1802 = vmul.f32 %v1777, %v1801
    %s1803 = smul.u32 3, 4
    %s1804 = smul.addr %s1803, 8
    %s1805 = scalar_lea.vmem [#allocation2], %s1804
    %v1806 = vld [vmem:[%s1805] sm:$0xff]
    %v1807 = vld [vmem:[%s1805 + $0x8] sm:$0xff]
    %v1808 = vld [vmem:[%s1805 + $0x10] sm:$0xff]
    %v1809 = vld [vmem:[%s1805 + $0x18] sm:$0xff]
    %s1810 = smul.addr %s1803, 8
    %s1811 = scalar_lea.vmem [#allocation3], %s1810
    %v1812 = vld [vmem:[%s1811] sm:$0xff]
    %v1813 = vld [vmem:[%s1811 + $0x8] sm:$0xff]
    %v1814 = vld [vmem:[%s1811 + $0x10] sm:$0xff]
    %v1815 = vld [vmem:[%s1811 + $0x18] sm:$0xff]
    %1816 = vmatpush.msra.mxu0 %v707
    %1817 = vmatpush.msra.mxu0 %v703
    %1818 = vmatpush.msra.mxu0 %v699
    %1819 = vmatpush.msra.mxu0 %v695
    %1820 = vmatpush.msra.mxu0 %v691
    %1821 = vmatpush.msra.mxu0 %v687
    %1822 = vmatpush.msra.mxu0 %v683
    %1823 = vmatpush.msra.mxu0 %v679
    %1824 = vmatpush.msra.mxu0 %v675
    %1825 = vmatpush.msra.mxu0 %v671
    %1826 = vmatpush.msra.mxu0 %v667
    %1827 = vmatpush.msra.mxu0 %v663
    %1828 = vmatpush.msra.mxu0 %v659
    %1829 = vmatpush.msra.mxu0 %v655
    %1830 = vmatpush.msra.mxu0 %v651
    %1831 = vmatpush.msra.mxu0 %v647
    %1832 = vmatmul.f32.gmra.mxu0 %v1802
    %v1833 = vpop.f32.mrf.mxu0
    %v1834 = vadd.f32 0.0, %v1833
    %1835 = vdwg.mxu0
    %1836 = vmatpush.msra.mxu0 %v708
    %1837 = vmatpush.msra.mxu0 %v704
    %1838 = vmatpush.msra.mxu0 %v700
    %1839 = vmatpush.msra.mxu0 %v696
    %1840 = vmatpush.msra.mxu0 %v692
    %1841 = vmatpush.msra.mxu0 %v688
    %1842 = vmatpush.msra.mxu0 %v684
    %1843 = vmatpush.msra.mxu0 %v680
    %1844 = vmatpush.msra.mxu0 %v676
    %1845 = vmatpush.msra.mxu0 %v672
    %1846 = vmatpush.msra.mxu0 %v668
    %1847 = vmatpush.msra.mxu0 %v664
    %1848 = vmatpush.msra.mxu0 %v660
    %1849 = vmatpush.msra.mxu0 %v656
    %1850 = vmatpush.msra.mxu0 %v652
    %1851 = vmatpush.msra.mxu0 %v648
    %1852 = vmatmul.f32.gmra.mxu0 %v1802
    %v1853 = vpop.f32.mrf.mxu0
    %v1854 = vadd.f32 0.0, %v1853
    %1855 = vdwg.mxu0
    %1856 = vmatpush.msra.mxu0 %v709
    %1857 = vmatpush.msra.mxu0 %v705
    %1858 = vmatpush.msra.mxu0 %v701
    %1859 = vmatpush.msra.mxu0 %v697
    %1860 = vmatpush.msra.mxu0 %v693
    %1861 = vmatpush.msra.mxu0 %v689
    %1862 = vmatpush.msra.mxu0 %v685
    %1863 = vmatpush.msra.mxu0 %v681
    %1864 = vmatpush.msra.mxu0 %v677
    %1865 = vmatpush.msra.mxu0 %v673
    %1866 = vmatpush.msra.mxu0 %v669
    %1867 = vmatpush.msra.mxu0 %v665
    %1868 = vmatpush.msra.mxu0 %v661
    %1869 = vmatpush.msra.mxu0 %v657
    %1870 = vmatpush.msra.mxu0 %v653
    %1871 = vmatpush.msra.mxu0 %v649
    %1872 = vmatmul.f32.gmra.mxu0 %v1802
    %v1873 = vpop.f32.mrf.mxu0
    %v1874 = vadd.f32 0.0, %v1873
    %1875 = vdwg.mxu0
    %1876 = vmatpush.msra.mxu0 %v710
    %1877 = vmatpush.msra.mxu0 %v706
    %1878 = vmatpush.msra.mxu0 %v702
    %1879 = vmatpush.msra.mxu0 %v698
    %1880 = vmatpush.msra.mxu0 %v694
    %1881 = vmatpush.msra.mxu0 %v690
    %1882 = vmatpush.msra.mxu0 %v686
    %1883 = vmatpush.msra.mxu0 %v682
    %1884 = vmatpush.msra.mxu0 %v678
    %1885 = vmatpush.msra.mxu0 %v674
    %1886 = vmatpush.msra.mxu0 %v670
    %1887 = vmatpush.msra.mxu0 %v666
    %1888 = vmatpush.msra.mxu0 %v662
    %1889 = vmatpush.msra.mxu0 %v658
    %1890 = vmatpush.msra.mxu0 %v654
    %1891 = vmatpush.msra.mxu0 %v650
    %1892 = vmatmul.f32.gmra.mxu0 %v1802
    %v1893 = vpop.f32.mrf.mxu0
    %v1894 = vadd.f32 0.0, %v1893
    %1895 = vdwg.mxu0
    %v1896 = vadd.f32 %v1806, %v1834
    %v1897 = vadd.f32 %v1807, %v1854
    %v1898 = vadd.f32 %v1808, %v1874
    %v1899 = vadd.f32 %v1809, %v1894
    %v1900 = vxor.u32 %v1896, 2147483648
    %v1901 = vmul.f32 %v1900, 1.442695
    %v1902 = vpow.pop %v1901
    %v1903 = vadd.f32 %v1902, 1.0
    %v1904 = vrcp.pop %v1903
    %v1905 = vmul.f32 %v1903, %v1904
    %v1906 = vsub.f32 1.0, %v1905
    %v1907 = vmul.f32 %v1904, %v1906
    %v1908 = vadd.f32 %v1904, %v1907
    %vm1909 = vweird.f32 %v1903
    %vm1910 = vweird.f32 %v1904
    %vm1911 = vmor %vm1909, %vm1910
    %v1912 = vsel %vm1911, %v1904, %v1908
    %v1913 = vand.u32 2147483647, %v1903
    %vm1914 = vcmp.eq.f32.partialorder %v1913, 8.507059e+37
    %v1915 = vand.u32 %v1903, 2147483648
    %v1916 = vor.u32 1.1754944e-38, %v1915
    %v1917 = vsel %vm1914, %v1916, %v1912
    %v1918 = vmul.f32 1.0, %v1917
    %v1919 = vxor.u32 %v1897, 2147483648
    %v1920 = vmul.f32 %v1919, 1.442695
    %v1921 = vpow.pop %v1920
    %v1922 = vadd.f32 %v1921, 1.0
    %v1923 = vrcp.pop %v1922
    %v1924 = vmul.f32 %v1922, %v1923
    %v1925 = vsub.f32 1.0, %v1924
    %v1926 = vmul.f32 %v1923, %v1925
    %v1927 = vadd.f32 %v1923, %v1926
    %vm1928 = vweird.f32 %v1922
    %vm1929 = vweird.f32 %v1923
    %vm1930 = vmor %vm1928, %vm1929
    %v1931 = vsel %vm1930, %v1923, %v1927
    %v1932 = vand.u32 2147483647, %v1922
    %vm1933 = vcmp.eq.f32.partialorder %v1932, 8.507059e+37
    %v1934 = vand.u32 %v1922, 2147483648
    %v1935 = vor.u32 1.1754944e-38, %v1934
    %v1936 = vsel %vm1933, %v1935, %v1931
    %v1937 = vmul.f32 1.0, %v1936
    %v1938 = vtanh.pop %v1898
    %v1939 = vxor.u32 %v1899, 2147483648
    %v1940 = vmul.f32 %v1939, 1.442695
    %v1941 = vpow.pop %v1940
    %v1942 = vadd.f32 %v1941, 1.0
    %v1943 = vrcp.pop %v1942
    %v1944 = vmul.f32 %v1942, %v1943
    %v1945 = vsub.f32 1.0, %v1944
    %v1946 = vmul.f32 %v1943, %v1945
    %v1947 = vadd.f32 %v1943, %v1946
    %vm1948 = vweird.f32 %v1942
    %vm1949 = vweird.f32 %v1943
    %vm1950 = vmor %vm1948, %vm1949
    %v1951 = vsel %vm1950, %v1943, %v1947
    %v1952 = vand.u32 2147483647, %v1942
    %vm1953 = vcmp.eq.f32.partialorder %v1952, 8.507059e+37
    %v1954 = vand.u32 %v1942, 2147483648
    %v1955 = vor.u32 1.1754944e-38, %v1954
    %v1956 = vsel %vm1953, %v1955, %v1951
    %v1957 = vmul.f32 1.0, %v1956
    %v1958 = vmul.f32 %v1937, %v1780
    %v1959 = vmul.f32 %v1918, %v1938
    %v1960 = vadd.f32 %v1958, %v1959
    %1961 = vmatpush.msra.mxu0 %v633
    %1962 = vmatpush.msra.mxu0 %v632
    %1963 = vmatpush.msra.mxu0 %v631
    %1964 = vmatpush.msra.mxu0 %v630
    %1965 = vmatpush.msra.mxu0 %v629
    %1966 = vmatpush.msra.mxu0 %v628
    %1967 = vmatpush.msra.mxu0 %v627
    %1968 = vmatpush.msra.mxu0 %v626
    %1969 = vmatpush.msra.mxu0 %v625
    %1970 = vmatpush.msra.mxu0 %v624
    %1971 = vmatpush.msra.mxu0 %v623
    %1972 = vmatpush.msra.mxu0 %v622
    %1973 = vmatpush.msra.mxu0 %v621
    %1974 = vmatpush.msra.mxu0 %v620
    %1975 = vmatpush.msra.mxu0 %v619
    %1976 = vmatpush.msra.mxu0 %v618
    %1977 = vmatmul.f32.gmra.mxu0 %v1960
    %v1978 = vpop.f32.mrf.mxu0
    %v1979 = vadd.f32 0.0, %v1978
    %1980 = vdwg.mxu0
    %v1981 = vtanh.pop %v1979
    %v1982 = vmul.f32 %v1957, %v1981
    %1983 = vmatpush.msra.mxu0 %v938
    %1984 = vmatpush.msra.mxu0 %v934
    %1985 = vmatpush.msra.mxu0 %v930
    %1986 = vmatpush.msra.mxu0 %v926
    %1987 = vmatpush.msra.mxu0 %v922
    %1988 = vmatpush.msra.mxu0 %v918
    %1989 = vmatpush.msra.mxu0 %v914
    %1990 = vmatpush.msra.mxu0 %v910
    %1991 = vmatpush.msra.mxu0 %v906
    %1992 = vmatpush.msra.mxu0 %v902
    %1993 = vmatpush.msra.mxu0 %v898
    %1994 = vmatpush.msra.mxu0 %v894
    %1995 = vmatpush.msra.mxu0 %v890
    %1996 = vmatpush.msra.mxu0 %v886
    %1997 = vmatpush.msra.mxu0 %v882
    %1998 = vmatpush.msra.mxu0 %v878
    %1999 = vmatmul.f32.gmra.mxu0 %v1982
    %v2000 = vpop.f32.mrf.mxu0
    %v2001 = vadd.f32 0.0, %v2000
    %2002 = vdwg.mxu0
    %2003 = vmatpush.msra.mxu0 %v939
    %2004 = vmatpush.msra.mxu0 %v935
    %2005 = vmatpush.msra.mxu0 %v931
    %2006 = vmatpush.msra.mxu0 %v927
    %2007 = vmatpush.msra.mxu0 %v923
    %2008 = vmatpush.msra.mxu0 %v919
    %2009 = vmatpush.msra.mxu0 %v915
    %2010 = vmatpush.msra.mxu0 %v911
    %2011 = vmatpush.msra.mxu0 %v907
    %2012 = vmatpush.msra.mxu0 %v903
    %2013 = vmatpush.msra.mxu0 %v899
    %2014 = vmatpush.msra.mxu0 %v895
    %2015 = vmatpush.msra.mxu0 %v891
    %2016 = vmatpush.msra.mxu0 %v887
    %2017 = vmatpush.msra.mxu0 %v883
    %2018 = vmatpush.msra.mxu0 %v879
    %2019 = vmatmul.f32.gmra.mxu0 %v1982
    %v2020 = vpop.f32.mrf.mxu0
    %v2021 = vadd.f32 0.0, %v2020
    %2022 = vdwg.mxu0
    %2023 = vmatpush.msra.mxu0 %v940
    %2024 = vmatpush.msra.mxu0 %v936
    %2025 = vmatpush.msra.mxu0 %v932
    %2026 = vmatpush.msra.mxu0 %v928
    %2027 = vmatpush.msra.mxu0 %v924
    %2028 = vmatpush.msra.mxu0 %v920
    %2029 = vmatpush.msra.mxu0 %v916
    %2030 = vmatpush.msra.mxu0 %v912
    %2031 = vmatpush.msra.mxu0 %v908
    %2032 = vmatpush.msra.mxu0 %v904
    %2033 = vmatpush.msra.mxu0 %v900
    %2034 = vmatpush.msra.mxu0 %v896
    %2035 = vmatpush.msra.mxu0 %v892
    %2036 = vmatpush.msra.mxu0 %v888
    %2037 = vmatpush.msra.mxu0 %v884
    %2038 = vmatpush.msra.mxu0 %v880
    %2039 = vmatmul.f32.gmra.mxu0 %v1982
    %v2040 = vpop.f32.mrf.mxu0
    %v2041 = vadd.f32 0.0, %v2040
    %2042 = vdwg.mxu0
    %2043 = vmatpush.msra.mxu0 %v941
    %2044 = vmatpush.msra.mxu0 %v937
    %2045 = vmatpush.msra.mxu0 %v933
    %2046 = vmatpush.msra.mxu0 %v929
    %2047 = vmatpush.msra.mxu0 %v925
    %2048 = vmatpush.msra.mxu0 %v921
    %2049 = vmatpush.msra.mxu0 %v917
    %2050 = vmatpush.msra.mxu0 %v913
    %2051 = vmatpush.msra.mxu0 %v909
    %2052 = vmatpush.msra.mxu0 %v905
    %2053 = vmatpush.msra.mxu0 %v901
    %2054 = vmatpush.msra.mxu0 %v897
    %2055 = vmatpush.msra.mxu0 %v893
    %2056 = vmatpush.msra.mxu0 %v889
    %2057 = vmatpush.msra.mxu0 %v885
    %2058 = vmatpush.msra.mxu0 %v881
    %2059 = vmatmul.f32.gmra.mxu0 %v1982
    %v2060 = vpop.f32.mrf.mxu0
    %v2061 = vadd.f32 0.0, %v2060
    %2062 = vdwg.mxu0
    %v2063 = vadd.f32 %v1812, %v2001
    %v2064 = vadd.f32 %v1813, %v2021
    %v2065 = vadd.f32 %v1814, %v2041
    %v2066 = vadd.f32 %v1815, %v2061
    %v2067 = vxor.u32 %v2063, 2147483648
    %v2068 = vmul.f32 %v2067, 1.442695
    %v2069 = vpow.pop %v2068
    %v2070 = vadd.f32 %v2069, 1.0
    %v2071 = vrcp.pop %v2070
    %v2072 = vmul.f32 %v2070, %v2071
    %v2073 = vsub.f32 1.0, %v2072
    %v2074 = vmul.f32 %v2071, %v2073
    %v2075 = vadd.f32 %v2071, %v2074
    %vm2076 = vweird.f32 %v2070
    %vm2077 = vweird.f32 %v2071
    %vm2078 = vmor %vm2076, %vm2077
    %v2079 = vsel %vm2078, %v2071, %v2075
    %v2080 = vand.u32 2147483647, %v2070
    %vm2081 = vcmp.eq.f32.partialorder %v2080, 8.507059e+37
    %v2082 = vand.u32 %v2070, 2147483648
    %v2083 = vor.u32 1.1754944e-38, %v2082
    %v2084 = vsel %vm2081, %v2083, %v2079
    %v2085 = vmul.f32 1.0, %v2084
    %v2086 = vxor.u32 %v2064, 2147483648
    %v2087 = vmul.f32 %v2086, 1.442695
    %v2088 = vpow.pop %v2087
    %v2089 = vadd.f32 %v2088, 1.0
    %v2090 = vrcp.pop %v2089
    %v2091 = vmul.f32 %v2089, %v2090
    %v2092 = vsub.f32 1.0, %v2091
    %v2093 = vmul.f32 %v2090, %v2092
    %v2094 = vadd.f32 %v2090, %v2093
    %vm2095 = vweird.f32 %v2089
    %vm2096 = vweird.f32 %v2090
    %vm2097 = vmor %vm2095, %vm2096
    %v2098 = vsel %vm2097, %v2090, %v2094
    %v2099 = vand.u32 2147483647, %v2089
    %vm2100 = vcmp.eq.f32.partialorder %v2099, 8.507059e+37
    %v2101 = vand.u32 %v2089, 2147483648
    %v2102 = vor.u32 1.1754944e-38, %v2101
    %v2103 = vsel %vm2100, %v2102, %v2098
    %v2104 = vmul.f32 1.0, %v2103
    %v2105 = vtanh.pop %v2065
    %v2106 = vxor.u32 %v2066, 2147483648
    %v2107 = vmul.f32 %v2106, 1.442695
    %v2108 = vpow.pop %v2107
    %v2109 = vadd.f32 %v2108, 1.0
    %v2110 = vrcp.pop %v2109
    %v2111 = vmul.f32 %v2109, %v2110
    %v2112 = vsub.f32 1.0, %v2111
    %v2113 = vmul.f32 %v2110, %v2112
    %v2114 = vadd.f32 %v2110, %v2113
    %vm2115 = vweird.f32 %v2109
    %vm2116 = vweird.f32 %v2110
    %vm2117 = vmor %vm2115, %vm2116
    %v2118 = vsel %vm2117, %v2110, %v2114
    %v2119 = vand.u32 2147483647, %v2109
    %vm2120 = vcmp.eq.f32.partialorder %v2119, 8.507059e+37
    %v2121 = vand.u32 %v2109, 2147483648
    %v2122 = vor.u32 1.1754944e-38, %v2121
    %v2123 = vsel %vm2120, %v2122, %v2118
    %v2124 = vmul.f32 1.0, %v2123
    %v2125 = vmul.f32 %v2104, %v1960
    %v2126 = vmul.f32 %v2085, %v2105
    %v2127 = vadd.f32 %v2125, %v2126
    %2128 = vmatpush.msra.mxu0 %v633
    %2129 = vmatpush.msra.mxu0 %v632
    %2130 = vmatpush.msra.mxu0 %v631
    %2131 = vmatpush.msra.mxu0 %v630
    %2132 = vmatpush.msra.mxu0 %v629
    %2133 = vmatpush.msra.mxu0 %v628
    %2134 = vmatpush.msra.mxu0 %v627
    %2135 = vmatpush.msra.mxu0 %v626
    %2136 = vmatpush.msra.mxu0 %v625
    %2137 = vmatpush.msra.mxu0 %v624
    %2138 = vmatpush.msra.mxu0 %v623
    %2139 = vmatpush.msra.mxu0 %v622
    %2140 = vmatpush.msra.mxu0 %v621
    %2141 = vmatpush.msra.mxu0 %v620
    %2142 = vmatpush.msra.mxu0 %v619
    %2143 = vmatpush.msra.mxu0 %v618
    %2144 = vmatmul.f32.gmra.mxu0 %v2127
    %v2145 = vpop.f32.mrf.mxu0
    %v2146 = vadd.f32 0.0, %v2145
    %2147 = vdwg.mxu0
    %v2148 = vtanh.pop %v2146
    %v2149 = vmul.f32 %v2124, %v2148
    %s2150 = smul.u32 4, 4
    %s2151 = smul.addr %s2150, 8
    %s2152 = scalar_lea.vmem [#allocation2], %s2151
    %v2153 = vld [vmem:[%s2152] sm:$0xff]
    %v2154 = vld [vmem:[%s2152 + $0x8] sm:$0xff]
    %v2155 = vld [vmem:[%s2152 + $0x10] sm:$0xff]
    %v2156 = vld [vmem:[%s2152 + $0x18] sm:$0xff]
    %s2157 = smul.addr %s2150, 8
    %s2158 = scalar_lea.vmem [#allocation3], %s2157
    %v2159 = vld [vmem:[%s2158] sm:$0xff]
    %v2160 = vld [vmem:[%s2158 + $0x8] sm:$0xff]
    %v2161 = vld [vmem:[%s2158 + $0x10] sm:$0xff]
    %v2162 = vld [vmem:[%s2158 + $0x18] sm:$0xff]
    %2163 = vmatpush.msra.mxu0 %v707
    %2164 = vmatpush.msra.mxu0 %v703
    %2165 = vmatpush.msra.mxu0 %v699
    %2166 = vmatpush.msra.mxu0 %v695
    %2167 = vmatpush.msra.mxu0 %v691
    %2168 = vmatpush.msra.mxu0 %v687
    %2169 = vmatpush.msra.mxu0 %v683
    %2170 = vmatpush.msra.mxu0 %v679
    %2171 = vmatpush.msra.mxu0 %v675
    %2172 = vmatpush.msra.mxu0 %v671
    %2173 = vmatpush.msra.mxu0 %v667
    %2174 = vmatpush.msra.mxu0 %v663
    %2175 = vmatpush.msra.mxu0 %v659
    %2176 = vmatpush.msra.mxu0 %v655
    %2177 = vmatpush.msra.mxu0 %v651
    %2178 = vmatpush.msra.mxu0 %v647
    %2179 = vmatmul.f32.gmra.mxu0 %v2149
    %v2180 = vpop.f32.mrf.mxu0
    %v2181 = vadd.f32 0.0, %v2180
    %2182 = vdwg.mxu0
    %2183 = vmatpush.msra.mxu0 %v708
    %2184 = vmatpush.msra.mxu0 %v704
    %2185 = vmatpush.msra.mxu0 %v700
    %2186 = vmatpush.msra.mxu0 %v696
    %2187 = vmatpush.msra.mxu0 %v692
    %2188 = vmatpush.msra.mxu0 %v688
    %2189 = vmatpush.msra.mxu0 %v684
    %2190 = vmatpush.msra.mxu0 %v680
    %2191 = vmatpush.msra.mxu0 %v676
    %2192 = vmatpush.msra.mxu0 %v672
    %2193 = vmatpush.msra.mxu0 %v668
    %2194 = vmatpush.msra.mxu0 %v664
    %2195 = vmatpush.msra.mxu0 %v660
    %2196 = vmatpush.msra.mxu0 %v656
    %2197 = vmatpush.msra.mxu0 %v652
    %2198 = vmatpush.msra.mxu0 %v648
    %2199 = vmatmul.f32.gmra.mxu0 %v2149
    %v2200 = vpop.f32.mrf.mxu0
    %v2201 = vadd.f32 0.0, %v2200
    %2202 = vdwg.mxu0
    %2203 = vmatpush.msra.mxu0 %v709
    %2204 = vmatpush.msra.mxu0 %v705
    %2205 = vmatpush.msra.mxu0 %v701
    %2206 = vmatpush.msra.mxu0 %v697
    %2207 = vmatpush.msra.mxu0 %v693
    %2208 = vmatpush.msra.mxu0 %v689
    %2209 = vmatpush.msra.mxu0 %v685
    %2210 = vmatpush.msra.mxu0 %v681
    %2211 = vmatpush.msra.mxu0 %v677
    %2212 = vmatpush.msra.mxu0 %v673
    %2213 = vmatpush.msra.mxu0 %v669
    %2214 = vmatpush.msra.mxu0 %v665
    %2215 = vmatpush.msra.mxu0 %v661
    %2216 = vmatpush.msra.mxu0 %v657
    %2217 = vmatpush.msra.mxu0 %v653
    %2218 = vmatpush.msra.mxu0 %v649
    %2219 = vmatmul.f32.gmra.mxu0 %v2149
    %v2220 = vpop.f32.mrf.mxu0
    %v2221 = vadd.f32 0.0, %v2220
    %2222 = vdwg.mxu0
    %2223 = vmatpush.msra.mxu0 %v710
    %2224 = vmatpush.msra.mxu0 %v706
    %2225 = vmatpush.msra.mxu0 %v702
    %2226 = vmatpush.msra.mxu0 %v698
    %2227 = vmatpush.msra.mxu0 %v694
    %2228 = vmatpush.msra.mxu0 %v690
    %2229 = vmatpush.msra.mxu0 %v686
    %2230 = vmatpush.msra.mxu0 %v682
    %2231 = vmatpush.msra.mxu0 %v678
    %2232 = vmatpush.msra.mxu0 %v674
    %2233 = vmatpush.msra.mxu0 %v670
    %2234 = vmatpush.msra.mxu0 %v666
    %2235 = vmatpush.msra.mxu0 %v662
    %2236 = vmatpush.msra.mxu0 %v658
    %2237 = vmatpush.msra.mxu0 %v654
    %2238 = vmatpush.msra.mxu0 %v650
    %2239 = vmatmul.f32.gmra.mxu0 %v2149
    %v2240 = vpop.f32.mrf.mxu0
    %v2241 = vadd.f32 0.0, %v2240
    %2242 = vdwg.mxu0
    %v2243 = vadd.f32 %v2153, %v2181
    %v2244 = vadd.f32 %v2154, %v2201
    %v2245 = vadd.f32 %v2155, %v2221
    %v2246 = vadd.f32 %v2156, %v2241
    %v2247 = vxor.u32 %v2243, 2147483648
    %v2248 = vmul.f32 %v2247, 1.442695
    %v2249 = vpow.pop %v2248
    %v2250 = vadd.f32 %v2249, 1.0
    %v2251 = vrcp.pop %v2250
    %v2252 = vmul.f32 %v2250, %v2251
    %v2253 = vsub.f32 1.0, %v2252
    %v2254 = vmul.f32 %v2251, %v2253
    %v2255 = vadd.f32 %v2251, %v2254
    %vm2256 = vweird.f32 %v2250
    %vm2257 = vweird.f32 %v2251
    %vm2258 = vmor %vm2256, %vm2257
    %v2259 = vsel %vm2258, %v2251, %v2255
    %v2260 = vand.u32 2147483647, %v2250
    %vm2261 = vcmp.eq.f32.partialorder %v2260, 8.507059e+37
    %v2262 = vand.u32 %v2250, 2147483648
    %v2263 = vor.u32 1.1754944e-38, %v2262
    %v2264 = vsel %vm2261, %v2263, %v2259
    %v2265 = vmul.f32 1.0, %v2264
    %v2266 = vxor.u32 %v2244, 2147483648
    %v2267 = vmul.f32 %v2266, 1.442695
    %v2268 = vpow.pop %v2267
    %v2269 = vadd.f32 %v2268, 1.0
    %v2270 = vrcp.pop %v2269
    %v2271 = vmul.f32 %v2269, %v2270
    %v2272 = vsub.f32 1.0, %v2271
    %v2273 = vmul.f32 %v2270, %v2272
    %v2274 = vadd.f32 %v2270, %v2273
    %vm2275 = vweird.f32 %v2269
    %vm2276 = vweird.f32 %v2270
    %vm2277 = vmor %vm2275, %vm2276
    %v2278 = vsel %vm2277, %v2270, %v2274
    %v2279 = vand.u32 2147483647, %v2269
    %vm2280 = vcmp.eq.f32.partialorder %v2279, 8.507059e+37
    %v2281 = vand.u32 %v2269, 2147483648
    %v2282 = vor.u32 1.1754944e-38, %v2281
    %v2283 = vsel %vm2280, %v2282, %v2278
    %v2284 = vmul.f32 1.0, %v2283
    %v2285 = vtanh.pop %v2245
    %v2286 = vxor.u32 %v2246, 2147483648
    %v2287 = vmul.f32 %v2286, 1.442695
    %v2288 = vpow.pop %v2287
    %v2289 = vadd.f32 %v2288, 1.0
    %v2290 = vrcp.pop %v2289
    %v2291 = vmul.f32 %v2289, %v2290
    %v2292 = vsub.f32 1.0, %v2291
    %v2293 = vmul.f32 %v2290, %v2292
    %v2294 = vadd.f32 %v2290, %v2293
    %vm2295 = vweird.f32 %v2289
    %vm2296 = vweird.f32 %v2290
    %vm2297 = vmor %vm2295, %vm2296
    %v2298 = vsel %vm2297, %v2290, %v2294
    %v2299 = vand.u32 2147483647, %v2289
    %vm2300 = vcmp.eq.f32.partialorder %v2299, 8.507059e+37
    %v2301 = vand.u32 %v2289, 2147483648
    %v2302 = vor.u32 1.1754944e-38, %v2301
    %v2303 = vsel %vm2300, %v2302, %v2298
    %v2304 = vmul.f32 1.0, %v2303
    %v2305 = vmul.f32 %v2284, %v2127
    %v2306 = vmul.f32 %v2265, %v2285
    %v2307 = vadd.f32 %v2305, %v2306
    %2308 = vmatpush.msra.mxu0 %v633
    %2309 = vmatpush.msra.mxu0 %v632
    %2310 = vmatpush.msra.mxu0 %v631
    %2311 = vmatpush.msra.mxu0 %v630
    %2312 = vmatpush.msra.mxu0 %v629
    %2313 = vmatpush.msra.mxu0 %v628
    %2314 = vmatpush.msra.mxu0 %v627
    %2315 = vmatpush.msra.mxu0 %v626
    %2316 = vmatpush.msra.mxu0 %v625
    %2317 = vmatpush.msra.mxu0 %v624
    %2318 = vmatpush.msra.mxu0 %v623
    %2319 = vmatpush.msra.mxu0 %v622
    %2320 = vmatpush.msra.mxu0 %v621
    %2321 = vmatpush.msra.mxu0 %v620
    %2322 = vmatpush.msra.mxu0 %v619
    %2323 = vmatpush.msra.mxu0 %v618
    %2324 = vmatmul.f32.gmra.mxu0 %v2307
    %v2325 = vpop.f32.mrf.mxu0
    %v2326 = vadd.f32 0.0, %v2325
    %2327 = vdwg.mxu0
    %v2328 = vtanh.pop %v2326
    %v2329 = vmul.f32 %v2304, %v2328
    %2330 = vmatpush.msra.mxu0 %v938
    %2331 = vmatpush.msra.mxu0 %v934
    %2332 = vmatpush.msra.mxu0 %v930
    %2333 = vmatpush.msra.mxu0 %v926
    %2334 = vmatpush.msra.mxu0 %v922
    %2335 = vmatpush.msra.mxu0 %v918
    %2336 = vmatpush.msra.mxu0 %v914
    %2337 = vmatpush.msra.mxu0 %v910
    %2338 = vmatpush.msra.mxu0 %v906
    %2339 = vmatpush.msra.mxu0 %v902
    %2340 = vmatpush.msra.mxu0 %v898
    %2341 = vmatpush.msra.mxu0 %v894
    %2342 = vmatpush.msra.mxu0 %v890
    %2343 = vmatpush.msra.mxu0 %v886
    %2344 = vmatpush.msra.mxu0 %v882
    %2345 = vmatpush.msra.mxu0 %v878
    %2346 = vmatmul.f32.gmra.mxu0 %v2329
    %v2347 = vpop.f32.mrf.mxu0
    %v2348 = vadd.f32 0.0, %v2347
    %2349 = vdwg.mxu0
    %2350 = vmatpush.msra.mxu0 %v939
    %2351 = vmatpush.msra.mxu0 %v935
    %2352 = vmatpush.msra.mxu0 %v931
    %2353 = vmatpush.msra.mxu0 %v927
    %2354 = vmatpush.msra.mxu0 %v923
    %2355 = vmatpush.msra.mxu0 %v919
    %2356 = vmatpush.msra.mxu0 %v915
    %2357 = vmatpush.msra.mxu0 %v911
    %2358 = vmatpush.msra.mxu0 %v907
    %2359 = vmatpush.msra.mxu0 %v903
    %2360 = vmatpush.msra.mxu0 %v899
    %2361 = vmatpush.msra.mxu0 %v895
    %2362 = vmatpush.msra.mxu0 %v891
    %2363 = vmatpush.msra.mxu0 %v887
    %2364 = vmatpush.msra.mxu0 %v883
    %2365 = vmatpush.msra.mxu0 %v879
    %2366 = vmatmul.f32.gmra.mxu0 %v2329
    %v2367 = vpop.f32.mrf.mxu0
    %v2368 = vadd.f32 0.0, %v2367
    %2369 = vdwg.mxu0
    %2370 = vmatpush.msra.mxu0 %v940
    %2371 = vmatpush.msra.mxu0 %v936
    %2372 = vmatpush.msra.mxu0 %v932
    %2373 = vmatpush.msra.mxu0 %v928
    %2374 = vmatpush.msra.mxu0 %v924
    %2375 = vmatpush.msra.mxu0 %v920
    %2376 = vmatpush.msra.mxu0 %v916
    %2377 = vmatpush.msra.mxu0 %v912
    %2378 = vmatpush.msra.mxu0 %v908
    %2379 = vmatpush.msra.mxu0 %v904
    %2380 = vmatpush.msra.mxu0 %v900
    %2381 = vmatpush.msra.mxu0 %v896
    %2382 = vmatpush.msra.mxu0 %v892
    %2383 = vmatpush.msra.mxu0 %v888
    %2384 = vmatpush.msra.mxu0 %v884
    %2385 = vmatpush.msra.mxu0 %v880
    %2386 = vmatmul.f32.gmra.mxu0 %v2329
    %v2387 = vpop.f32.mrf.mxu0
    %v2388 = vadd.f32 0.0, %v2387
    %2389 = vdwg.mxu0
    %2390 = vmatpush.msra.mxu0 %v941
    %2391 = vmatpush.msra.mxu0 %v937
    %2392 = vmatpush.msra.mxu0 %v933
    %2393 = vmatpush.msra.mxu0 %v929
    %2394 = vmatpush.msra.mxu0 %v925
    %2395 = vmatpush.msra.mxu0 %v921
    %2396 = vmatpush.msra.mxu0 %v917
    %2397 = vmatpush.msra.mxu0 %v913
    %2398 = vmatpush.msra.mxu0 %v909
    %2399 = vmatpush.msra.mxu0 %v905
    %2400 = vmatpush.msra.mxu0 %v901
    %2401 = vmatpush.msra.mxu0 %v897
    %2402 = vmatpush.msra.mxu0 %v893
    %2403 = vmatpush.msra.mxu0 %v889
    %2404 = vmatpush.msra.mxu0 %v885
    %2405 = vmatpush.msra.mxu0 %v881
    %2406 = vmatmul.f32.gmra.mxu0 %v2329
    %v2407 = vpop.f32.mrf.mxu0
    %v2408 = vadd.f32 0.0, %v2407
    %2409 = vdwg.mxu0
    %v2410 = vadd.f32 %v2159, %v2348
    %v2411 = vadd.f32 %v2160, %v2368
    %v2412 = vadd.f32 %v2161, %v2388
    %v2413 = vadd.f32 %v2162, %v2408
    %v2414 = vxor.u32 %v2410, 2147483648
    %v2415 = vmul.f32 %v2414, 1.442695
    %v2416 = vpow.pop %v2415
    %v2417 = vadd.f32 %v2416, 1.0
    %v2418 = vrcp.pop %v2417
    %v2419 = vmul.f32 %v2417, %v2418
    %v2420 = vsub.f32 1.0, %v2419
    %v2421 = vmul.f32 %v2418, %v2420
    %v2422 = vadd.f32 %v2418, %v2421
    %vm2423 = vweird.f32 %v2417
    %vm2424 = vweird.f32 %v2418
    %vm2425 = vmor %vm2423, %vm2424
    %v2426 = vsel %vm2425, %v2418, %v2422
    %v2427 = vand.u32 2147483647, %v2417
    %vm2428 = vcmp.eq.f32.partialorder %v2427, 8.507059e+37
    %v2429 = vand.u32 %v2417, 2147483648
    %v2430 = vor.u32 1.1754944e-38, %v2429
    %v2431 = vsel %vm2428, %v2430, %v2426
    %v2432 = vmul.f32 1.0, %v2431
    %v2433 = vxor.u32 %v2411, 2147483648
    %v2434 = vmul.f32 %v2433, 1.442695
    %v2435 = vpow.pop %v2434
    %v2436 = vadd.f32 %v2435, 1.0
    %v2437 = vrcp.pop %v2436
    %v2438 = vmul.f32 %v2436, %v2437
    %v2439 = vsub.f32 1.0, %v2438
    %v2440 = vmul.f32 %v2437, %v2439
    %v2441 = vadd.f32 %v2437, %v2440
    %vm2442 = vweird.f32 %v2436
    %vm2443 = vweird.f32 %v2437
    %vm2444 = vmor %vm2442, %vm2443
    %v2445 = vsel %vm2444, %v2437, %v2441
    %v2446 = vand.u32 2147483647, %v2436
    %vm2447 = vcmp.eq.f32.partialorder %v2446, 8.507059e+37
    %v2448 = vand.u32 %v2436, 2147483648
    %v2449 = vor.u32 1.1754944e-38, %v2448
    %v2450 = vsel %vm2447, %v2449, %v2445
    %v2451 = vmul.f32 1.0, %v2450
    %v2452 = vtanh.pop %v2412
    %v2453 = vxor.u32 %v2413, 2147483648
    %v2454 = vmul.f32 %v2453, 1.442695
    %v2455 = vpow.pop %v2454
    %v2456 = vadd.f32 %v2455, 1.0
    %v2457 = vrcp.pop %v2456
    %v2458 = vmul.f32 %v2456, %v2457
    %v2459 = vsub.f32 1.0, %v2458
    %v2460 = vmul.f32 %v2457, %v2459
    %v2461 = vadd.f32 %v2457, %v2460
    %vm2462 = vweird.f32 %v2456
    %vm2463 = vweird.f32 %v2457
    %vm2464 = vmor %vm2462, %vm2463
    %v2465 = vsel %vm2464, %v2457, %v2461
    %v2466 = vand.u32 2147483647, %v2456
    %vm2467 = vcmp.eq.f32.partialorder %v2466, 8.507059e+37
    %v2468 = vand.u32 %v2456, 2147483648
    %v2469 = vor.u32 1.1754944e-38, %v2468
    %v2470 = vsel %vm2467, %v2469, %v2465
    %v2471 = vmul.f32 1.0, %v2470
    %v2472 = vmul.f32 %v2451, %v2307
    %v2473 = vmul.f32 %v2432, %v2452
    %v2474 = vadd.f32 %v2472, %v2473
    %2475 = vmatpush.msra.mxu0 %v633
    %2476 = vmatpush.msra.mxu0 %v632
    %2477 = vmatpush.msra.mxu0 %v631
    %2478 = vmatpush.msra.mxu0 %v630
    %2479 = vmatpush.msra.mxu0 %v629
    %2480 = vmatpush.msra.mxu0 %v628
    %2481 = vmatpush.msra.mxu0 %v627
    %2482 = vmatpush.msra.mxu0 %v626
    %2483 = vmatpush.msra.mxu0 %v625
    %2484 = vmatpush.msra.mxu0 %v624
    %2485 = vmatpush.msra.mxu0 %v623
    %2486 = vmatpush.msra.mxu0 %v622
    %2487 = vmatpush.msra.mxu0 %v621
    %2488 = vmatpush.msra.mxu0 %v620
    %2489 = vmatpush.msra.mxu0 %v619
    %2490 = vmatpush.msra.mxu0 %v618
    %2491 = vmatmul.f32.gmra.mxu0 %v2474
    %v2492 = vpop.f32.mrf.mxu0
    %v2493 = vadd.f32 0.0, %v2492
    %2494 = vdwg.mxu0
    %v2495 = vtanh.pop %v2493
    %v2496 = vmul.f32 %v2471, %v2495
    %s2497 = smul.u32 5, 4
    %s2498 = smul.addr %s2497, 8
    %s2499 = scalar_lea.vmem [#allocation2], %s2498
    %v2500 = vld [vmem:[%s2499] sm:$0xff]
    %v2501 = vld [vmem:[%s2499 + $0x8] sm:$0xff]
    %v2502 = vld [vmem:[%s2499 + $0x10] sm:$0xff]
    %v2503 = vld [vmem:[%s2499 + $0x18] sm:$0xff]
    %s2504 = smul.addr %s2497, 8
    %s2505 = scalar_lea.vmem [#allocation3], %s2504
    %v2506 = vld [vmem:[%s2505] sm:$0xff]
    %v2507 = vld [vmem:[%s2505 + $0x8] sm:$0xff]
    %v2508 = vld [vmem:[%s2505 + $0x10] sm:$0xff]
    %v2509 = vld [vmem:[%s2505 + $0x18] sm:$0xff]
    %2510 = vmatpush.msra.mxu0 %v707
    %2511 = vmatpush.msra.mxu0 %v703
    %2512 = vmatpush.msra.mxu0 %v699
    %2513 = vmatpush.msra.mxu0 %v695
    %2514 = vmatpush.msra.mxu0 %v691
    %2515 = vmatpush.msra.mxu0 %v687
    %2516 = vmatpush.msra.mxu0 %v683
    %2517 = vmatpush.msra.mxu0 %v679
    %2518 = vmatpush.msra.mxu0 %v675
    %2519 = vmatpush.msra.mxu0 %v671
    %2520 = vmatpush.msra.mxu0 %v667
    %2521 = vmatpush.msra.mxu0 %v663
    %2522 = vmatpush.msra.mxu0 %v659
    %2523 = vmatpush.msra.mxu0 %v655
    %2524 = vmatpush.msra.mxu0 %v651
    %2525 = vmatpush.msra.mxu0 %v647
    %2526 = vmatmul.f32.gmra.mxu0 %v2496
    %v2527 = vpop.f32.mrf.mxu0
    %v2528 = vadd.f32 0.0, %v2527
    %2529 = vdwg.mxu0
    %2530 = vmatpush.msra.mxu0 %v708
    %2531 = vmatpush.msra.mxu0 %v704
    %2532 = vmatpush.msra.mxu0 %v700
    %2533 = vmatpush.msra.mxu0 %v696
    %2534 = vmatpush.msra.mxu0 %v692
    %2535 = vmatpush.msra.mxu0 %v688
    %2536 = vmatpush.msra.mxu0 %v684
    %2537 = vmatpush.msra.mxu0 %v680
    %2538 = vmatpush.msra.mxu0 %v676
    %2539 = vmatpush.msra.mxu0 %v672
    %2540 = vmatpush.msra.mxu0 %v668
    %2541 = vmatpush.msra.mxu0 %v664
    %2542 = vmatpush.msra.mxu0 %v660
    %2543 = vmatpush.msra.mxu0 %v656
    %2544 = vmatpush.msra.mxu0 %v652
    %2545 = vmatpush.msra.mxu0 %v648
    %2546 = vmatmul.f32.gmra.mxu0 %v2496
    %v2547 = vpop.f32.mrf.mxu0
    %v2548 = vadd.f32 0.0, %v2547
    %2549 = vdwg.mxu0
    %2550 = vmatpush.msra.mxu0 %v709
    %2551 = vmatpush.msra.mxu0 %v705
    %2552 = vmatpush.msra.mxu0 %v701
    %2553 = vmatpush.msra.mxu0 %v697
    %2554 = vmatpush.msra.mxu0 %v693
    %2555 = vmatpush.msra.mxu0 %v689
    %2556 = vmatpush.msra.mxu0 %v685
    %2557 = vmatpush.msra.mxu0 %v681
    %2558 = vmatpush.msra.mxu0 %v677
    %2559 = vmatpush.msra.mxu0 %v673
    %2560 = vmatpush.msra.mxu0 %v669
    %2561 = vmatpush.msra.mxu0 %v665
    %2562 = vmatpush.msra.mxu0 %v661
    %2563 = vmatpush.msra.mxu0 %v657
    %2564 = vmatpush.msra.mxu0 %v653
    %2565 = vmatpush.msra.mxu0 %v649
    %2566 = vmatmul.f32.gmra.mxu0 %v2496
    %v2567 = vpop.f32.mrf.mxu0
    %v2568 = vadd.f32 0.0, %v2567
    %2569 = vdwg.mxu0
    %2570 = vmatpush.msra.mxu0 %v710
    %2571 = vmatpush.msra.mxu0 %v706
    %2572 = vmatpush.msra.mxu0 %v702
    %2573 = vmatpush.msra.mxu0 %v698
    %2574 = vmatpush.msra.mxu0 %v694
    %2575 = vmatpush.msra.mxu0 %v690
    %2576 = vmatpush.msra.mxu0 %v686
    %2577 = vmatpush.msra.mxu0 %v682
    %2578 = vmatpush.msra.mxu0 %v678
    %2579 = vmatpush.msra.mxu0 %v674
    %2580 = vmatpush.msra.mxu0 %v670
    %2581 = vmatpush.msra.mxu0 %v666
    %2582 = vmatpush.msra.mxu0 %v662
    %2583 = vmatpush.msra.mxu0 %v658
    %2584 = vmatpush.msra.mxu0 %v654
    %2585 = vmatpush.msra.mxu0 %v650
    %2586 = vmatmul.f32.gmra.mxu0 %v2496
    %v2587 = vpop.f32.mrf.mxu0
    %v2588 = vadd.f32 0.0, %v2587
    %2589 = vdwg.mxu0
    %v2590 = vadd.f32 %v2500, %v2528
    %v2591 = vadd.f32 %v2501, %v2548
    %v2592 = vadd.f32 %v2502, %v2568
    %v2593 = vadd.f32 %v2503, %v2588
    %v2594 = vxor.u32 %v2590, 2147483648
    %v2595 = vmul.f32 %v2594, 1.442695
    %v2596 = vpow.pop %v2595
    %v2597 = vadd.f32 %v2596, 1.0
    %v2598 = vrcp.pop %v2597
    %v2599 = vmul.f32 %v2597, %v2598
    %v2600 = vsub.f32 1.0, %v2599
    %v2601 = vmul.f32 %v2598, %v2600
    %v2602 = vadd.f32 %v2598, %v2601
    %vm2603 = vweird.f32 %v2597
    %vm2604 = vweird.f32 %v2598
    %vm2605 = vmor %vm2603, %vm2604
    %v2606 = vsel %vm2605, %v2598, %v2602
    %v2607 = vand.u32 2147483647, %v2597
    %vm2608 = vcmp.eq.f32.partialorder %v2607, 8.507059e+37
    %v2609 = vand.u32 %v2597, 2147483648
    %v2610 = vor.u32 1.1754944e-38, %v2609
    %v2611 = vsel %vm2608, %v2610, %v2606
    %v2612 = vmul.f32 1.0, %v2611
    %v2613 = vxor.u32 %v2591, 2147483648
    %v2614 = vmul.f32 %v2613, 1.442695
    %v2615 = vpow.pop %v2614
    %v2616 = vadd.f32 %v2615, 1.0
    %v2617 = vrcp.pop %v2616
    %v2618 = vmul.f32 %v2616, %v2617
    %v2619 = vsub.f32 1.0, %v2618
    %v2620 = vmul.f32 %v2617, %v2619
    %v2621 = vadd.f32 %v2617, %v2620
    %vm2622 = vweird.f32 %v2616
    %vm2623 = vweird.f32 %v2617
    %vm2624 = vmor %vm2622, %vm2623
    %v2625 = vsel %vm2624, %v2617, %v2621
    %v2626 = vand.u32 2147483647, %v2616
    %vm2627 = vcmp.eq.f32.partialorder %v2626, 8.507059e+37
    %v2628 = vand.u32 %v2616, 2147483648
    %v2629 = vor.u32 1.1754944e-38, %v2628
    %v2630 = vsel %vm2627, %v2629, %v2625
    %v2631 = vmul.f32 1.0, %v2630
    %v2632 = vtanh.pop %v2592
    %v2633 = vxor.u32 %v2593, 2147483648
    %v2634 = vmul.f32 %v2633, 1.442695
    %v2635 = vpow.pop %v2634
    %v2636 = vadd.f32 %v2635, 1.0
    %v2637 = vrcp.pop %v2636
    %v2638 = vmul.f32 %v2636, %v2637
    %v2639 = vsub.f32 1.0, %v2638
    %v2640 = vmul.f32 %v2637, %v2639
    %v2641 = vadd.f32 %v2637, %v2640
    %vm2642 = vweird.f32 %v2636
    %vm2643 = vweird.f32 %v2637
    %vm2644 = vmor %vm2642, %vm2643
    %v2645 = vsel %vm2644, %v2637, %v2641
    %v2646 = vand.u32 2147483647, %v2636
    %vm2647 = vcmp.eq.f32.partialorder %v2646, 8.507059e+37
    %v2648 = vand.u32 %v2636, 2147483648
    %v2649 = vor.u32 1.1754944e-38, %v2648
    %v2650 = vsel %vm2647, %v2649, %v2645
    %v2651 = vmul.f32 1.0, %v2650
    %v2652 = vmul.f32 %v2631, %v2474
    %v2653 = vmul.f32 %v2612, %v2632
    %v2654 = vadd.f32 %v2652, %v2653
    %2655 = vmatpush.msra.mxu0 %v633
    %2656 = vmatpush.msra.mxu0 %v632
    %2657 = vmatpush.msra.mxu0 %v631
    %2658 = vmatpush.msra.mxu0 %v630
    %2659 = vmatpush.msra.mxu0 %v629
    %2660 = vmatpush.msra.mxu0 %v628
    %2661 = vmatpush.msra.mxu0 %v627
    %2662 = vmatpush.msra.mxu0 %v626
    %2663 = vmatpush.msra.mxu0 %v625
    %2664 = vmatpush.msra.mxu0 %v624
    %2665 = vmatpush.msra.mxu0 %v623
    %2666 = vmatpush.msra.mxu0 %v622
    %2667 = vmatpush.msra.mxu0 %v621
    %2668 = vmatpush.msra.mxu0 %v620
    %2669 = vmatpush.msra.mxu0 %v619
    %2670 = vmatpush.msra.mxu0 %v618
    %2671 = vmatmul.f32.gmra.mxu0 %v2654
    %v2672 = vpop.f32.mrf.mxu0
    %v2673 = vadd.f32 0.0, %v2672
    %2674 = vdwg.mxu0
    %v2675 = vtanh.pop %v2673
    %v2676 = vmul.f32 %v2651, %v2675
    %2677 = vmatpush.msra.mxu0 %v938
    %2678 = vmatpush.msra.mxu0 %v934
    %2679 = vmatpush.msra.mxu0 %v930
    %2680 = vmatpush.msra.mxu0 %v926
    %2681 = vmatpush.msra.mxu0 %v922
    %2682 = vmatpush.msra.mxu0 %v918
    %2683 = vmatpush.msra.mxu0 %v914
    %2684 = vmatpush.msra.mxu0 %v910
    %2685 = vmatpush.msra.mxu0 %v906
    %2686 = vmatpush.msra.mxu0 %v902
    %2687 = vmatpush.msra.mxu0 %v898
    %2688 = vmatpush.msra.mxu0 %v894
    %2689 = vmatpush.msra.mxu0 %v890
    %2690 = vmatpush.msra.mxu0 %v886
    %2691 = vmatpush.msra.mxu0 %v882
    %2692 = vmatpush.msra.mxu0 %v878
    %2693 = vmatmul.f32.gmra.mxu0 %v2676
    %v2694 = vpop.f32.mrf.mxu0
    %v2695 = vadd.f32 0.0, %v2694
    %2696 = vdwg.mxu0
    %2697 = vmatpush.msra.mxu0 %v939
    %2698 = vmatpush.msra.mxu0 %v935
    %2699 = vmatpush.msra.mxu0 %v931
    %2700 = vmatpush.msra.mxu0 %v927
    %2701 = vmatpush.msra.mxu0 %v923
    %2702 = vmatpush.msra.mxu0 %v919
    %2703 = vmatpush.msra.mxu0 %v915
    %2704 = vmatpush.msra.mxu0 %v911
    %2705 = vmatpush.msra.mxu0 %v907
    %2706 = vmatpush.msra.mxu0 %v903
    %2707 = vmatpush.msra.mxu0 %v899
    %2708 = vmatpush.msra.mxu0 %v895
    %2709 = vmatpush.msra.mxu0 %v891
    %2710 = vmatpush.msra.mxu0 %v887
    %2711 = vmatpush.msra.mxu0 %v883
    %2712 = vmatpush.msra.mxu0 %v879
    %2713 = vmatmul.f32.gmra.mxu0 %v2676
    %v2714 = vpop.f32.mrf.mxu0
    %v2715 = vadd.f32 0.0, %v2714
    %2716 = vdwg.mxu0
    %2717 = vmatpush.msra.mxu0 %v940
    %2718 = vmatpush.msra.mxu0 %v936
    %2719 = vmatpush.msra.mxu0 %v932
    %2720 = vmatpush.msra.mxu0 %v928
    %2721 = vmatpush.msra.mxu0 %v924
    %2722 = vmatpush.msra.mxu0 %v920
    %2723 = vmatpush.msra.mxu0 %v916
    %2724 = vmatpush.msra.mxu0 %v912
    %2725 = vmatpush.msra.mxu0 %v908
    %2726 = vmatpush.msra.mxu0 %v904
    %2727 = vmatpush.msra.mxu0 %v900
    %2728 = vmatpush.msra.mxu0 %v896
    %2729 = vmatpush.msra.mxu0 %v892
    %2730 = vmatpush.msra.mxu0 %v888
    %2731 = vmatpush.msra.mxu0 %v884
    %2732 = vmatpush.msra.mxu0 %v880
    %2733 = vmatmul.f32.gmra.mxu0 %v2676
    %v2734 = vpop.f32.mrf.mxu0
    %v2735 = vadd.f32 0.0, %v2734
    %2736 = vdwg.mxu0
    %2737 = vmatpush.msra.mxu0 %v941
    %2738 = vmatpush.msra.mxu0 %v937
    %2739 = vmatpush.msra.mxu0 %v933
    %2740 = vmatpush.msra.mxu0 %v929
    %2741 = vmatpush.msra.mxu0 %v925
    %2742 = vmatpush.msra.mxu0 %v921
    %2743 = vmatpush.msra.mxu0 %v917
    %2744 = vmatpush.msra.mxu0 %v913
    %2745 = vmatpush.msra.mxu0 %v909
    %2746 = vmatpush.msra.mxu0 %v905
    %2747 = vmatpush.msra.mxu0 %v901
    %2748 = vmatpush.msra.mxu0 %v897
    %2749 = vmatpush.msra.mxu0 %v893
    %2750 = vmatpush.msra.mxu0 %v889
    %2751 = vmatpush.msra.mxu0 %v885
    %2752 = vmatpush.msra.mxu0 %v881
    %2753 = vmatmul.f32.gmra.mxu0 %v2676
    %v2754 = vpop.f32.mrf.mxu0
    %v2755 = vadd.f32 0.0, %v2754
    %2756 = vdwg.mxu0
    %v2757 = vadd.f32 %v2506, %v2695
    %v2758 = vadd.f32 %v2507, %v2715
    %v2759 = vadd.f32 %v2508, %v2735
    %v2760 = vadd.f32 %v2509, %v2755
    %v2761 = vxor.u32 %v2757, 2147483648
    %v2762 = vmul.f32 %v2761, 1.442695
    %v2763 = vpow.pop %v2762
    %v2764 = vadd.f32 %v2763, 1.0
    %v2765 = vrcp.pop %v2764
    %v2766 = vmul.f32 %v2764, %v2765
    %v2767 = vsub.f32 1.0, %v2766
    %v2768 = vmul.f32 %v2765, %v2767
    %v2769 = vadd.f32 %v2765, %v2768
    %vm2770 = vweird.f32 %v2764
    %vm2771 = vweird.f32 %v2765
    %vm2772 = vmor %vm2770, %vm2771
    %v2773 = vsel %vm2772, %v2765, %v2769
    %v2774 = vand.u32 2147483647, %v2764
    %vm2775 = vcmp.eq.f32.partialorder %v2774, 8.507059e+37
    %v2776 = vand.u32 %v2764, 2147483648
    %v2777 = vor.u32 1.1754944e-38, %v2776
    %v2778 = vsel %vm2775, %v2777, %v2773
    %v2779 = vmul.f32 1.0, %v2778
    %v2780 = vxor.u32 %v2758, 2147483648
    %v2781 = vmul.f32 %v2780, 1.442695
    %v2782 = vpow.pop %v2781
    %v2783 = vadd.f32 %v2782, 1.0
    %v2784 = vrcp.pop %v2783
    %v2785 = vmul.f32 %v2783, %v2784
    %v2786 = vsub.f32 1.0, %v2785
    %v2787 = vmul.f32 %v2784, %v2786
    %v2788 = vadd.f32 %v2784, %v2787
    %vm2789 = vweird.f32 %v2783
    %vm2790 = vweird.f32 %v2784
    %vm2791 = vmor %vm2789, %vm2790
    %v2792 = vsel %vm2791, %v2784, %v2788
    %v2793 = vand.u32 2147483647, %v2783
    %vm2794 = vcmp.eq.f32.partialorder %v2793, 8.507059e+37
    %v2795 = vand.u32 %v2783, 2147483648
    %v2796 = vor.u32 1.1754944e-38, %v2795
    %v2797 = vsel %vm2794, %v2796, %v2792
    %v2798 = vmul.f32 1.0, %v2797
    %v2799 = vtanh.pop %v2759
    %v2800 = vxor.u32 %v2760, 2147483648
    %v2801 = vmul.f32 %v2800, 1.442695
    %v2802 = vpow.pop %v2801
    %v2803 = vadd.f32 %v2802, 1.0
    %v2804 = vrcp.pop %v2803
    %v2805 = vmul.f32 %v2803, %v2804
    %v2806 = vsub.f32 1.0, %v2805
    %v2807 = vmul.f32 %v2804, %v2806
    %v2808 = vadd.f32 %v2804, %v2807
    %vm2809 = vweird.f32 %v2803
    %vm2810 = vweird.f32 %v2804
    %vm2811 = vmor %vm2809, %vm2810
    %v2812 = vsel %vm2811, %v2804, %v2808
    %v2813 = vand.u32 2147483647, %v2803
    %vm2814 = vcmp.eq.f32.partialorder %v2813, 8.507059e+37
    %v2815 = vand.u32 %v2803, 2147483648
    %v2816 = vor.u32 1.1754944e-38, %v2815
    %v2817 = vsel %vm2814, %v2816, %v2812
    %v2818 = vmul.f32 1.0, %v2817
    %v2819 = vmul.f32 %v2798, %v2654
    %v2820 = vmul.f32 %v2779, %v2799
    %v2821 = vadd.f32 %v2819, %v2820
    %2822 = vmatpush.msra.mxu0 %v633
    %2823 = vmatpush.msra.mxu0 %v632
    %2824 = vmatpush.msra.mxu0 %v631
    %2825 = vmatpush.msra.mxu0 %v630
    %2826 = vmatpush.msra.mxu0 %v629
    %2827 = vmatpush.msra.mxu0 %v628
    %2828 = vmatpush.msra.mxu0 %v627
    %2829 = vmatpush.msra.mxu0 %v626
    %2830 = vmatpush.msra.mxu0 %v625
    %2831 = vmatpush.msra.mxu0 %v624
    %2832 = vmatpush.msra.mxu0 %v623
    %2833 = vmatpush.msra.mxu0 %v622
    %2834 = vmatpush.msra.mxu0 %v621
    %2835 = vmatpush.msra.mxu0 %v620
    %2836 = vmatpush.msra.mxu0 %v619
    %2837 = vmatpush.msra.mxu0 %v618
    %2838 = vmatmul.f32.gmra.mxu0 %v2821
    %v2839 = vpop.f32.mrf.mxu0
    %v2840 = vadd.f32 0.0, %v2839
    %2841 = vdwg.mxu0
    %v2842 = vtanh.pop %v2840
    %v2843 = vmul.f32 %v2818, %v2842
    %s2844 = smul.u32 6, 4
    %s2845 = smul.addr %s2844, 8
    %s2846 = scalar_lea.vmem [#allocation2], %s2845
    %v2847 = vld [vmem:[%s2846] sm:$0xff]
    %v2848 = vld [vmem:[%s2846 + $0x8] sm:$0xff]
    %v2849 = vld [vmem:[%s2846 + $0x10] sm:$0xff]
    %v2850 = vld [vmem:[%s2846 + $0x18] sm:$0xff]
    %s2851 = smul.addr %s2844, 8
    %s2852 = scalar_lea.vmem [#allocation3], %s2851
    %v2853 = vld [vmem:[%s2852] sm:$0xff]
    %v2854 = vld [vmem:[%s2852 + $0x8] sm:$0xff]
    %v2855 = vld [vmem:[%s2852 + $0x10] sm:$0xff]
    %v2856 = vld [vmem:[%s2852 + $0x18] sm:$0xff]
    %2857 = vmatpush.msra.mxu0 %v707
    %2858 = vmatpush.msra.mxu0 %v703
    %2859 = vmatpush.msra.mxu0 %v699
    %2860 = vmatpush.msra.mxu0 %v695
    %2861 = vmatpush.msra.mxu0 %v691
    %2862 = vmatpush.msra.mxu0 %v687
    %2863 = vmatpush.msra.mxu0 %v683
    %2864 = vmatpush.msra.mxu0 %v679
    %2865 = vmatpush.msra.mxu0 %v675
    %2866 = vmatpush.msra.mxu0 %v671
    %2867 = vmatpush.msra.mxu0 %v667
    %2868 = vmatpush.msra.mxu0 %v663
    %2869 = vmatpush.msra.mxu0 %v659
    %2870 = vmatpush.msra.mxu0 %v655
    %2871 = vmatpush.msra.mxu0 %v651
    %2872 = vmatpush.msra.mxu0 %v647
    %2873 = vmatmul.f32.gmra.mxu0 %v2843
    %v2874 = vpop.f32.mrf.mxu0
    %v2875 = vadd.f32 0.0, %v2874
    %2876 = vdwg.mxu0
    %2877 = vmatpush.msra.mxu0 %v708
    %2878 = vmatpush.msra.mxu0 %v704
    %2879 = vmatpush.msra.mxu0 %v700
    %2880 = vmatpush.msra.mxu0 %v696
    %2881 = vmatpush.msra.mxu0 %v692
    %2882 = vmatpush.msra.mxu0 %v688
    %2883 = vmatpush.msra.mxu0 %v684
    %2884 = vmatpush.msra.mxu0 %v680
    %2885 = vmatpush.msra.mxu0 %v676
    %2886 = vmatpush.msra.mxu0 %v672
    %2887 = vmatpush.msra.mxu0 %v668
    %2888 = vmatpush.msra.mxu0 %v664
    %2889 = vmatpush.msra.mxu0 %v660
    %2890 = vmatpush.msra.mxu0 %v656
    %2891 = vmatpush.msra.mxu0 %v652
    %2892 = vmatpush.msra.mxu0 %v648
    %2893 = vmatmul.f32.gmra.mxu0 %v2843
    %v2894 = vpop.f32.mrf.mxu0
    %v2895 = vadd.f32 0.0, %v2894
    %2896 = vdwg.mxu0
    %2897 = vmatpush.msra.mxu0 %v709
    %2898 = vmatpush.msra.mxu0 %v705
    %2899 = vmatpush.msra.mxu0 %v701
    %2900 = vmatpush.msra.mxu0 %v697
    %2901 = vmatpush.msra.mxu0 %v693
    %2902 = vmatpush.msra.mxu0 %v689
    %2903 = vmatpush.msra.mxu0 %v685
    %2904 = vmatpush.msra.mxu0 %v681
    %2905 = vmatpush.msra.mxu0 %v677
    %2906 = vmatpush.msra.mxu0 %v673
    %2907 = vmatpush.msra.mxu0 %v669
    %2908 = vmatpush.msra.mxu0 %v665
    %2909 = vmatpush.msra.mxu0 %v661
    %2910 = vmatpush.msra.mxu0 %v657
    %2911 = vmatpush.msra.mxu0 %v653
    %2912 = vmatpush.msra.mxu0 %v649
    %2913 = vmatmul.f32.gmra.mxu0 %v2843
    %v2914 = vpop.f32.mrf.mxu0
    %v2915 = vadd.f32 0.0, %v2914
    %2916 = vdwg.mxu0
    %2917 = vmatpush.msra.mxu0 %v710
    %2918 = vmatpush.msra.mxu0 %v706
    %2919 = vmatpush.msra.mxu0 %v702
    %2920 = vmatpush.msra.mxu0 %v698
    %2921 = vmatpush.msra.mxu0 %v694
    %2922 = vmatpush.msra.mxu0 %v690
    %2923 = vmatpush.msra.mxu0 %v686
    %2924 = vmatpush.msra.mxu0 %v682
    %2925 = vmatpush.msra.mxu0 %v678
    %2926 = vmatpush.msra.mxu0 %v674
    %2927 = vmatpush.msra.mxu0 %v670
    %2928 = vmatpush.msra.mxu0 %v666
    %2929 = vmatpush.msra.mxu0 %v662
    %2930 = vmatpush.msra.mxu0 %v658
    %2931 = vmatpush.msra.mxu0 %v654
    %2932 = vmatpush.msra.mxu0 %v650
    %2933 = vmatmul.f32.gmra.mxu0 %v2843
    %v2934 = vpop.f32.mrf.mxu0
    %v2935 = vadd.f32 0.0, %v2934
    %2936 = vdwg.mxu0
    %v2937 = vadd.f32 %v2847, %v2875
    %v2938 = vadd.f32 %v2848, %v2895
    %v2939 = vadd.f32 %v2849, %v2915
    %v2940 = vadd.f32 %v2850, %v2935
    %v2941 = vxor.u32 %v2937, 2147483648
    %v2942 = vmul.f32 %v2941, 1.442695
    %v2943 = vpow.pop %v2942
    %v2944 = vadd.f32 %v2943, 1.0
    %v2945 = vrcp.pop %v2944
    %v2946 = vmul.f32 %v2944, %v2945
    %v2947 = vsub.f32 1.0, %v2946
    %v2948 = vmul.f32 %v2945, %v2947
    %v2949 = vadd.f32 %v2945, %v2948
    %vm2950 = vweird.f32 %v2944
    %vm2951 = vweird.f32 %v2945
    %vm2952 = vmor %vm2950, %vm2951
    %v2953 = vsel %vm2952, %v2945, %v2949
    %v2954 = vand.u32 2147483647, %v2944
    %vm2955 = vcmp.eq.f32.partialorder %v2954, 8.507059e+37
    %v2956 = vand.u32 %v2944, 2147483648
    %v2957 = vor.u32 1.1754944e-38, %v2956
    %v2958 = vsel %vm2955, %v2957, %v2953
    %v2959 = vmul.f32 1.0, %v2958
    %v2960 = vxor.u32 %v2938, 2147483648
    %v2961 = vmul.f32 %v2960, 1.442695
    %v2962 = vpow.pop %v2961
    %v2963 = vadd.f32 %v2962, 1.0
    %v2964 = vrcp.pop %v2963
    %v2965 = vmul.f32 %v2963, %v2964
    %v2966 = vsub.f32 1.0, %v2965
    %v2967 = vmul.f32 %v2964, %v2966
    %v2968 = vadd.f32 %v2964, %v2967
    %vm2969 = vweird.f32 %v2963
    %vm2970 = vweird.f32 %v2964
    %vm2971 = vmor %vm2969, %vm2970
    %v2972 = vsel %vm2971, %v2964, %v2968
    %v2973 = vand.u32 2147483647, %v2963
    %vm2974 = vcmp.eq.f32.partialorder %v2973, 8.507059e+37
    %v2975 = vand.u32 %v2963, 2147483648
    %v2976 = vor.u32 1.1754944e-38, %v2975
    %v2977 = vsel %vm2974, %v2976, %v2972
    %v2978 = vmul.f32 1.0, %v2977
    %v2979 = vtanh.pop %v2939
    %v2980 = vxor.u32 %v2940, 2147483648
    %v2981 = vmul.f32 %v2980, 1.442695
    %v2982 = vpow.pop %v2981
    %v2983 = vadd.f32 %v2982, 1.0
    %v2984 = vrcp.pop %v2983
    %v2985 = vmul.f32 %v2983, %v2984
    %v2986 = vsub.f32 1.0, %v2985
    %v2987 = vmul.f32 %v2984, %v2986
    %v2988 = vadd.f32 %v2984, %v2987
    %vm2989 = vweird.f32 %v2983
    %vm2990 = vweird.f32 %v2984
    %vm2991 = vmor %vm2989, %vm2990
    %v2992 = vsel %vm2991, %v2984, %v2988
    %v2993 = vand.u32 2147483647, %v2983
    %vm2994 = vcmp.eq.f32.partialorder %v2993, 8.507059e+37
    %v2995 = vand.u32 %v2983, 2147483648
    %v2996 = vor.u32 1.1754944e-38, %v2995
    %v2997 = vsel %vm2994, %v2996, %v2992
    %v2998 = vmul.f32 1.0, %v2997
    %v2999 = vmul.f32 %v2978, %v2821
    %v3000 = vmul.f32 %v2959, %v2979
    %v3001 = vadd.f32 %v2999, %v3000
    %3002 = vmatpush.msra.mxu0 %v633
    %3003 = vmatpush.msra.mxu0 %v632
    %3004 = vmatpush.msra.mxu0 %v631
    %3005 = vmatpush.msra.mxu0 %v630
    %3006 = vmatpush.msra.mxu0 %v629
    %3007 = vmatpush.msra.mxu0 %v628
    %3008 = vmatpush.msra.mxu0 %v627
    %3009 = vmatpush.msra.mxu0 %v626
    %3010 = vmatpush.msra.mxu0 %v625
    %3011 = vmatpush.msra.mxu0 %v624
    %3012 = vmatpush.msra.mxu0 %v623
    %3013 = vmatpush.msra.mxu0 %v622
    %3014 = vmatpush.msra.mxu0 %v621
    %3015 = vmatpush.msra.mxu0 %v620
    %3016 = vmatpush.msra.mxu0 %v619
    %3017 = vmatpush.msra.mxu0 %v618
    %3018 = vmatmul.f32.gmra.mxu0 %v3001
    %v3019 = vpop.f32.mrf.mxu0
    %v3020 = vadd.f32 0.0, %v3019
    %3021 = vdwg.mxu0
    %v3022 = vtanh.pop %v3020
    %v3023 = vmul.f32 %v2998, %v3022
    %3024 = vmatpush.msra.mxu0 %v938
    %3025 = vmatpush.msra.mxu0 %v934
    %3026 = vmatpush.msra.mxu0 %v930
    %3027 = vmatpush.msra.mxu0 %v926
    %3028 = vmatpush.msra.mxu0 %v922
    %3029 = vmatpush.msra.mxu0 %v918
    %3030 = vmatpush.msra.mxu0 %v914
    %3031 = vmatpush.msra.mxu0 %v910
    %3032 = vmatpush.msra.mxu0 %v906
    %3033 = vmatpush.msra.mxu0 %v902
    %3034 = vmatpush.msra.mxu0 %v898
    %3035 = vmatpush.msra.mxu0 %v894
    %3036 = vmatpush.msra.mxu0 %v890
    %3037 = vmatpush.msra.mxu0 %v886
    %3038 = vmatpush.msra.mxu0 %v882
    %3039 = vmatpush.msra.mxu0 %v878
    %3040 = vmatmul.f32.gmra.mxu0 %v3023
    %v3041 = vpop.f32.mrf.mxu0
    %v3042 = vadd.f32 0.0, %v3041
    %3043 = vdwg.mxu0
    %3044 = vmatpush.msra.mxu0 %v939
    %3045 = vmatpush.msra.mxu0 %v935
    %3046 = vmatpush.msra.mxu0 %v931
    %3047 = vmatpush.msra.mxu0 %v927
    %3048 = vmatpush.msra.mxu0 %v923
    %3049 = vmatpush.msra.mxu0 %v919
    %3050 = vmatpush.msra.mxu0 %v915
    %3051 = vmatpush.msra.mxu0 %v911
    %3052 = vmatpush.msra.mxu0 %v907
    %3053 = vmatpush.msra.mxu0 %v903
    %3054 = vmatpush.msra.mxu0 %v899
    %3055 = vmatpush.msra.mxu0 %v895
    %3056 = vmatpush.msra.mxu0 %v891
    %3057 = vmatpush.msra.mxu0 %v887
    %3058 = vmatpush.msra.mxu0 %v883
    %3059 = vmatpush.msra.mxu0 %v879
    %3060 = vmatmul.f32.gmra.mxu0 %v3023
    %v3061 = vpop.f32.mrf.mxu0
    %v3062 = vadd.f32 0.0, %v3061
    %3063 = vdwg.mxu0
    %3064 = vmatpush.msra.mxu0 %v940
    %3065 = vmatpush.msra.mxu0 %v936
    %3066 = vmatpush.msra.mxu0 %v932
    %3067 = vmatpush.msra.mxu0 %v928
    %3068 = vmatpush.msra.mxu0 %v924
    %3069 = vmatpush.msra.mxu0 %v920
    %3070 = vmatpush.msra.mxu0 %v916
    %3071 = vmatpush.msra.mxu0 %v912
    %3072 = vmatpush.msra.mxu0 %v908
    %3073 = vmatpush.msra.mxu0 %v904
    %3074 = vmatpush.msra.mxu0 %v900
    %3075 = vmatpush.msra.mxu0 %v896
    %3076 = vmatpush.msra.mxu0 %v892
    %3077 = vmatpush.msra.mxu0 %v888
    %3078 = vmatpush.msra.mxu0 %v884
    %3079 = vmatpush.msra.mxu0 %v880
    %3080 = vmatmul.f32.gmra.mxu0 %v3023
    %v3081 = vpop.f32.mrf.mxu0
    %v3082 = vadd.f32 0.0, %v3081
    %3083 = vdwg.mxu0
    %3084 = vmatpush.msra.mxu0 %v941
    %3085 = vmatpush.msra.mxu0 %v937
    %3086 = vmatpush.msra.mxu0 %v933
    %3087 = vmatpush.msra.mxu0 %v929
    %3088 = vmatpush.msra.mxu0 %v925
    %3089 = vmatpush.msra.mxu0 %v921
    %3090 = vmatpush.msra.mxu0 %v917
    %3091 = vmatpush.msra.mxu0 %v913
    %3092 = vmatpush.msra.mxu0 %v909
    %3093 = vmatpush.msra.mxu0 %v905
    %3094 = vmatpush.msra.mxu0 %v901
    %3095 = vmatpush.msra.mxu0 %v897
    %3096 = vmatpush.msra.mxu0 %v893
    %3097 = vmatpush.msra.mxu0 %v889
    %3098 = vmatpush.msra.mxu0 %v885
    %3099 = vmatpush.msra.mxu0 %v881
    %3100 = vmatmul.f32.gmra.mxu0 %v3023
    %v3101 = vpop.f32.mrf.mxu0
    %v3102 = vadd.f32 0.0, %v3101
    %3103 = vdwg.mxu0
    %v3104 = vadd.f32 %v2853, %v3042
    %v3105 = vadd.f32 %v2854, %v3062
    %v3106 = vadd.f32 %v2855, %v3082
    %v3107 = vadd.f32 %v2856, %v3102
    %v3108 = vxor.u32 %v3104, 2147483648
    %v3109 = vmul.f32 %v3108, 1.442695
    %v3110 = vpow.pop %v3109
    %v3111 = vadd.f32 %v3110, 1.0
    %v3112 = vrcp.pop %v3111
    %v3113 = vmul.f32 %v3111, %v3112
    %v3114 = vsub.f32 1.0, %v3113
    %v3115 = vmul.f32 %v3112, %v3114
    %v3116 = vadd.f32 %v3112, %v3115
    %vm3117 = vweird.f32 %v3111
    %vm3118 = vweird.f32 %v3112
    %vm3119 = vmor %vm3117, %vm3118
    %v3120 = vsel %vm3119, %v3112, %v3116
    %v3121 = vand.u32 2147483647, %v3111
    %vm3122 = vcmp.eq.f32.partialorder %v3121, 8.507059e+37
    %v3123 = vand.u32 %v3111, 2147483648
    %v3124 = vor.u32 1.1754944e-38, %v3123
    %v3125 = vsel %vm3122, %v3124, %v3120
    %v3126 = vmul.f32 1.0, %v3125
    %v3127 = vxor.u32 %v3105, 2147483648
    %v3128 = vmul.f32 %v3127, 1.442695
    %v3129 = vpow.pop %v3128
    %v3130 = vadd.f32 %v3129, 1.0
    %v3131 = vrcp.pop %v3130
    %v3132 = vmul.f32 %v3130, %v3131
    %v3133 = vsub.f32 1.0, %v3132
    %v3134 = vmul.f32 %v3131, %v3133
    %v3135 = vadd.f32 %v3131, %v3134
    %vm3136 = vweird.f32 %v3130
    %vm3137 = vweird.f32 %v3131
    %vm3138 = vmor %vm3136, %vm3137
    %v3139 = vsel %vm3138, %v3131, %v3135
    %v3140 = vand.u32 2147483647, %v3130
    %vm3141 = vcmp.eq.f32.partialorder %v3140, 8.507059e+37
    %v3142 = vand.u32 %v3130, 2147483648
    %v3143 = vor.u32 1.1754944e-38, %v3142
    %v3144 = vsel %vm3141, %v3143, %v3139
    %v3145 = vmul.f32 1.0, %v3144
    %v3146 = vtanh.pop %v3106
    %v3147 = vxor.u32 %v3107, 2147483648
    %v3148 = vmul.f32 %v3147, 1.442695
    %v3149 = vpow.pop %v3148
    %v3150 = vadd.f32 %v3149, 1.0
    %v3151 = vrcp.pop %v3150
    %v3152 = vmul.f32 %v3150, %v3151
    %v3153 = vsub.f32 1.0, %v3152
    %v3154 = vmul.f32 %v3151, %v3153
    %v3155 = vadd.f32 %v3151, %v3154
    %vm3156 = vweird.f32 %v3150
    %vm3157 = vweird.f32 %v3151
    %vm3158 = vmor %vm3156, %vm3157
    %v3159 = vsel %vm3158, %v3151, %v3155
    %v3160 = vand.u32 2147483647, %v3150
    %vm3161 = vcmp.eq.f32.partialorder %v3160, 8.507059e+37
    %v3162 = vand.u32 %v3150, 2147483648
    %v3163 = vor.u32 1.1754944e-38, %v3162
    %v3164 = vsel %vm3161, %v3163, %v3159
    %v3165 = vmul.f32 1.0, %v3164
    %v3166 = vmul.f32 %v3145, %v3001
    %v3167 = vmul.f32 %v3126, %v3146
    %v3168 = vadd.f32 %v3166, %v3167
    %3169 = vmatpush.msra.mxu0 %v633
    %3170 = vmatpush.msra.mxu0 %v632
    %3171 = vmatpush.msra.mxu0 %v631
    %3172 = vmatpush.msra.mxu0 %v630
    %3173 = vmatpush.msra.mxu0 %v629
    %3174 = vmatpush.msra.mxu0 %v628
    %3175 = vmatpush.msra.mxu0 %v627
    %3176 = vmatpush.msra.mxu0 %v626
    %3177 = vmatpush.msra.mxu0 %v625
    %3178 = vmatpush.msra.mxu0 %v624
    %3179 = vmatpush.msra.mxu0 %v623
    %3180 = vmatpush.msra.mxu0 %v622
    %3181 = vmatpush.msra.mxu0 %v621
    %3182 = vmatpush.msra.mxu0 %v620
    %3183 = vmatpush.msra.mxu0 %v619
    %3184 = vmatpush.msra.mxu0 %v618
    %3185 = vmatmul.f32.gmra.mxu0 %v3168
    %v3186 = vpop.f32.mrf.mxu0
    %v3187 = vadd.f32 0.0, %v3186
    %3188 = vdwg.mxu0
    %v3189 = vtanh.pop %v3187
    %v3190 = vmul.f32 %v3165, %v3189
    %s3191 = smul.u32 7, 4
    %s3192 = smul.addr %s3191, 8
    %s3193 = scalar_lea.vmem [#allocation2], %s3192
    %v3194 = vld [vmem:[%s3193] sm:$0xff]
    %v3195 = vld [vmem:[%s3193 + $0x8] sm:$0xff]
    %v3196 = vld [vmem:[%s3193 + $0x10] sm:$0xff]
    %v3197 = vld [vmem:[%s3193 + $0x18] sm:$0xff]
    %s3198 = smul.addr %s3191, 8
    %s3199 = scalar_lea.vmem [#allocation3], %s3198
    %v3200 = vld [vmem:[%s3199] sm:$0xff]
    %v3201 = vld [vmem:[%s3199 + $0x8] sm:$0xff]
    %v3202 = vld [vmem:[%s3199 + $0x10] sm:$0xff]
    %v3203 = vld [vmem:[%s3199 + $0x18] sm:$0xff]
    %3204 = vmatpush.msra.mxu0 %v707
    %3205 = vmatpush.msra.mxu0 %v703
    %3206 = vmatpush.msra.mxu0 %v699
    %3207 = vmatpush.msra.mxu0 %v695
    %3208 = vmatpush.msra.mxu0 %v691
    %3209 = vmatpush.msra.mxu0 %v687
    %3210 = vmatpush.msra.mxu0 %v683
    %3211 = vmatpush.msra.mxu0 %v679
    %3212 = vmatpush.msra.mxu0 %v675
    %3213 = vmatpush.msra.mxu0 %v671
    %3214 = vmatpush.msra.mxu0 %v667
    %3215 = vmatpush.msra.mxu0 %v663
    %3216 = vmatpush.msra.mxu0 %v659
    %3217 = vmatpush.msra.mxu0 %v655
    %3218 = vmatpush.msra.mxu0 %v651
    %3219 = vmatpush.msra.mxu0 %v647
    %3220 = vmatmul.f32.gmra.mxu0 %v3190
    %v3221 = vpop.f32.mrf.mxu0
    %v3222 = vadd.f32 0.0, %v3221
    %3223 = vdwg.mxu0
    %3224 = vmatpush.msra.mxu0 %v708
    %3225 = vmatpush.msra.mxu0 %v704
    %3226 = vmatpush.msra.mxu0 %v700
    %3227 = vmatpush.msra.mxu0 %v696
    %3228 = vmatpush.msra.mxu0 %v692
    %3229 = vmatpush.msra.mxu0 %v688
    %3230 = vmatpush.msra.mxu0 %v684
    %3231 = vmatpush.msra.mxu0 %v680
    %3232 = vmatpush.msra.mxu0 %v676
    %3233 = vmatpush.msra.mxu0 %v672
    %3234 = vmatpush.msra.mxu0 %v668
    %3235 = vmatpush.msra.mxu0 %v664
    %3236 = vmatpush.msra.mxu0 %v660
    %3237 = vmatpush.msra.mxu0 %v656
    %3238 = vmatpush.msra.mxu0 %v652
    %3239 = vmatpush.msra.mxu0 %v648
    %3240 = vmatmul.f32.gmra.mxu0 %v3190
    %v3241 = vpop.f32.mrf.mxu0
    %v3242 = vadd.f32 0.0, %v3241
    %3243 = vdwg.mxu0
    %3244 = vmatpush.msra.mxu0 %v709
    %3245 = vmatpush.msra.mxu0 %v705
    %3246 = vmatpush.msra.mxu0 %v701
    %3247 = vmatpush.msra.mxu0 %v697
    %3248 = vmatpush.msra.mxu0 %v693
    %3249 = vmatpush.msra.mxu0 %v689
    %3250 = vmatpush.msra.mxu0 %v685
    %3251 = vmatpush.msra.mxu0 %v681
    %3252 = vmatpush.msra.mxu0 %v677
    %3253 = vmatpush.msra.mxu0 %v673
    %3254 = vmatpush.msra.mxu0 %v669
    %3255 = vmatpush.msra.mxu0 %v665
    %3256 = vmatpush.msra.mxu0 %v661
    %3257 = vmatpush.msra.mxu0 %v657
    %3258 = vmatpush.msra.mxu0 %v653
    %3259 = vmatpush.msra.mxu0 %v649
    %3260 = vmatmul.f32.gmra.mxu0 %v3190
    %v3261 = vpop.f32.mrf.mxu0
    %v3262 = vadd.f32 0.0, %v3261
    %3263 = vdwg.mxu0
    %3264 = vmatpush.msra.mxu0 %v710
    %3265 = vmatpush.msra.mxu0 %v706
    %3266 = vmatpush.msra.mxu0 %v702
    %3267 = vmatpush.msra.mxu0 %v698
    %3268 = vmatpush.msra.mxu0 %v694
    %3269 = vmatpush.msra.mxu0 %v690
    %3270 = vmatpush.msra.mxu0 %v686
    %3271 = vmatpush.msra.mxu0 %v682
    %3272 = vmatpush.msra.mxu0 %v678
    %3273 = vmatpush.msra.mxu0 %v674
    %3274 = vmatpush.msra.mxu0 %v670
    %3275 = vmatpush.msra.mxu0 %v666
    %3276 = vmatpush.msra.mxu0 %v662
    %3277 = vmatpush.msra.mxu0 %v658
    %3278 = vmatpush.msra.mxu0 %v654
    %3279 = vmatpush.msra.mxu0 %v650
    %3280 = vmatmul.f32.gmra.mxu0 %v3190
    %v3281 = vpop.f32.mrf.mxu0
    %v3282 = vadd.f32 0.0, %v3281
    %3283 = vdwg.mxu0
    %v3284 = vadd.f32 %v3194, %v3222
    %v3285 = vadd.f32 %v3195, %v3242
    %v3286 = vadd.f32 %v3196, %v3262
    %v3287 = vadd.f32 %v3197, %v3282
    %v3288 = vxor.u32 %v3284, 2147483648
    %v3289 = vmul.f32 %v3288, 1.442695
    %v3290 = vpow.pop %v3289
    %v3291 = vadd.f32 %v3290, 1.0
    %v3292 = vrcp.pop %v3291
    %v3293 = vmul.f32 %v3291, %v3292
    %v3294 = vsub.f32 1.0, %v3293
    %v3295 = vmul.f32 %v3292, %v3294
    %v3296 = vadd.f32 %v3292, %v3295
    %vm3297 = vweird.f32 %v3291
    %vm3298 = vweird.f32 %v3292
    %vm3299 = vmor %vm3297, %vm3298
    %v3300 = vsel %vm3299, %v3292, %v3296
    %v3301 = vand.u32 2147483647, %v3291
    %vm3302 = vcmp.eq.f32.partialorder %v3301, 8.507059e+37
    %v3303 = vand.u32 %v3291, 2147483648
    %v3304 = vor.u32 1.1754944e-38, %v3303
    %v3305 = vsel %vm3302, %v3304, %v3300
    %v3306 = vmul.f32 1.0, %v3305
    %v3307 = vxor.u32 %v3285, 2147483648
    %v3308 = vmul.f32 %v3307, 1.442695
    %v3309 = vpow.pop %v3308
    %v3310 = vadd.f32 %v3309, 1.0
    %v3311 = vrcp.pop %v3310
    %v3312 = vmul.f32 %v3310, %v3311
    %v3313 = vsub.f32 1.0, %v3312
    %v3314 = vmul.f32 %v3311, %v3313
    %v3315 = vadd.f32 %v3311, %v3314
    %vm3316 = vweird.f32 %v3310
    %vm3317 = vweird.f32 %v3311
    %vm3318 = vmor %vm3316, %vm3317
    %v3319 = vsel %vm3318, %v3311, %v3315
    %v3320 = vand.u32 2147483647, %v3310
    %vm3321 = vcmp.eq.f32.partialorder %v3320, 8.507059e+37
    %v3322 = vand.u32 %v3310, 2147483648
    %v3323 = vor.u32 1.1754944e-38, %v3322
    %v3324 = vsel %vm3321, %v3323, %v3319
    %v3325 = vmul.f32 1.0, %v3324
    %v3326 = vtanh.pop %v3286
    %v3327 = vxor.u32 %v3287, 2147483648
    %v3328 = vmul.f32 %v3327, 1.442695
    %v3329 = vpow.pop %v3328
    %v3330 = vadd.f32 %v3329, 1.0
    %v3331 = vrcp.pop %v3330
    %v3332 = vmul.f32 %v3330, %v3331
    %v3333 = vsub.f32 1.0, %v3332
    %v3334 = vmul.f32 %v3331, %v3333
    %v3335 = vadd.f32 %v3331, %v3334
    %vm3336 = vweird.f32 %v3330
    %vm3337 = vweird.f32 %v3331
    %vm3338 = vmor %vm3336, %vm3337
    %v3339 = vsel %vm3338, %v3331, %v3335
    %v3340 = vand.u32 2147483647, %v3330
    %vm3341 = vcmp.eq.f32.partialorder %v3340, 8.507059e+37
    %v3342 = vand.u32 %v3330, 2147483648
    %v3343 = vor.u32 1.1754944e-38, %v3342
    %v3344 = vsel %vm3341, %v3343, %v3339
    %v3345 = vmul.f32 1.0, %v3344
    %v3346 = vmul.f32 %v3325, %v3168
    %v3347 = vmul.f32 %v3306, %v3326
    %v3348 = vadd.f32 %v3346, %v3347
    %3349 = vmatpush.msra.mxu0 %v633
    %3350 = vmatpush.msra.mxu0 %v632
    %3351 = vmatpush.msra.mxu0 %v631
    %3352 = vmatpush.msra.mxu0 %v630
    %3353 = vmatpush.msra.mxu0 %v629
    %3354 = vmatpush.msra.mxu0 %v628
    %3355 = vmatpush.msra.mxu0 %v627
    %3356 = vmatpush.msra.mxu0 %v626
    %3357 = vmatpush.msra.mxu0 %v625
    %3358 = vmatpush.msra.mxu0 %v624
    %3359 = vmatpush.msra.mxu0 %v623
    %3360 = vmatpush.msra.mxu0 %v622
    %3361 = vmatpush.msra.mxu0 %v621
    %3362 = vmatpush.msra.mxu0 %v620
    %3363 = vmatpush.msra.mxu0 %v619
    %3364 = vmatpush.msra.mxu0 %v618
    %3365 = vmatmul.f32.gmra.mxu0 %v3348
    %v3366 = vpop.f32.mrf.mxu0
    %v3367 = vadd.f32 0.0, %v3366
    %3368 = vdwg.mxu0
    %v3369 = vtanh.pop %v3367
    %v3370 = vmul.f32 %v3345, %v3369
    %3371 = vmatpush.msra.mxu0 %v938
    %3372 = vmatpush.msra.mxu0 %v934
    %3373 = vmatpush.msra.mxu0 %v930
    %3374 = vmatpush.msra.mxu0 %v926
    %3375 = vmatpush.msra.mxu0 %v922
    %3376 = vmatpush.msra.mxu0 %v918
    %3377 = vmatpush.msra.mxu0 %v914
    %3378 = vmatpush.msra.mxu0 %v910
    %3379 = vmatpush.msra.mxu0 %v906
    %3380 = vmatpush.msra.mxu0 %v902
    %3381 = vmatpush.msra.mxu0 %v898
    %3382 = vmatpush.msra.mxu0 %v894
    %3383 = vmatpush.msra.mxu0 %v890
    %3384 = vmatpush.msra.mxu0 %v886
    %3385 = vmatpush.msra.mxu0 %v882
    %3386 = vmatpush.msra.mxu0 %v878
    %3387 = vmatmul.f32.gmra.mxu0 %v3370
    %v3388 = vpop.f32.mrf.mxu0
    %v3389 = vadd.f32 0.0, %v3388
    %3390 = vdwg.mxu0
    %3391 = vmatpush.msra.mxu0 %v939
    %3392 = vmatpush.msra.mxu0 %v935
    %3393 = vmatpush.msra.mxu0 %v931
    %3394 = vmatpush.msra.mxu0 %v927
    %3395 = vmatpush.msra.mxu0 %v923
    %3396 = vmatpush.msra.mxu0 %v919
    %3397 = vmatpush.msra.mxu0 %v915
    %3398 = vmatpush.msra.mxu0 %v911
    %3399 = vmatpush.msra.mxu0 %v907
    %3400 = vmatpush.msra.mxu0 %v903
    %3401 = vmatpush.msra.mxu0 %v899
    %3402 = vmatpush.msra.mxu0 %v895
    %3403 = vmatpush.msra.mxu0 %v891
    %3404 = vmatpush.msra.mxu0 %v887
    %3405 = vmatpush.msra.mxu0 %v883
    %3406 = vmatpush.msra.mxu0 %v879
    %3407 = vmatmul.f32.gmra.mxu0 %v3370
    %v3408 = vpop.f32.mrf.mxu0
    %v3409 = vadd.f32 0.0, %v3408
    %3410 = vdwg.mxu0
    %3411 = vmatpush.msra.mxu0 %v940
    %3412 = vmatpush.msra.mxu0 %v936
    %3413 = vmatpush.msra.mxu0 %v932
    %3414 = vmatpush.msra.mxu0 %v928
    %3415 = vmatpush.msra.mxu0 %v924
    %3416 = vmatpush.msra.mxu0 %v920
    %3417 = vmatpush.msra.mxu0 %v916
    %3418 = vmatpush.msra.mxu0 %v912
    %3419 = vmatpush.msra.mxu0 %v908
    %3420 = vmatpush.msra.mxu0 %v904
    %3421 = vmatpush.msra.mxu0 %v900
    %3422 = vmatpush.msra.mxu0 %v896
    %3423 = vmatpush.msra.mxu0 %v892
    %3424 = vmatpush.msra.mxu0 %v888
    %3425 = vmatpush.msra.mxu0 %v884
    %3426 = vmatpush.msra.mxu0 %v880
    %3427 = vmatmul.f32.gmra.mxu0 %v3370
    %v3428 = vpop.f32.mrf.mxu0
    %v3429 = vadd.f32 0.0, %v3428
    %3430 = vdwg.mxu0
    %3431 = vmatpush.msra.mxu0 %v941
    %3432 = vmatpush.msra.mxu0 %v937
    %3433 = vmatpush.msra.mxu0 %v933
    %3434 = vmatpush.msra.mxu0 %v929
    %3435 = vmatpush.msra.mxu0 %v925
    %3436 = vmatpush.msra.mxu0 %v921
    %3437 = vmatpush.msra.mxu0 %v917
    %3438 = vmatpush.msra.mxu0 %v913
    %3439 = vmatpush.msra.mxu0 %v909
    %3440 = vmatpush.msra.mxu0 %v905
    %3441 = vmatpush.msra.mxu0 %v901
    %3442 = vmatpush.msra.mxu0 %v897
    %3443 = vmatpush.msra.mxu0 %v893
    %3444 = vmatpush.msra.mxu0 %v889
    %3445 = vmatpush.msra.mxu0 %v885
    %3446 = vmatpush.msra.mxu0 %v881
    %3447 = vmatmul.f32.gmra.mxu0 %v3370
    %v3448 = vpop.f32.mrf.mxu0
    %v3449 = vadd.f32 0.0, %v3448
    %3450 = vdwg.mxu0
    %v3451 = vadd.f32 %v3200, %v3389
    %v3452 = vadd.f32 %v3201, %v3409
    %v3453 = vadd.f32 %v3202, %v3429
    %v3454 = vadd.f32 %v3203, %v3449
    %v3455 = vxor.u32 %v3451, 2147483648
    %v3456 = vmul.f32 %v3455, 1.442695
    %v3457 = vpow.pop %v3456
    %v3458 = vadd.f32 %v3457, 1.0
    %v3459 = vrcp.pop %v3458
    %v3460 = vmul.f32 %v3458, %v3459
    %v3461 = vsub.f32 1.0, %v3460
    %v3462 = vmul.f32 %v3459, %v3461
    %v3463 = vadd.f32 %v3459, %v3462
    %vm3464 = vweird.f32 %v3458
    %vm3465 = vweird.f32 %v3459
    %vm3466 = vmor %vm3464, %vm3465
    %v3467 = vsel %vm3466, %v3459, %v3463
    %v3468 = vand.u32 2147483647, %v3458
    %vm3469 = vcmp.eq.f32.partialorder %v3468, 8.507059e+37
    %v3470 = vand.u32 %v3458, 2147483648
    %v3471 = vor.u32 1.1754944e-38, %v3470
    %v3472 = vsel %vm3469, %v3471, %v3467
    %v3473 = vmul.f32 1.0, %v3472
    %v3474 = vxor.u32 %v3452, 2147483648
    %v3475 = vmul.f32 %v3474, 1.442695
    %v3476 = vpow.pop %v3475
    %v3477 = vadd.f32 %v3476, 1.0
    %v3478 = vrcp.pop %v3477
    %v3479 = vmul.f32 %v3477, %v3478
    %v3480 = vsub.f32 1.0, %v3479
    %v3481 = vmul.f32 %v3478, %v3480
    %v3482 = vadd.f32 %v3478, %v3481
    %vm3483 = vweird.f32 %v3477
    %vm3484 = vweird.f32 %v3478
    %vm3485 = vmor %vm3483, %vm3484
    %v3486 = vsel %vm3485, %v3478, %v3482
    %v3487 = vand.u32 2147483647, %v3477
    %vm3488 = vcmp.eq.f32.partialorder %v3487, 8.507059e+37
    %v3489 = vand.u32 %v3477, 2147483648
    %v3490 = vor.u32 1.1754944e-38, %v3489
    %v3491 = vsel %vm3488, %v3490, %v3486
    %v3492 = vmul.f32 1.0, %v3491
    %v3493 = vtanh.pop %v3453
    %v3494 = vxor.u32 %v3454, 2147483648
    %v3495 = vmul.f32 %v3494, 1.442695
    %v3496 = vpow.pop %v3495
    %v3497 = vadd.f32 %v3496, 1.0
    %v3498 = vrcp.pop %v3497
    %v3499 = vmul.f32 %v3497, %v3498
    %v3500 = vsub.f32 1.0, %v3499
    %v3501 = vmul.f32 %v3498, %v3500
    %v3502 = vadd.f32 %v3498, %v3501
    %vm3503 = vweird.f32 %v3497
    %vm3504 = vweird.f32 %v3498
    %vm3505 = vmor %vm3503, %vm3504
    %v3506 = vsel %vm3505, %v3498, %v3502
    %v3507 = vand.u32 2147483647, %v3497
    %vm3508 = vcmp.eq.f32.partialorder %v3507, 8.507059e+37
    %v3509 = vand.u32 %v3497, 2147483648
    %v3510 = vor.u32 1.1754944e-38, %v3509
    %v3511 = vsel %vm3508, %v3510, %v3506
    %v3512 = vmul.f32 1.0, %v3511
    %v3513 = vmul.f32 %v3492, %v3348
    %v3514 = vmul.f32 %v3473, %v3493
    %v3515 = vadd.f32 %v3513, %v3514
    %3516 = vmatpush.msra.mxu0 %v633
    %3517 = vmatpush.msra.mxu0 %v632
    %3518 = vmatpush.msra.mxu0 %v631
    %3519 = vmatpush.msra.mxu0 %v630
    %3520 = vmatpush.msra.mxu0 %v629
    %3521 = vmatpush.msra.mxu0 %v628
    %3522 = vmatpush.msra.mxu0 %v627
    %3523 = vmatpush.msra.mxu0 %v626
    %3524 = vmatpush.msra.mxu0 %v625
    %3525 = vmatpush.msra.mxu0 %v624
    %3526 = vmatpush.msra.mxu0 %v623
    %3527 = vmatpush.msra.mxu0 %v622
    %3528 = vmatpush.msra.mxu0 %v621
    %3529 = vmatpush.msra.mxu0 %v620
    %3530 = vmatpush.msra.mxu0 %v619
    %3531 = vmatpush.msra.mxu0 %v618
    %3532 = vmatmul.f32.gmra.mxu0 %v3515
    %v3533 = vpop.f32.mrf.mxu0
    %v3534 = vadd.f32 0.0, %v3533
    %3535 = vdwg.mxu0
    %v3536 = vtanh.pop %v3534
    %v3537 = vmul.f32 %v3512, %v3536
    %3538 = vst [vmem:[#allocation13] sm:$0xff] %v3537
    // Predicated region
    $region54: #{tpu_custom_call.1} parent=1 // pred_check
      _
    $region55: #{tpu_custom_call.1} parent=1 // pred_check_branch
      %3540 = sbr.rel (0) target = $region57
    $region56: #{tpu_custom_call.1} parent=1 // pred_region
      %3542 = vsyncadd [#allocation6], 0
      %s3544 = sshll.u32 [#allocation13], 4
      %s3545 = int_to_ptr.vmem [resolvable:$true] %s3544
      %s3546 = sshll.u32 %s8, 4
      %s3547 = int_to_ptr.hbm [resolvable:$true] %s3546
      %3549 = dma.vmem_to_hbm [thread:$0]  %s3545, 128, %s3547, [#allocation6]
    $region57: #{tpu_custom_call.1} parent=1 // pred_fallthru
      _
    // Predicated region
    $region58: #{tpu_custom_call.1} parent=1 // pred_check
      _
    $region59: #{tpu_custom_call.1} parent=1 // pred_check_branch
      %3551 = sbr.rel (0) target = $region61
    $region60: #{tpu_custom_call.1} parent=1 // pred_region
      %3553 = dma.done [#allocation6], 128
    $region61: #{tpu_custom_call.1} parent=1 // pred_fallthru
      _
    %3554 = vsyncpa [#allocation5], 1
    %3555 = vsyncpa [#allocation8], 1
    %3556 = vsyncpa [#allocation11], 1
    %3557 = vsyncpa [#allocation6], 1

</llo_original>
